<compile_context>
chip_gen: v7x
topology: tpu7x:2x2x1
jax: 0.10.0
libtpu: 0.0.40
codegen_flags: <defaults>
</compile_context>

<pallas_src>
import jax
import jax.numpy as jnp
from jax.experimental import pallas as pl
from jax.experimental.pallas import tpu as pltpu

NUM_ENC_LAYERS = 14            # 1 input layer + 13 hidden layers, each + ReLU
LANE = 128                     # TPU lane width (last-dim padding target)
COMPUTE_DTYPE = jnp.bfloat16   # MXU operand dtype (accumulate in f32)


def _round_up(n, m):
    return ((n + m - 1) // m) * m


def _pad_to(a, shape):
    pads = [(0, t - s) for s, t in zip(a.shape, shape)]
    return jnp.pad(a, pads)


# --------------------------------------------------------------------------
# Kernel
# --------------------------------------------------------------------------
def make_dqn_kernel(n_hidden, n_streams, sub_rows):
    """Build the fused MLP kernel for a (n_streams * sub_rows)-row batch tile."""

    def kernel(x_ref, w0_ref, b0_ref, wh_ref, bh_ref, wo_ref, bo_ref, out_ref):
        # ---- first encoder layer: Linear(input -> hidden) + ReLU ----
        w0 = w0_ref[...]
        b0 = b0_ref[...]
        hs = []
        for s in range(n_streams):
            xs = x_ref[s * sub_rows:(s + 1) * sub_rows, :]
            z = jnp.dot(xs, w0, preferred_element_type=jnp.float32)
            hs.append(jnp.maximum(z + b0, 0.0).astype(COMPUTE_DTYPE))

        # ---- 13 hidden layers: Linear(hidden -> hidden) + ReLU (unrolled) ----
        # The two streams are independent, so the scheduler can overlap stream
        # B's MXU push with stream A's VPU epilogue between layers.
        for i in range(n_hidden):
            w = wh_ref[i]
            b = bh_ref[i]
            zs = [jnp.dot(h, w, preferred_element_type=jnp.float32) for h in hs]
            hs = [jnp.maximum(z + b, 0.0).astype(COMPUTE_DTYPE) for z in zs]

        # ---- output head: Linear(hidden -> out_dim), no activation ----
        wo = wo_ref[...]
        bo = bo_ref[...]
        for s in range(n_streams):
            q = jnp.dot(hs[s], wo, preferred_element_type=jnp.float32) + bo
            out_ref[s * sub_rows:(s + 1) * sub_rows, :] = q.astype(out_ref.dtype)

    return kernel


# --------------------------------------------------------------------------
# One-time parameter preparation (hoisted out of the per-call forward path)
# --------------------------------------------------------------------------
def prepare_params(params):
    """Pad all weights/biases to lane-dense shapes and cast weights to bf16.

    Call once; reuse the result for every forward call."""
    w0, b0, wh, bh, wo, bo = params
    input_dim, hidden_dim = w0.shape
    out_dim = wo.shape[1]
    n_hidden = wh.shape[0]

    in_p = _round_up(input_dim, LANE)
    h_p = _round_up(hidden_dim, LANE)
    out_p = _round_up(out_dim, LANE)

    arrays = (
        _pad_to(w0, (in_p, h_p)).astype(COMPUTE_DTYPE),
        _pad_to(b0, (1, h_p)).astype(jnp.float32),
        _pad_to(wh, (n_hidden, h_p, h_p)).astype(COMPUTE_DTYPE),
        _pad_to(bh, (n_hidden, 1, h_p)).astype(jnp.float32),
        _pad_to(wo, (h_p, out_p)).astype(COMPUTE_DTYPE),
        _pad_to(bo, (1, out_p)).astype(jnp.float32),
    )
    dims = dict(input_dim=input_dim, hidden_dim=hidden_dim, out_dim=out_dim,
                n_hidden=n_hidden, in_p=in_p, h_p=h_p, out_p=out_p)
    return arrays, dims


# --------------------------------------------------------------------------
# Forward
# --------------------------------------------------------------------------
def dqn_forward(x, prepared):
    """x: [B, input_dim] float32 -> Q_values: [B, out_dim] float32."""
    arrays, dims = prepared
    w0p, b0p, whp, bhp, wop, bop = arrays
    B, input_dim = x.shape
    assert input_dim == dims["input_dim"]
    in_p, h_p, out_p = dims["in_p"], dims["h_p"], dims["out_p"]
    n_hidden = dims["n_hidden"]
    out_dim = dims["out_dim"]

    # Batch tiling: small B -> one tile rounded to 16 rows (bf16 packing);
    # large B -> 128..512-row tiles with >=2 grid steps (v7x 2-TC sharding).
    if B <= 128:
        tb = _round_up(max(B, 16), 16)
    else:
        tb = min(512, _round_up(_round_up(B, 128) // 2, 128))
    b_pad = _round_up(B, tb)
    n_streams = 2 if tb >= 256 else 1
    sub_rows = tb // n_streams

    # Only x is padded/cast per call.
    xp = _pad_to(x, (b_pad, in_p)).astype(COMPUTE_DTYPE)

    # Scoped-VMEM budget (weights counted double-buffered as a worst case in
    # case the Buffered(1) hint is unavailable), capped at v7x's 64 MiB/TC.
    weight_bytes = 2 * 2 * (in_p * h_p + n_hidden * h_p * h_p + h_p * out_p)
    bias_bytes = 2 * 4 * ((n_hidden + 1) * h_p + out_p)
    io_bytes = 2 * (tb * in_p * 2 + tb * out_p * 4)
    act_bytes = 6 * tb * h_p * 4
    vmem_limit = int(min(max(weight_bytes + bias_bytes + io_bytes + act_bytes
                             + (4 << 20), 16 << 20), 64 << 20))
    # TODO(synk): if the full wh stack cannot fit the v7x 64 MiB/TC budget
    # (very large hidden_dim), stream weights per layer over an inner
    # 'arbitrary' grid axis instead of keeping them fully VMEM-resident.

    kernel = make_dqn_kernel(n_hidden, n_streams, sub_rows)

    def build_call(single_buffer_weights):
        def w_spec(shape, idx):
            # Weights/biases are grid-invariant -> single buffer is enough.
            if single_buffer_weights:
                return pl.BlockSpec(shape, idx, pipeline_mode=pl.Buffered(1))
            return pl.BlockSpec(shape, idx)

        return pl.pallas_call(
            kernel,
            out_shape=jax.ShapeDtypeStruct((b_pad, out_p), jnp.float32),
            grid=(b_pad // tb,),
            in_specs=[
                pl.BlockSpec((tb, in_p), lambda i: (i, 0)),            # x tile
                w_spec((in_p, h_p), lambda i: (0, 0)),                 # w0
                w_spec((1, h_p), lambda i: (0, 0)),                    # b0
                w_spec((n_hidden, h_p, h_p), lambda i: (0, 0, 0)),     # wh stack
                w_spec((n_hidden, 1, h_p), lambda i: (0, 0, 0)),       # bh stack
                w_spec((h_p, out_p), lambda i: (0, 0)),                # wo
                w_spec((1, out_p), lambda i: (0, 0)),                  # bo
            ],
            out_specs=pl.BlockSpec((tb, out_p), lambda i: (i, 0)),
            compiler_params=pltpu.CompilerParams(
                dimension_semantics=("parallel",),   # v7x: shard tiles on 2 TCs
                vmem_limit_bytes=vmem_limit),
        )

    args = (xp, w0p, b0p, whp, bhp, wop, bop)
    try:
        out_padded = build_call(True)(*args)
    except Exception:
        # Fallback for environments without BlockSpec.pipeline_mode support;
        # identical semantics, just default (double) buffering of weights.
        out_padded = build_call(False)(*args)

    return out_padded[:B, :out_dim]


# --------------------------------------------------------------------------
# Parameter init + reference
# --------------------------------------------------------------------------
def init_params(key, input_dim, hidden_dim, out_dim):
    """PyTorch-style (Kaiming-uniform-ish) init for all Linear layers.

    Weights are produced directly in [in, out] layout (transpose of nn.Linear)."""
    ks = jax.random.split(key, 2 * (NUM_ENC_LAYERS + 1))

    def linear(kw, kb, fan_in, fan_out):
        bound = 1.0 / jnp.sqrt(jnp.float32(fan_in))
        w = jax.random.uniform(kw, (fan_in, fan_out), jnp.float32, -bound, bound)
        b = jax.random.uniform(kb, (1, fan_out), jnp.float32, -bound, bound)
        return w, b

    w0, b0 = linear(ks[0], ks[1], input_dim, hidden_dim)

    whs, bhs = [], []
    for i in range(NUM_ENC_LAYERS - 1):
        w, b = linear(ks[2 + 2 * i], ks[3 + 2 * i], hidden_dim, hidden_dim)
        whs.append(w)
        bhs.append(b)
    wh = jnp.stack(whs, axis=0)                       # [13, hidden, hidden]
    bh = jnp.stack(bhs, axis=0)                       # [13, 1, hidden]

    wo, bo = linear(ks[-2], ks[-1], hidden_dim, out_dim)
    return w0, b0, wh, bh, wo, bo


def reference_forward(x, params):
    """Matches the kernel's numerics: bf16 dot operands, f32 accumulation/epilogue."""
    w0, b0, wh, bh, wo, bo = params

    def lin(h, w, b):
        return jnp.dot(h.astype(COMPUTE_DTYPE), w.astype(COMPUTE_DTYPE),
                       preferred_element_type=jnp.float32) + b

    h = jnp.maximum(lin(x, w0, b0), 0.0)
    for i in range(NUM_ENC_LAYERS - 1):
        h = jnp.maximum(lin(h, wh[i], bh[i]), 0.0)
    return lin(h, wo, bo)


if __name__ == "__main__":
    batch = 2
    input_dim = 16
    hidden_dim = 32
    out_dim = 4

    key = jax.random.PRNGKey(0)
    k_x, k_p = jax.random.split(key)
    x = jax.random.normal(k_x, (batch, input_dim), dtype=jnp.float32)
    params = init_params(k_p, input_dim, hidden_dim, out_dim)

    prepared = prepare_params(params)          # one-time weight pad + bf16 cast
    q = dqn_forward(x, prepared)
    q = jax.block_until_ready(q)

    q_ref = reference_forward(x, params)
    assert q.shape == (batch, out_dim)
    assert jnp.allclose(q, q_ref, atol=1e-3, rtol=1e-2), (
        f"max abs diff: {jnp.max(jnp.abs(q - q_ref))}")

    print("KERNEL_OK")
</pallas_src>

<mosaic_0001>
module attributes {stable_mosaic.version = 11 : i64} {
  func.func @kernel(%arg0: i32, %arg1: memref<16x128xbf16, #tpu.memory_space<vmem>>, %arg2: memref<128x128xbf16, #tpu.memory_space<vmem>>, %arg3: memref<1x128xf32, #tpu.memory_space<vmem>>, %arg4: memref<13x128x128xbf16, #tpu.memory_space<vmem>>, %arg5: memref<13x1x128xf32, #tpu.memory_space<vmem>>, %arg6: memref<128x128xbf16, #tpu.memory_space<vmem>>, %arg7: memref<1x128xf32, #tpu.memory_space<vmem>>, %arg8: memref<16x128xf32, #tpu.memory_space<vmem>>) attributes {dimension_semantics = [#tpu.dimension_semantics<parallel>], iteration_bounds = array<i64: 1>, scalar_prefetch = 0 : i64, scratch_operands = 0 : i64, tpu.core_type = #tpu.core_type<tc>, window_params = [{transform_indices = @transform_0, window_bounds = array<i64: 16, 128>}, {pipeline_mode = #tpu.pipeline_mode<synchronous>, transform_indices = @transform_1, window_bounds = array<i64: 128, 128>}, {pipeline_mode = #tpu.pipeline_mode<synchronous>, transform_indices = @transform_2, window_bounds = array<i64: 1, 128>}, {pipeline_mode = #tpu.pipeline_mode<synchronous>, transform_indices = @transform_3, window_bounds = array<i64: 13, 128, 128>}, {pipeline_mode = #tpu.pipeline_mode<synchronous>, transform_indices = @transform_4, window_bounds = array<i64: 13, 1, 128>}, {pipeline_mode = #tpu.pipeline_mode<synchronous>, transform_indices = @transform_5, window_bounds = array<i64: 128, 128>}, {pipeline_mode = #tpu.pipeline_mode<synchronous>, transform_indices = @transform_6, window_bounds = array<i64: 1, 128>}, {transform_indices = @transform_7, window_bounds = array<i64: 16, 128>}]} {
    %c0 = arith.constant 0 : index
    %c0_0 = arith.constant 0 : index
    %0 = vector.load %arg2[%c0, %c0_0] : memref<128x128xbf16, #tpu.memory_space<vmem>>, vector<128x128xbf16>
    %c0_1 = arith.constant 0 : index
    %c0_2 = arith.constant 0 : index
    %1 = vector.load %arg3[%c0_1, %c0_2] : memref<1x128xf32, #tpu.memory_space<vmem>>, vector<1x128xf32>
    %c0_3 = arith.constant 0 : index
    %c0_4 = arith.constant 0 : index
    %2 = vector.load %arg1[%c0_3, %c0_4] : memref<16x128xbf16, #tpu.memory_space<vmem>>, vector<16x128xbf16>
    %cst = arith.constant dense<0.000000e+00> : vector<16x128xf32>
    %3 = tpu.matmul %2, %0, %cst {dimension_numbers = #tpu.dot_dimension_numbers<[1], [0], [0], [1], [0, 0, 1, 1], [], []>} : vector<16x128xbf16>, vector<128x128xbf16>, vector<16x128xf32> -> vector<16x128xf32>
    %4 = vector.broadcast %1 : vector<1x128xf32> to vector<16x128xf32>
    %5 = arith.addf %3, %4 : vector<16x128xf32>
    %cst_5 = arith.constant 0.000000e+00 : f32
    %6 = vector.broadcast %cst_5 : f32 to vector<16x128xf32>
    %7 = arith.maximumf %5, %6 : vector<16x128xf32>
    %8 = arith.truncf %7 : vector<16x128xf32> to vector<16x128xbf16>
    %c0_6 = arith.constant 0 : index
    %c0_7 = arith.constant 0 : index
    %c0_8 = arith.constant 0 : index
    %9 = vector.load %arg4[%c0_6, %c0_7, %c0_8] : memref<13x128x128xbf16, #tpu.memory_space<vmem>>, vector<1x128x128xbf16>
    %10 = vector.shape_cast %9 : vector<1x128x128xbf16> to vector<128x128xbf16>
    %c0_9 = arith.constant 0 : index
    %c0_10 = arith.constant 0 : index
    %c0_11 = arith.constant 0 : index
    %11 = vector.load %arg5[%c0_9, %c0_10, %c0_11] : memref<13x1x128xf32, #tpu.memory_space<vmem>>, vector<1x1x128xf32>
    %12 = vector.shape_cast %11 : vector<1x1x128xf32> to vector<1x128xf32>
    %cst_12 = arith.constant dense<0.000000e+00> : vector<16x128xf32>
    %13 = tpu.matmul %8, %10, %cst_12 {dimension_numbers = #tpu.dot_dimension_numbers<[1], [0], [0], [1], [0, 0, 1, 1], [], []>} : vector<16x128xbf16>, vector<128x128xbf16>, vector<16x128xf32> -> vector<16x128xf32>
    %14 = vector.broadcast %12 : vector<1x128xf32> to vector<16x128xf32>
    %15 = arith.addf %13, %14 : vector<16x128xf32>
    %cst_13 = arith.constant 0.000000e+00 : f32
    %16 = vector.broadcast %cst_13 : f32 to vector<16x128xf32>
    %17 = arith.maximumf %15, %16 : vector<16x128xf32>
    %18 = arith.truncf %17 : vector<16x128xf32> to vector<16x128xbf16>
    %c1 = arith.constant 1 : index
    %c0_14 = arith.constant 0 : index
    %c0_15 = arith.constant 0 : index
    %19 = vector.load %arg4[%c1, %c0_14, %c0_15] : memref<13x128x128xbf16, #tpu.memory_space<vmem>>, vector<1x128x128xbf16>
    %20 = vector.shape_cast %19 : vector<1x128x128xbf16> to vector<128x128xbf16>
    %c1_16 = arith.constant 1 : index
    %c0_17 = arith.constant 0 : index
    %c0_18 = arith.constant 0 : index
    %21 = vector.load %arg5[%c1_16, %c0_17, %c0_18] : memref<13x1x128xf32, #tpu.memory_space<vmem>>, vector<1x1x128xf32>
    %22 = vector.shape_cast %21 : vector<1x1x128xf32> to vector<1x128xf32>
    %cst_19 = arith.constant dense<0.000000e+00> : vector<16x128xf32>
    %23 = tpu.matmul %18, %20, %cst_19 {dimension_numbers = #tpu.dot_dimension_numbers<[1], [0], [0], [1], [0, 0, 1, 1], [], []>} : vector<16x128xbf16>, vector<128x128xbf16>, vector<16x128xf32> -> vector<16x128xf32>
    %24 = vector.broadcast %22 : vector<1x128xf32> to vector<16x128xf32>
    %25 = arith.addf %23, %24 : vector<16x128xf32>
    %cst_20 = arith.constant 0.000000e+00 : f32
    %26 = vector.broadcast %cst_20 : f32 to vector<16x128xf32>
    %27 = arith.maximumf %25, %26 : vector<16x128xf32>
    %28 = arith.truncf %27 : vector<16x128xf32> to vector<16x128xbf16>
    %c2 = arith.constant 2 : index
    %c0_21 = arith.constant 0 : index
    %c0_22 = arith.constant 0 : index
    %29 = vector.load %arg4[%c2, %c0_21, %c0_22] : memref<13x128x128xbf16, #tpu.memory_space<vmem>>, vector<1x128x128xbf16>
    %30 = vector.shape_cast %29 : vector<1x128x128xbf16> to vector<128x128xbf16>
    %c2_23 = arith.constant 2 : index
    %c0_24 = arith.constant 0 : index
    %c0_25 = arith.constant 0 : index
    %31 = vector.load %arg5[%c2_23, %c0_24, %c0_25] : memref<13x1x128xf32, #tpu.memory_space<vmem>>, vector<1x1x128xf32>
    %32 = vector.shape_cast %31 : vector<1x1x128xf32> to vector<1x128xf32>
    %cst_26 = arith.constant dense<0.000000e+00> : vector<16x128xf32>
    %33 = tpu.matmul %28, %30, %cst_26 {dimension_numbers = #tpu.dot_dimension_numbers<[1], [0], [0], [1], [0, 0, 1, 1], [], []>} : vector<16x128xbf16>, vector<128x128xbf16>, vector<16x128xf32> -> vector<16x128xf32>
    %34 = vector.broadcast %32 : vector<1x128xf32> to vector<16x128xf32>
    %35 = arith.addf %33, %34 : vector<16x128xf32>
    %cst_27 = arith.constant 0.000000e+00 : f32
    %36 = vector.broadcast %cst_27 : f32 to vector<16x128xf32>
    %37 = arith.maximumf %35, %36 : vector<16x128xf32>
    %38 = arith.truncf %37 : vector<16x128xf32> to vector<16x128xbf16>
    %c3 = arith.constant 3 : index
    %c0_28 = arith.constant 0 : index
    %c0_29 = arith.constant 0 : index
    %39 = vector.load %arg4[%c3, %c0_28, %c0_29] : memref<13x128x128xbf16, #tpu.memory_space<vmem>>, vector<1x128x128xbf16>
    %40 = vector.shape_cast %39 : vector<1x128x128xbf16> to vector<128x128xbf16>
    %c3_30 = arith.constant 3 : index
    %c0_31 = arith.constant 0 : index
    %c0_32 = arith.constant 0 : index
    %41 = vector.load %arg5[%c3_30, %c0_31, %c0_32] : memref<13x1x128xf32, #tpu.memory_space<vmem>>, vector<1x1x128xf32>
    %42 = vector.shape_cast %41 : vector<1x1x128xf32> to vector<1x128xf32>
    %cst_33 = arith.constant dense<0.000000e+00> : vector<16x128xf32>
    %43 = tpu.matmul %38, %40, %cst_33 {dimension_numbers = #tpu.dot_dimension_numbers<[1], [0], [0], [1], [0, 0, 1, 1], [], []>} : vector<16x128xbf16>, vector<128x128xbf16>, vector<16x128xf32> -> vector<16x128xf32>
    %44 = vector.broadcast %42 : vector<1x128xf32> to vector<16x128xf32>
    %45 = arith.addf %43, %44 : vector<16x128xf32>
    %cst_34 = arith.constant 0.000000e+00 : f32
    %46 = vector.broadcast %cst_34 : f32 to vector<16x128xf32>
    %47 = arith.maximumf %45, %46 : vector<16x128xf32>
    %48 = arith.truncf %47 : vector<16x128xf32> to vector<16x128xbf16>
    %c4 = arith.constant 4 : index
    %c0_35 = arith.constant 0 : index
    %c0_36 = arith.constant 0 : index
    %49 = vector.load %arg4[%c4, %c0_35, %c0_36] : memref<13x128x128xbf16, #tpu.memory_space<vmem>>, vector<1x128x128xbf16>
    %50 = vector.shape_cast %49 : vector<1x128x128xbf16> to vector<128x128xbf16>
    %c4_37 = arith.constant 4 : index
    %c0_38 = arith.constant 0 : index
    %c0_39 = arith.constant 0 : index
    %51 = vector.load %arg5[%c4_37, %c0_38, %c0_39] : memref<13x1x128xf32, #tpu.memory_space<vmem>>, vector<1x1x128xf32>
    %52 = vector.shape_cast %51 : vector<1x1x128xf32> to vector<1x128xf32>
    %cst_40 = arith.constant dense<0.000000e+00> : vector<16x128xf32>
    %53 = tpu.matmul %48, %50, %cst_40 {dimension_numbers = #tpu.dot_dimension_numbers<[1], [0], [0], [1], [0, 0, 1, 1], [], []>} : vector<16x128xbf16>, vector<128x128xbf16>, vector<16x128xf32> -> vector<16x128xf32>
    %54 = vector.broadcast %52 : vector<1x128xf32> to vector<16x128xf32>
    %55 = arith.addf %53, %54 : vector<16x128xf32>
    %cst_41 = arith.constant 0.000000e+00 : f32
    %56 = vector.broadcast %cst_41 : f32 to vector<16x128xf32>
    %57 = arith.maximumf %55, %56 : vector<16x128xf32>
    %58 = arith.truncf %57 : vector<16x128xf32> to vector<16x128xbf16>
    %c5 = arith.constant 5 : index
    %c0_42 = arith.constant 0 : index
    %c0_43 = arith.constant 0 : index
    %59 = vector.load %arg4[%c5, %c0_42, %c0_43] : memref<13x128x128xbf16, #tpu.memory_space<vmem>>, vector<1x128x128xbf16>
    %60 = vector.shape_cast %59 : vector<1x128x128xbf16> to vector<128x128xbf16>
    %c5_44 = arith.constant 5 : index
    %c0_45 = arith.constant 0 : index
    %c0_46 = arith.constant 0 : index
    %61 = vector.load %arg5[%c5_44, %c0_45, %c0_46] : memref<13x1x128xf32, #tpu.memory_space<vmem>>, vector<1x1x128xf32>
    %62 = vector.shape_cast %61 : vector<1x1x128xf32> to vector<1x128xf32>
    %cst_47 = arith.constant dense<0.000000e+00> : vector<16x128xf32>
    %63 = tpu.matmul %58, %60, %cst_47 {dimension_numbers = #tpu.dot_dimension_numbers<[1], [0], [0], [1], [0, 0, 1, 1], [], []>} : vector<16x128xbf16>, vector<128x128xbf16>, vector<16x128xf32> -> vector<16x128xf32>
    %64 = vector.broadcast %62 : vector<1x128xf32> to vector<16x128xf32>
    %65 = arith.addf %63, %64 : vector<16x128xf32>
    %cst_48 = arith.constant 0.000000e+00 : f32
    %66 = vector.broadcast %cst_48 : f32 to vector<16x128xf32>
    %67 = arith.maximumf %65, %66 : vector<16x128xf32>
    %68 = arith.truncf %67 : vector<16x128xf32> to vector<16x128xbf16>
    %c6 = arith.constant 6 : index
    %c0_49 = arith.constant 0 : index
    %c0_50 = arith.constant 0 : index
    %69 = vector.load %arg4[%c6, %c0_49, %c0_50] : memref<13x128x128xbf16, #tpu.memory_space<vmem>>, vector<1x128x128xbf16>
    %70 = vector.shape_cast %69 : vector<1x128x128xbf16> to vector<128x128xbf16>
    %c6_51 = arith.constant 6 : index
    %c0_52 = arith.constant 0 : index
    %c0_53 = arith.constant 0 : index
    %71 = vector.load %arg5[%c6_51, %c0_52, %c0_53] : memref<13x1x128xf32, #tpu.memory_space<vmem>>, vector<1x1x128xf32>
    %72 = vector.shape_cast %71 : vector<1x1x128xf32> to vector<1x128xf32>
    %cst_54 = arith.constant dense<0.000000e+00> : vector<16x128xf32>
    %73 = tpu.matmul %68, %70, %cst_54 {dimension_numbers = #tpu.dot_dimension_numbers<[1], [0], [0], [1], [0, 0, 1, 1], [], []>} : vector<16x128xbf16>, vector<128x128xbf16>, vector<16x128xf32> -> vector<16x128xf32>
    %74 = vector.broadcast %72 : vector<1x128xf32> to vector<16x128xf32>
    %75 = arith.addf %73, %74 : vector<16x128xf32>
    %cst_55 = arith.constant 0.000000e+00 : f32
    %76 = vector.broadcast %cst_55 : f32 to vector<16x128xf32>
    %77 = arith.maximumf %75, %76 : vector<16x128xf32>
    %78 = arith.truncf %77 : vector<16x128xf32> to vector<16x128xbf16>
    %c7 = arith.constant 7 : index
    %c0_56 = arith.constant 0 : index
    %c0_57 = arith.constant 0 : index
    %79 = vector.load %arg4[%c7, %c0_56, %c0_57] : memref<13x128x128xbf16, #tpu.memory_space<vmem>>, vector<1x128x128xbf16>
    %80 = vector.shape_cast %79 : vector<1x128x128xbf16> to vector<128x128xbf16>
    %c7_58 = arith.constant 7 : index
    %c0_59 = arith.constant 0 : index
    %c0_60 = arith.constant 0 : index
    %81 = vector.load %arg5[%c7_58, %c0_59, %c0_60] : memref<13x1x128xf32, #tpu.memory_space<vmem>>, vector<1x1x128xf32>
    %82 = vector.shape_cast %81 : vector<1x1x128xf32> to vector<1x128xf32>
    %cst_61 = arith.constant dense<0.000000e+00> : vector<16x128xf32>
    %83 = tpu.matmul %78, %80, %cst_61 {dimension_numbers = #tpu.dot_dimension_numbers<[1], [0], [0], [1], [0, 0, 1, 1], [], []>} : vector<16x128xbf16>, vector<128x128xbf16>, vector<16x128xf32> -> vector<16x128xf32>
    %84 = vector.broadcast %82 : vector<1x128xf32> to vector<16x128xf32>
    %85 = arith.addf %83, %84 : vector<16x128xf32>
    %cst_62 = arith.constant 0.000000e+00 : f32
    %86 = vector.broadcast %cst_62 : f32 to vector<16x128xf32>
    %87 = arith.maximumf %85, %86 : vector<16x128xf32>
    %88 = arith.truncf %87 : vector<16x128xf32> to vector<16x128xbf16>
    %c8 = arith.constant 8 : index
    %c0_63 = arith.constant 0 : index
    %c0_64 = arith.constant 0 : index
    %89 = vector.load %arg4[%c8, %c0_63, %c0_64] : memref<13x128x128xbf16, #tpu.memory_space<vmem>>, vector<1x128x128xbf16>
    %90 = vector.shape_cast %89 : vector<1x128x128xbf16> to vector<128x128xbf16>
    %c8_65 = arith.constant 8 : index
    %c0_66 = arith.constant 0 : index
    %c0_67 = arith.constant 0 : index
    %91 = vector.load %arg5[%c8_65, %c0_66, %c0_67] : memref<13x1x128xf32, #tpu.memory_space<vmem>>, vector<1x1x128xf32>
    %92 = vector.shape_cast %91 : vector<1x1x128xf32> to vector<1x128xf32>
    %cst_68 = arith.constant dense<0.000000e+00> : vector<16x128xf32>
    %93 = tpu.matmul %88, %90, %cst_68 {dimension_numbers = #tpu.dot_dimension_numbers<[1], [0], [0], [1], [0, 0, 1, 1], [], []>} : vector<16x128xbf16>, vector<128x128xbf16>, vector<16x128xf32> -> vector<16x128xf32>
    %94 = vector.broadcast %92 : vector<1x128xf32> to vector<16x128xf32>
    %95 = arith.addf %93, %94 : vector<16x128xf32>
    %cst_69 = arith.constant 0.000000e+00 : f32
    %96 = vector.broadcast %cst_69 : f32 to vector<16x128xf32>
    %97 = arith.maximumf %95, %96 : vector<16x128xf32>
    %98 = arith.truncf %97 : vector<16x128xf32> to vector<16x128xbf16>
    %c9 = arith.constant 9 : index
    %c0_70 = arith.constant 0 : index
    %c0_71 = arith.constant 0 : index
    %99 = vector.load %arg4[%c9, %c0_70, %c0_71] : memref<13x128x128xbf16, #tpu.memory_space<vmem>>, vector<1x128x128xbf16>
    %100 = vector.shape_cast %99 : vector<1x128x128xbf16> to vector<128x128xbf16>
    %c9_72 = arith.constant 9 : index
    %c0_73 = arith.constant 0 : index
    %c0_74 = arith.constant 0 : index
    %101 = vector.load %arg5[%c9_72, %c0_73, %c0_74] : memref<13x1x128xf32, #tpu.memory_space<vmem>>, vector<1x1x128xf32>
    %102 = vector.shape_cast %101 : vector<1x1x128xf32> to vector<1x128xf32>
    %cst_75 = arith.constant dense<0.000000e+00> : vector<16x128xf32>
    %103 = tpu.matmul %98, %100, %cst_75 {dimension_numbers = #tpu.dot_dimension_numbers<[1], [0], [0], [1], [0, 0, 1, 1], [], []>} : vector<16x128xbf16>, vector<128x128xbf16>, vector<16x128xf32> -> vector<16x128xf32>
    %104 = vector.broadcast %102 : vector<1x128xf32> to vector<16x128xf32>
    %105 = arith.addf %103, %104 : vector<16x128xf32>
    %cst_76 = arith.constant 0.000000e+00 : f32
    %106 = vector.broadcast %cst_76 : f32 to vector<16x128xf32>
    %107 = arith.maximumf %105, %106 : vector<16x128xf32>
    %108 = arith.truncf %107 : vector<16x128xf32> to vector<16x128xbf16>
    %c10 = arith.constant 10 : index
    %c0_77 = arith.constant 0 : index
    %c0_78 = arith.constant 0 : index
    %109 = vector.load %arg4[%c10, %c0_77, %c0_78] : memref<13x128x128xbf16, #tpu.memory_space<vmem>>, vector<1x128x128xbf16>
    %110 = vector.shape_cast %109 : vector<1x128x128xbf16> to vector<128x128xbf16>
    %c10_79 = arith.constant 10 : index
    %c0_80 = arith.constant 0 : index
    %c0_81 = arith.constant 0 : index
    %111 = vector.load %arg5[%c10_79, %c0_80, %c0_81] : memref<13x1x128xf32, #tpu.memory_space<vmem>>, vector<1x1x128xf32>
    %112 = vector.shape_cast %111 : vector<1x1x128xf32> to vector<1x128xf32>
    %cst_82 = arith.constant dense<0.000000e+00> : vector<16x128xf32>
    %113 = tpu.matmul %108, %110, %cst_82 {dimension_numbers = #tpu.dot_dimension_numbers<[1], [0], [0], [1], [0, 0, 1, 1], [], []>} : vector<16x128xbf16>, vector<128x128xbf16>, vector<16x128xf32> -> vector<16x128xf32>
    %114 = vector.broadcast %112 : vector<1x128xf32> to vector<16x128xf32>
    %115 = arith.addf %113, %114 : vector<16x128xf32>
    %cst_83 = arith.constant 0.000000e+00 : f32
    %116 = vector.broadcast %cst_83 : f32 to vector<16x128xf32>
    %117 = arith.maximumf %115, %116 : vector<16x128xf32>
    %118 = arith.truncf %117 : vector<16x128xf32> to vector<16x128xbf16>
    %c11 = arith.constant 11 : index
    %c0_84 = arith.constant 0 : index
    %c0_85 = arith.constant 0 : index
    %119 = vector.load %arg4[%c11, %c0_84, %c0_85] : memref<13x128x128xbf16, #tpu.memory_space<vmem>>, vector<1x128x128xbf16>
    %120 = vector.shape_cast %119 : vector<1x128x128xbf16> to vector<128x128xbf16>
    %c11_86 = arith.constant 11 : index
    %c0_87 = arith.constant 0 : index
    %c0_88 = arith.constant 0 : index
    %121 = vector.load %arg5[%c11_86, %c0_87, %c0_88] : memref<13x1x128xf32, #tpu.memory_space<vmem>>, vector<1x1x128xf32>
    %122 = vector.shape_cast %121 : vector<1x1x128xf32> to vector<1x128xf32>
    %cst_89 = arith.constant dense<0.000000e+00> : vector<16x128xf32>
    %123 = tpu.matmul %118, %120, %cst_89 {dimension_numbers = #tpu.dot_dimension_numbers<[1], [0], [0], [1], [0, 0, 1, 1], [], []>} : vector<16x128xbf16>, vector<128x128xbf16>, vector<16x128xf32> -> vector<16x128xf32>
    %124 = vector.broadcast %122 : vector<1x128xf32> to vector<16x128xf32>
    %125 = arith.addf %123, %124 : vector<16x128xf32>
    %cst_90 = arith.constant 0.000000e+00 : f32
    %126 = vector.broadcast %cst_90 : f32 to vector<16x128xf32>
    %127 = arith.maximumf %125, %126 : vector<16x128xf32>
    %128 = arith.truncf %127 : vector<16x128xf32> to vector<16x128xbf16>
    %c12 = arith.constant 12 : index
    %c0_91 = arith.constant 0 : index
    %c0_92 = arith.constant 0 : index
    %129 = vector.load %arg4[%c12, %c0_91, %c0_92] : memref<13x128x128xbf16, #tpu.memory_space<vmem>>, vector<1x128x128xbf16>
    %130 = vector.shape_cast %129 : vector<1x128x128xbf16> to vector<128x128xbf16>
    %c12_93 = arith.constant 12 : index
    %c0_94 = arith.constant 0 : index
    %c0_95 = arith.constant 0 : index
    %131 = vector.load %arg5[%c12_93, %c0_94, %c0_95] : memref<13x1x128xf32, #tpu.memory_space<vmem>>, vector<1x1x128xf32>
    %132 = vector.shape_cast %131 : vector<1x1x128xf32> to vector<1x128xf32>
    %cst_96 = arith.constant dense<0.000000e+00> : vector<16x128xf32>
    %133 = tpu.matmul %128, %130, %cst_96 {dimension_numbers = #tpu.dot_dimension_numbers<[1], [0], [0], [1], [0, 0, 1, 1], [], []>} : vector<16x128xbf16>, vector<128x128xbf16>, vector<16x128xf32> -> vector<16x128xf32>
    %134 = vector.broadcast %132 : vector<1x128xf32> to vector<16x128xf32>
    %135 = arith.addf %133, %134 : vector<16x128xf32>
    %cst_97 = arith.constant 0.000000e+00 : f32
    %136 = vector.broadcast %cst_97 : f32 to vector<16x128xf32>
    %137 = arith.maximumf %135, %136 : vector<16x128xf32>
    %138 = arith.truncf %137 : vector<16x128xf32> to vector<16x128xbf16>
    %c0_98 = arith.constant 0 : index
    %c0_99 = arith.constant 0 : index
    %139 = vector.load %arg6[%c0_98, %c0_99] : memref<128x128xbf16, #tpu.memory_space<vmem>>, vector<128x128xbf16>
    %c0_100 = arith.constant 0 : index
    %c0_101 = arith.constant 0 : index
    %140 = vector.load %arg7[%c0_100, %c0_101] : memref<1x128xf32, #tpu.memory_space<vmem>>, vector<1x128xf32>
    %cst_102 = arith.constant dense<0.000000e+00> : vector<16x128xf32>
    %141 = tpu.matmul %138, %139, %cst_102 {dimension_numbers = #tpu.dot_dimension_numbers<[1], [0], [0], [1], [0, 0, 1, 1], [], []>} : vector<16x128xbf16>, vector<128x128xbf16>, vector<16x128xf32> -> vector<16x128xf32>
    %142 = vector.broadcast %140 : vector<1x128xf32> to vector<16x128xf32>
    %143 = arith.addf %141, %142 : vector<16x128xf32>
    %c0_103 = arith.constant 0 : index
    %c0_104 = arith.constant 0 : index
    %144 = vector.load %arg8[%c0_103, %c0_104] : memref<16x128xf32, #tpu.memory_space<vmem>>, vector<16x128xf32>
    tpu.vector_store %arg8[%c0_103, %c0_104], %143 {strides = array<i32>} : memref<16x128xf32, #tpu.memory_space<vmem>>, vector<16x128xf32>,
    return
  }
  func.func @transform_0(%arg0: i32) -> (i32, i32) {
    %c0_i32 = arith.constant 0 : i32
    %c0_i32_0 = arith.constant 0 : i32
    return %arg0, %c0_i32 : i32, i32
  }
  func.func @transform_1(%arg0: i32) -> (i32, i32) {
    %c0_i32 = arith.constant 0 : i32
    %c0_i32_0 = arith.constant 0 : i32
    %c0_i32_1 = arith.constant 0 : i32
    return %c0_i32, %c0_i32_0 : i32, i32
  }
  func.func @transform_2(%arg0: i32) -> (i32, i32) {
    %c0_i32 = arith.constant 0 : i32
    %c0_i32_0 = arith.constant 0 : i32
    %c0_i32_1 = arith.constant 0 : i32
    return %c0_i32, %c0_i32_0 : i32, i32
  }
  func.func @transform_3(%arg0: i32) -> (i32, i32, i32) {
    %c0_i32 = arith.constant 0 : i32
    %c0_i32_0 = arith.constant 0 : i32
    %c0_i32_1 = arith.constant 0 : i32
    %c0_i32_2 = arith.constant 0 : i32
    return %c0_i32, %c0_i32_0, %c0_i32_1 : i32, i32, i32
  }
  func.func @transform_4(%arg0: i32) -> (i32, i32, i32) {
    %c0_i32 = arith.constant 0 : i32
    %c0_i32_0 = arith.constant 0 : i32
    %c0_i32_1 = arith.constant 0 : i32
    %c0_i32_2 = arith.constant 0 : i32
    return %c0_i32, %c0_i32_0, %c0_i32_1 : i32, i32, i32
  }
  func.func @transform_5(%arg0: i32) -> (i32, i32) {
    %c0_i32 = arith.constant 0 : i32
    %c0_i32_0 = arith.constant 0 : i32
    %c0_i32_1 = arith.constant 0 : i32
    return %c0_i32, %c0_i32_0 : i32, i32
  }
  func.func @transform_6(%arg0: i32) -> (i32, i32) {
    %c0_i32 = arith.constant 0 : i32
    %c0_i32_0 = arith.constant 0 : i32
    %c0_i32_1 = arith.constant 0 : i32
    return %c0_i32, %c0_i32_0 : i32, i32
  }
  func.func @transform_7(%arg0: i32) -> (i32, i32) {
    %c0_i32 = arith.constant 0 : i32
    %c0_i32_0 = arith.constant 0 : i32
    return %arg0, %c0_i32 : i32, i32
  }
}

module attributes {stable_mosaic.version = 11 : i64} {
  func.func @kernel(%arg0: i32, %arg1: memref<16x128xbf16, #tpu.memory_space<vmem>>, %arg2: memref<128x128xbf16, #tpu.memory_space<vmem>>, %arg3: memref<1x128xf32, #tpu.memory_space<vmem>>, %arg4: memref<13x128x128xbf16, #tpu.memory_space<vmem>>, %arg5: memref<13x1x128xf32, #tpu.memory_space<vmem>>, %arg6: memref<128x128xbf16, #tpu.memory_space<vmem>>, %arg7: memref<1x128xf32, #tpu.memory_space<vmem>>, %arg8: memref<16x128xf32, #tpu.memory_space<vmem>>) attributes {dimension_semantics = [#tpu.dimension_semantics<parallel>], iteration_bounds = array<i64: 1>, scalar_prefetch = 0 : i64, scratch_operands = 0 : i64, tpu.core_type = #tpu.core_type<tc>, window_params = [{transform_indices = @transform_0, window_bounds = array<i64: 16, 128>}, {pipeline_mode = #tpu.pipeline_mode<synchronous>, transform_indices = @transform_1, window_bounds = array<i64: 128, 128>}, {pipeline_mode = #tpu.pipeline_mode<synchronous>, transform_indices = @transform_2, window_bounds = array<i64: 1, 128>}, {pipeline_mode = #tpu.pipeline_mode<synchronous>, transform_indices = @transform_3, window_bounds = array<i64: 13, 128, 128>}, {pipeline_mode = #tpu.pipeline_mode<synchronous>, transform_indices = @transform_4, window_bounds = array<i64: 13, 1, 128>}, {pipeline_mode = #tpu.pipeline_mode<synchronous>, transform_indices = @transform_5, window_bounds = array<i64: 128, 128>}, {pipeline_mode = #tpu.pipeline_mode<synchronous>, transform_indices = @transform_6, window_bounds = array<i64: 1, 128>}, {transform_indices = @transform_7, window_bounds = array<i64: 16, 128>}]} {
    %c0 = arith.constant 0 : index
    %c0_0 = arith.constant 0 : index
    %0 = vector.load %arg2[%c0, %c0_0] : memref<128x128xbf16, #tpu.memory_space<vmem>>, vector<128x128xbf16>
    %c0_1 = arith.constant 0 : index
    %c0_2 = arith.constant 0 : index
    %1 = vector.load %arg3[%c0_1, %c0_2] : memref<1x128xf32, #tpu.memory_space<vmem>>, vector<1x128xf32>
    %c0_3 = arith.constant 0 : index
    %c0_4 = arith.constant 0 : index
    %2 = vector.load %arg1[%c0_3, %c0_4] : memref<16x128xbf16, #tpu.memory_space<vmem>>, vector<16x128xbf16>
    %cst = arith.constant dense<0.000000e+00> : vector<16x128xf32>
    %3 = tpu.matmul %2, %0, %cst {dimension_numbers = #tpu.dot_dimension_numbers<[1], [0], [0], [1], [0, 0, 1, 1], [], []>} : vector<16x128xbf16>, vector<128x128xbf16>, vector<16x128xf32> -> vector<16x128xf32>
    %4 = vector.broadcast %1 : vector<1x128xf32> to vector<16x128xf32>
    %5 = arith.addf %3, %4 : vector<16x128xf32>
    %cst_5 = arith.constant 0.000000e+00 : f32
    %6 = vector.broadcast %cst_5 : f32 to vector<16x128xf32>
    %7 = arith.maximumf %5, %6 : vector<16x128xf32>
    %8 = arith.truncf %7 : vector<16x128xf32> to vector<16x128xbf16>
    %c0_6 = arith.constant 0 : index
    %c0_7 = arith.constant 0 : index
    %c0_8 = arith.constant 0 : index
    %9 = vector.load %arg4[%c0_6, %c0_7, %c0_8] : memref<13x128x128xbf16, #tpu.memory_space<vmem>>, vector<1x128x128xbf16>
    %10 = vector.shape_cast %9 : vector<1x128x128xbf16> to vector<128x128xbf16>
    %c0_9 = arith.constant 0 : index
    %c0_10 = arith.constant 0 : index
    %c0_11 = arith.constant 0 : index
    %11 = vector.load %arg5[%c0_9, %c0_10, %c0_11] : memref<13x1x128xf32, #tpu.memory_space<vmem>>, vector<1x1x128xf32>
    %12 = vector.shape_cast %11 : vector<1x1x128xf32> to vector<1x128xf32>
    %cst_12 = arith.constant dense<0.000000e+00> : vector<16x128xf32>
    %13 = tpu.matmul %8, %10, %cst_12 {dimension_numbers = #tpu.dot_dimension_numbers<[1], [0], [0], [1], [0, 0, 1, 1], [], []>} : vector<16x128xbf16>, vector<128x128xbf16>, vector<16x128xf32> -> vector<16x128xf32>
    %14 = vector.broadcast %12 : vector<1x128xf32> to vector<16x128xf32>
    %15 = arith.addf %13, %14 : vector<16x128xf32>
    %cst_13 = arith.constant 0.000000e+00 : f32
    %16 = vector.broadcast %cst_13 : f32 to vector<16x128xf32>
    %17 = arith.maximumf %15, %16 : vector<16x128xf32>
    %18 = arith.truncf %17 : vector<16x128xf32> to vector<16x128xbf16>
    %c1 = arith.constant 1 : index
    %c0_14 = arith.constant 0 : index
    %c0_15 = arith.constant 0 : index
    %19 = vector.load %arg4[%c1, %c0_14, %c0_15] : memref<13x128x128xbf16, #tpu.memory_space<vmem>>, vector<1x128x128xbf16>
    %20 = vector.shape_cast %19 : vector<1x128x128xbf16> to vector<128x128xbf16>
    %c1_16 = arith.constant 1 : index
    %c0_17 = arith.constant 0 : index
    %c0_18 = arith.constant 0 : index
    %21 = vector.load %arg5[%c1_16, %c0_17, %c0_18] : memref<13x1x128xf32, #tpu.memory_space<vmem>>, vector<1x1x128xf32>
    %22 = vector.shape_cast %21 : vector<1x1x128xf32> to vector<1x128xf32>
    %cst_19 = arith.constant dense<0.000000e+00> : vector<16x128xf32>
    %23 = tpu.matmul %18, %20, %cst_19 {dimension_numbers = #tpu.dot_dimension_numbers<[1], [0], [0], [1], [0, 0, 1, 1], [], []>} : vector<16x128xbf16>, vector<128x128xbf16>, vector<16x128xf32> -> vector<16x128xf32>
    %24 = vector.broadcast %22 : vector<1x128xf32> to vector<16x128xf32>
    %25 = arith.addf %23, %24 : vector<16x128xf32>
    %cst_20 = arith.constant 0.000000e+00 : f32
    %26 = vector.broadcast %cst_20 : f32 to vector<16x128xf32>
    %27 = arith.maximumf %25, %26 : vector<16x128xf32>
    %28 = arith.truncf %27 : vector<16x128xf32> to vector<16x128xbf16>
    %c2 = arith.constant 2 : index
    %c0_21 = arith.constant 0 : index
    %c0_22 = arith.constant 0 : index
    %29 = vector.load %arg4[%c2, %c0_21, %c0_22] : memref<13x128x128xbf16, #tpu.memory_space<vmem>>, vector<1x128x128xbf16>
    %30 = vector.shape_cast %29 : vector<1x128x128xbf16> to vector<128x128xbf16>
    %c2_23 = arith.constant 2 : index
    %c0_24 = arith.constant 0 : index
    %c0_25 = arith.constant 0 : index
    %31 = vector.load %arg5[%c2_23, %c0_24, %c0_25] : memref<13x1x128xf32, #tpu.memory_space<vmem>>, vector<1x1x128xf32>
    %32 = vector.shape_cast %31 : vector<1x1x128xf32> to vector<1x128xf32>
    %cst_26 = arith.constant dense<0.000000e+00> : vector<16x128xf32>
    %33 = tpu.matmul %28, %30, %cst_26 {dimension_numbers = #tpu.dot_dimension_numbers<[1], [0], [0], [1], [0, 0, 1, 1], [], []>} : vector<16x128xbf16>, vector<128x128xbf16>, vector<16x128xf32> -> vector<16x128xf32>
    %34 = vector.broadcast %32 : vector<1x128xf32> to vector<16x128xf32>
    %35 = arith.addf %33, %34 : vector<16x128xf32>
    %cst_27 = arith.constant 0.000000e+00 : f32
    %36 = vector.broadcast %cst_27 : f32 to vector<16x128xf32>
    %37 = arith.maximumf %35, %36 : vector<16x128xf32>
    %38 = arith.truncf %37 : vector<16x128xf32> to vector<16x128xbf16>
    %c3 = arith.constant 3 : index
    %c0_28 = arith.constant 0 : index
    %c0_29 = arith.constant 0 : index
    %39 = vector.load %arg4[%c3, %c0_28, %c0_29] : memref<13x128x128xbf16, #tpu.memory_space<vmem>>, vector<1x128x128xbf16>
    %40 = vector.shape_cast %39 : vector<1x128x128xbf16> to vector<128x128xbf16>
    %c3_30 = arith.constant 3 : index
    %c0_31 = arith.constant 0 : index
    %c0_32 = arith.constant 0 : index
    %41 = vector.load %arg5[%c3_30, %c0_31, %c0_32] : memref<13x1x128xf32, #tpu.memory_space<vmem>>, vector<1x1x128xf32>
    %42 = vector.shape_cast %41 : vector<1x1x128xf32> to vector<1x128xf32>
    %cst_33 = arith.constant dense<0.000000e+00> : vector<16x128xf32>
    %43 = tpu.matmul %38, %40, %cst_33 {dimension_numbers = #tpu.dot_dimension_numbers<[1], [0], [0], [1], [0, 0, 1, 1], [], []>} : vector<16x128xbf16>, vector<128x128xbf16>, vector<16x128xf32> -> vector<16x128xf32>
    %44 = vector.broadcast %42 : vector<1x128xf32> to vector<16x128xf32>
    %45 = arith.addf %43, %44 : vector<16x128xf32>
    %cst_34 = arith.constant 0.000000e+00 : f32
    %46 = vector.broadcast %cst_34 : f32 to vector<16x128xf32>
    %47 = arith.maximumf %45, %46 : vector<16x128xf32>
    %48 = arith.truncf %47 : vector<16x128xf32> to vector<16x128xbf16>
    %c4 = arith.constant 4 : index
    %c0_35 = arith.constant 0 : index
    %c0_36 = arith.constant 0 : index
    %49 = vector.load %arg4[%c4, %c0_35, %c0_36] : memref<13x128x128xbf16, #tpu.memory_space<vmem>>, vector<1x128x128xbf16>
    %50 = vector.shape_cast %49 : vector<1x128x128xbf16> to vector<128x128xbf16>
    %c4_37 = arith.constant 4 : index
    %c0_38 = arith.constant 0 : index
    %c0_39 = arith.constant 0 : index
    %51 = vector.load %arg5[%c4_37, %c0_38, %c0_39] : memref<13x1x128xf32, #tpu.memory_space<vmem>>, vector<1x1x128xf32>
    %52 = vector.shape_cast %51 : vector<1x1x128xf32> to vector<1x128xf32>
    %cst_40 = arith.constant dense<0.000000e+00> : vector<16x128xf32>
    %53 = tpu.matmul %48, %50, %cst_40 {dimension_numbers = #tpu.dot_dimension_numbers<[1], [0], [0], [1], [0, 0, 1, 1], [], []>} : vector<16x128xbf16>, vector<128x128xbf16>, vector<16x128xf32> -> vector<16x128xf32>
    %54 = vector.broadcast %52 : vector<1x128xf32> to vector<16x128xf32>
    %55 = arith.addf %53, %54 : vector<16x128xf32>
    %cst_41 = arith.constant 0.000000e+00 : f32
    %56 = vector.broadcast %cst_41 : f32 to vector<16x128xf32>
    %57 = arith.maximumf %55, %56 : vector<16x128xf32>
    %58 = arith.truncf %57 : vector<16x128xf32> to vector<16x128xbf16>
    %c5 = arith.constant 5 : index
    %c0_42 = arith.constant 0 : index
    %c0_43 = arith.constant 0 : index
    %59 = vector.load %arg4[%c5, %c0_42, %c0_43] : memref<13x128x128xbf16, #tpu.memory_space<vmem>>, vector<1x128x128xbf16>
    %60 = vector.shape_cast %59 : vector<1x128x128xbf16> to vector<128x128xbf16>
    %c5_44 = arith.constant 5 : index
    %c0_45 = arith.constant 0 : index
    %c0_46 = arith.constant 0 : index
    %61 = vector.load %arg5[%c5_44, %c0_45, %c0_46] : memref<13x1x128xf32, #tpu.memory_space<vmem>>, vector<1x1x128xf32>
    %62 = vector.shape_cast %61 : vector<1x1x128xf32> to vector<1x128xf32>
    %cst_47 = arith.constant dense<0.000000e+00> : vector<16x128xf32>
    %63 = tpu.matmul %58, %60, %cst_47 {dimension_numbers = #tpu.dot_dimension_numbers<[1], [0], [0], [1], [0, 0, 1, 1], [], []>} : vector<16x128xbf16>, vector<128x128xbf16>, vector<16x128xf32> -> vector<16x128xf32>
    %64 = vector.broadcast %62 : vector<1x128xf32> to vector<16x128xf32>
    %65 = arith.addf %63, %64 : vector<16x128xf32>
    %cst_48 = arith.constant 0.000000e+00 : f32
    %66 = vector.broadcast %cst_48 : f32 to vector<16x128xf32>
    %67 = arith.maximumf %65, %66 : vector<16x128xf32>
    %68 = arith.truncf %67 : vector<16x128xf32> to vector<16x128xbf16>
    %c6 = arith.constant 6 : index
    %c0_49 = arith.constant 0 : index
    %c0_50 = arith.constant 0 : index
    %69 = vector.load %arg4[%c6, %c0_49, %c0_50] : memref<13x128x128xbf16, #tpu.memory_space<vmem>>, vector<1x128x128xbf16>
    %70 = vector.shape_cast %69 : vector<1x128x128xbf16> to vector<128x128xbf16>
    %c6_51 = arith.constant 6 : index
    %c0_52 = arith.constant 0 : index
    %c0_53 = arith.constant 0 : index
    %71 = vector.load %arg5[%c6_51, %c0_52, %c0_53] : memref<13x1x128xf32, #tpu.memory_space<vmem>>, vector<1x1x128xf32>
    %72 = vector.shape_cast %71 : vector<1x1x128xf32> to vector<1x128xf32>
    %cst_54 = arith.constant dense<0.000000e+00> : vector<16x128xf32>
    %73 = tpu.matmul %68, %70, %cst_54 {dimension_numbers = #tpu.dot_dimension_numbers<[1], [0], [0], [1], [0, 0, 1, 1], [], []>} : vector<16x128xbf16>, vector<128x128xbf16>, vector<16x128xf32> -> vector<16x128xf32>
    %74 = vector.broadcast %72 : vector<1x128xf32> to vector<16x128xf32>
    %75 = arith.addf %73, %74 : vector<16x128xf32>
    %cst_55 = arith.constant 0.000000e+00 : f32
    %76 = vector.broadcast %cst_55 : f32 to vector<16x128xf32>
    %77 = arith.maximumf %75, %76 : vector<16x128xf32>
    %78 = arith.truncf %77 : vector<16x128xf32> to vector<16x128xbf16>
    %c7 = arith.constant 7 : index
    %c0_56 = arith.constant 0 : index
    %c0_57 = arith.constant 0 : index
    %79 = vector.load %arg4[%c7, %c0_56, %c0_57] : memref<13x128x128xbf16, #tpu.memory_space<vmem>>, vector<1x128x128xbf16>
    %80 = vector.shape_cast %79 : vector<1x128x128xbf16> to vector<128x128xbf16>
    %c7_58 = arith.constant 7 : index
    %c0_59 = arith.constant 0 : index
    %c0_60 = arith.constant 0 : index
    %81 = vector.load %arg5[%c7_58, %c0_59, %c0_60] : memref<13x1x128xf32, #tpu.memory_space<vmem>>, vector<1x1x128xf32>
    %82 = vector.shape_cast %81 : vector<1x1x128xf32> to vector<1x128xf32>
    %cst_61 = arith.constant dense<0.000000e+00> : vector<16x128xf32>
    %83 = tpu.matmul %78, %80, %cst_61 {dimension_numbers = #tpu.dot_dimension_numbers<[1], [0], [0], [1], [0, 0, 1, 1], [], []>} : vector<16x128xbf16>, vector<128x128xbf16>, vector<16x128xf32> -> vector<16x128xf32>
    %84 = vector.broadcast %82 : vector<1x128xf32> to vector<16x128xf32>
    %85 = arith.addf %83, %84 : vector<16x128xf32>
    %cst_62 = arith.constant 0.000000e+00 : f32
    %86 = vector.broadcast %cst_62 : f32 to vector<16x128xf32>
    %87 = arith.maximumf %85, %86 : vector<16x128xf32>
    %88 = arith.truncf %87 : vector<16x128xf32> to vector<16x128xbf16>
    %c8 = arith.constant 8 : index
    %c0_63 = arith.constant 0 : index
    %c0_64 = arith.constant 0 : index
    %89 = vector.load %arg4[%c8, %c0_63, %c0_64] : memref<13x128x128xbf16, #tpu.memory_space<vmem>>, vector<1x128x128xbf16>
    %90 = vector.shape_cast %89 : vector<1x128x128xbf16> to vector<128x128xbf16>
    %c8_65 = arith.constant 8 : index
    %c0_66 = arith.constant 0 : index
    %c0_67 = arith.constant 0 : index
    %91 = vector.load %arg5[%c8_65, %c0_66, %c0_67] : memref<13x1x128xf32, #tpu.memory_space<vmem>>, vector<1x1x128xf32>
    %92 = vector.shape_cast %91 : vector<1x1x128xf32> to vector<1x128xf32>
    %cst_68 = arith.constant dense<0.000000e+00> : vector<16x128xf32>
    %93 = tpu.matmul %88, %90, %cst_68 {dimension_numbers = #tpu.dot_dimension_numbers<[1], [0], [0], [1], [0, 0, 1, 1], [], []>} : vector<16x128xbf16>, vector<128x128xbf16>, vector<16x128xf32> -> vector<16x128xf32>
    %94 = vector.broadcast %92 : vector<1x128xf32> to vector<16x128xf32>
    %95 = arith.addf %93, %94 : vector<16x128xf32>
    %cst_69 = arith.constant 0.000000e+00 : f32
    %96 = vector.broadcast %cst_69 : f32 to vector<16x128xf32>
    %97 = arith.maximumf %95, %96 : vector<16x128xf32>
    %98 = arith.truncf %97 : vector<16x128xf32> to vector<16x128xbf16>
    %c9 = arith.constant 9 : index
    %c0_70 = arith.constant 0 : index
    %c0_71 = arith.constant 0 : index
    %99 = vector.load %arg4[%c9, %c0_70, %c0_71] : memref<13x128x128xbf16, #tpu.memory_space<vmem>>, vector<1x128x128xbf16>
    %100 = vector.shape_cast %99 : vector<1x128x128xbf16> to vector<128x128xbf16>
    %c9_72 = arith.constant 9 : index
    %c0_73 = arith.constant 0 : index
    %c0_74 = arith.constant 0 : index
    %101 = vector.load %arg5[%c9_72, %c0_73, %c0_74] : memref<13x1x128xf32, #tpu.memory_space<vmem>>, vector<1x1x128xf32>
    %102 = vector.shape_cast %101 : vector<1x1x128xf32> to vector<1x128xf32>
    %cst_75 = arith.constant dense<0.000000e+00> : vector<16x128xf32>
    %103 = tpu.matmul %98, %100, %cst_75 {dimension_numbers = #tpu.dot_dimension_numbers<[1], [0], [0], [1], [0, 0, 1, 1], [], []>} : vector<16x128xbf16>, vector<128x128xbf16>, vector<16x128xf32> -> vector<16x128xf32>
    %104 = vector.broadcast %102 : vector<1x128xf32> to vector<16x128xf32>
    %105 = arith.addf %103, %104 : vector<16x128xf32>
    %cst_76 = arith.constant 0.000000e+00 : f32
    %106 = vector.broadcast %cst_76 : f32 to vector<16x128xf32>
    %107 = arith.maximumf %105, %106 : vector<16x128xf32>
    %108 = arith.truncf %107 : vector<16x128xf32> to vector<16x128xbf16>
    %c10 = arith.constant 10 : index
    %c0_77 = arith.constant 0 : index
    %c0_78 = arith.constant 0 : index
    %109 = vector.load %arg4[%c10, %c0_77, %c0_78] : memref<13x128x128xbf16, #tpu.memory_space<vmem>>, vector<1x128x128xbf16>
    %110 = vector.shape_cast %109 : vector<1x128x128xbf16> to vector<128x128xbf16>
    %c10_79 = arith.constant 10 : index
    %c0_80 = arith.constant 0 : index
    %c0_81 = arith.constant 0 : index
    %111 = vector.load %arg5[%c10_79, %c0_80, %c0_81] : memref<13x1x128xf32, #tpu.memory_space<vmem>>, vector<1x1x128xf32>
    %112 = vector.shape_cast %111 : vector<1x1x128xf32> to vector<1x128xf32>
    %cst_82 = arith.constant dense<0.000000e+00> : vector<16x128xf32>
    %113 = tpu.matmul %108, %110, %cst_82 {dimension_numbers = #tpu.dot_dimension_numbers<[1], [0], [0], [1], [0, 0, 1, 1], [], []>} : vector<16x128xbf16>, vector<128x128xbf16>, vector<16x128xf32> -> vector<16x128xf32>
    %114 = vector.broadcast %112 : vector<1x128xf32> to vector<16x128xf32>
    %115 = arith.addf %113, %114 : vector<16x128xf32>
    %cst_83 = arith.constant 0.000000e+00 : f32
    %116 = vector.broadcast %cst_83 : f32 to vector<16x128xf32>
    %117 = arith.maximumf %115, %116 : vector<16x128xf32>
    %118 = arith.truncf %117 : vector<16x128xf32> to vector<16x128xbf16>
    %c11 = arith.constant 11 : index
    %c0_84 = arith.constant 0 : index
    %c0_85 = arith.constant 0 : index
    %119 = vector.load %arg4[%c11, %c0_84, %c0_85] : memref<13x128x128xbf16, #tpu.memory_space<vmem>>, vector<1x128x128xbf16>
    %120 = vector.shape_cast %119 : vector<1x128x128xbf16> to vector<128x128xbf16>
    %c11_86 = arith.constant 11 : index
    %c0_87 = arith.constant 0 : index
    %c0_88 = arith.constant 0 : index
    %121 = vector.load %arg5[%c11_86, %c0_87, %c0_88] : memref<13x1x128xf32, #tpu.memory_space<vmem>>, vector<1x1x128xf32>
    %122 = vector.shape_cast %121 : vector<1x1x128xf32> to vector<1x128xf32>
    %cst_89 = arith.constant dense<0.000000e+00> : vector<16x128xf32>
    %123 = tpu.matmul %118, %120, %cst_89 {dimension_numbers = #tpu.dot_dimension_numbers<[1], [0], [0], [1], [0, 0, 1, 1], [], []>} : vector<16x128xbf16>, vector<128x128xbf16>, vector<16x128xf32> -> vector<16x128xf32>
    %124 = vector.broadcast %122 : vector<1x128xf32> to vector<16x128xf32>
    %125 = arith.addf %123, %124 : vector<16x128xf32>
    %cst_90 = arith.constant 0.000000e+00 : f32
    %126 = vector.broadcast %cst_90 : f32 to vector<16x128xf32>
    %127 = arith.maximumf %125, %126 : vector<16x128xf32>
    %128 = arith.truncf %127 : vector<16x128xf32> to vector<16x128xbf16>
    %c12 = arith.constant 12 : index
    %c0_91 = arith.constant 0 : index
    %c0_92 = arith.constant 0 : index
    %129 = vector.load %arg4[%c12, %c0_91, %c0_92] : memref<13x128x128xbf16, #tpu.memory_space<vmem>>, vector<1x128x128xbf16>
    %130 = vector.shape_cast %129 : vector<1x128x128xbf16> to vector<128x128xbf16>
    %c12_93 = arith.constant 12 : index
    %c0_94 = arith.constant 0 : index
    %c0_95 = arith.constant 0 : index
    %131 = vector.load %arg5[%c12_93, %c0_94, %c0_95] : memref<13x1x128xf32, #tpu.memory_space<vmem>>, vector<1x1x128xf32>
    %132 = vector.shape_cast %131 : vector<1x1x128xf32> to vector<1x128xf32>
    %cst_96 = arith.constant dense<0.000000e+00> : vector<16x128xf32>
    %133 = tpu.matmul %128, %130, %cst_96 {dimension_numbers = #tpu.dot_dimension_numbers<[1], [0], [0], [1], [0, 0, 1, 1], [], []>} : vector<16x128xbf16>, vector<128x128xbf16>, vector<16x128xf32> -> vector<16x128xf32>
    %134 = vector.broadcast %132 : vector<1x128xf32> to vector<16x128xf32>
    %135 = arith.addf %133, %134 : vector<16x128xf32>
    %cst_97 = arith.constant 0.000000e+00 : f32
    %136 = vector.broadcast %cst_97 : f32 to vector<16x128xf32>
    %137 = arith.maximumf %135, %136 : vector<16x128xf32>
    %138 = arith.truncf %137 : vector<16x128xf32> to vector<16x128xbf16>
    %c0_98 = arith.constant 0 : index
    %c0_99 = arith.constant 0 : index
    %139 = vector.load %arg6[%c0_98, %c0_99] : memref<128x128xbf16, #tpu.memory_space<vmem>>, vector<128x128xbf16>
    %c0_100 = arith.constant 0 : index
    %c0_101 = arith.constant 0 : index
    %140 = vector.load %arg7[%c0_100, %c0_101] : memref<1x128xf32, #tpu.memory_space<vmem>>, vector<1x128xf32>
    %cst_102 = arith.constant dense<0.000000e+00> : vector<16x128xf32>
    %141 = tpu.matmul %138, %139, %cst_102 {dimension_numbers = #tpu.dot_dimension_numbers<[1], [0], [0], [1], [0, 0, 1, 1], [], []>} : vector<16x128xbf16>, vector<128x128xbf16>, vector<16x128xf32> -> vector<16x128xf32>
    %142 = vector.broadcast %140 : vector<1x128xf32> to vector<16x128xf32>
    %143 = arith.addf %141, %142 : vector<16x128xf32>
    %c0_103 = arith.constant 0 : index
    %c0_104 = arith.constant 0 : index
    %144 = vector.load %arg8[%c0_103, %c0_104] : memref<16x128xf32, #tpu.memory_space<vmem>>, vector<16x128xf32>
    tpu.vector_store %arg8[%c0_103, %c0_104], %143 {strides = array<i32>} : memref<16x128xf32, #tpu.memory_space<vmem>>, vector<16x128xf32>,
    return
  }
  func.func @transform_0(%arg0: i32) -> (i32, i32) {
    %c0_i32 = arith.constant 0 : i32
    %c0_i32_0 = arith.constant 0 : i32
    return %arg0, %c0_i32 : i32, i32
  }
  func.func @transform_1(%arg0: i32) -> (i32, i32) {
    %c0_i32 = arith.constant 0 : i32
    %c0_i32_0 = arith.constant 0 : i32
    %c0_i32_1 = arith.constant 0 : i32
    return %c0_i32, %c0_i32_0 : i32, i32
  }
  func.func @transform_2(%arg0: i32) -> (i32, i32) {
    %c0_i32 = arith.constant 0 : i32
    %c0_i32_0 = arith.constant 0 : i32
    %c0_i32_1 = arith.constant 0 : i32
    return %c0_i32, %c0_i32_0 : i32, i32
  }
  func.func @transform_3(%arg0: i32) -> (i32, i32, i32) {
    %c0_i32 = arith.constant 0 : i32
    %c0_i32_0 = arith.constant 0 : i32
    %c0_i32_1 = arith.constant 0 : i32
    %c0_i32_2 = arith.constant 0 : i32
    return %c0_i32, %c0_i32_0, %c0_i32_1 : i32, i32, i32
  }
  func.func @transform_4(%arg0: i32) -> (i32, i32, i32) {
    %c0_i32 = arith.constant 0 : i32
    %c0_i32_0 = arith.constant 0 : i32
    %c0_i32_1 = arith.constant 0 : i32
    %c0_i32_2 = arith.constant 0 : i32
    return %c0_i32, %c0_i32_0, %c0_i32_1 : i32, i32, i32
  }
  func.func @transform_5(%arg0: i32) -> (i32, i32) {
    %c0_i32 = arith.constant 0 : i32
    %c0_i32_0 = arith.constant 0 : i32
    %c0_i32_1 = arith.constant 0 : i32
    return %c0_i32, %c0_i32_0 : i32, i32
  }
  func.func @transform_6(%arg0: i32) -> (i32, i32) {
    %c0_i32 = arith.constant 0 : i32
    %c0_i32_0 = arith.constant 0 : i32
    %c0_i32_1 = arith.constant 0 : i32
    return %c0_i32, %c0_i32_0 : i32, i32
  }
  func.func @transform_7(%arg0: i32) -> (i32, i32) {
    %c0_i32 = arith.constant 0 : i32
    %c0_i32_0 = arith.constant 0 : i32
    return %arg0, %c0_i32 : i32, i32
  }
}

</mosaic_0001>

<llo_original>
// kernel: tpu_custom_call.1
$region0: #{tpu_custom_call.1}
  #allocation0 [shape = 'u32[]', space=smem, size = 0x4, offset = 0x4, fixed_abs, tag = 'smem constant byte address 0x4 - core index']
  #allocation1 [shape = 'u32[144,128]{1,0:T(1,128)}', space=vmem, size = 0x12000, scoped, tag = 'internal scratch']
  %s0 = inlined_call_operand.hbm [shape: bf16[16,128], index: 0, kind: input, shape index: {}]
  %s1 = inlined_call_operand.hbm [shape: bf16[128,128], index: 1, kind: input, shape index: {}]
  %s2 = inlined_call_operand.vmem [shape: f32[1,128], index: 2, kind: input, shape index: {}]
  %s3 = inlined_call_operand.hbm [shape: bf16[13,128,128], index: 3, kind: input, shape index: {}]
  %s4 = inlined_call_operand.vmem [shape: f32[13,1,128], index: 4, kind: input, shape index: {}]
  %s5 = inlined_call_operand.hbm [shape: bf16[128,128], index: 5, kind: input, shape index: {}]
  %s6 = inlined_call_operand.vmem [shape: f32[1,128], index: 6, kind: input, shape index: {}]
  %s7 = inlined_call_operand.hbm [shape: f32[16,128], index: 7, kind: output, shape index: {}]
  %s8 = sld [smem:[#allocation0]]
  $region54: #{tpu_custom_call.1} parent=0
    _
  %s10 = ssub.s32 1, %s8
  %s11 = scalar_select 0, %s10, %s8
  $region1: #{tpu_custom_call.1} parent=0
    #allocation2 [shape = 'u8[4096]{0}', space=vmem, size = 0x1000, scoped, tag = 'input window, operand 0, single buffered']
    #allocation3 [shape = 's32[1]{0}', space=sflag, size = 0x4, scoped, tag = 'scoped memory for tpu_custom_call.1']
    #allocation4 [shape = 's32[1]{0}', space=sflag, size = 0x4, scoped, tag = 'scoped memory for tpu_custom_call.1']
    #allocation5 [shape = 'u8[32768]{0}', space=vmem, size = 0x8000, scoped, tag = 'input window, operand 1, single buffered']
    #allocation6 [shape = 's32[1]{0}', space=sflag, size = 0x4, scoped, tag = 'scoped memory for tpu_custom_call.1']
    #allocation7 [shape = 'u8[425984]{0}', space=vmem, size = 0x68000, scoped, tag = 'input window, operand 3, single buffered']
    #allocation8 [shape = 'u8[32768]{0}', space=vmem, size = 0x8000, scoped, tag = 'input window, operand 5, single buffered']
    #allocation9 [shape = 's32[1]{0}', space=sflag, size = 0x4, scoped, tag = 'scoped memory for tpu_custom_call.1']
    #allocation10 [shape = 'u8[8192]{0}', space=vmem, size = 0x2000, scoped, tag = 'output window, operand 0, single buffered']
    %12 = vsyncpa [#allocation3], 0
    %13 = vsyncpa [#allocation6], 0
    %14 = vsyncpa [#allocation9], 0
    %15 = vsyncpa [#allocation4], 0
    // Predicated region
    $region2: #{tpu_custom_call.1} parent=1 // pred_check
      _
    $region3: #{tpu_custom_call.1} parent=1 // pred_check_branch
      %17 = sbr.rel (0) target = $region5
    $region4: #{tpu_custom_call.1} parent=1 // pred_region
      %s19 = ssub.s32 128, 128
      %20 = vsyncadd [#allocation3], %s19
      %s21 = sshll.u32 [#allocation2], 4
      %s22 = int_to_ptr.vmem [resolvable:$true] %s21
      %27 = dma.hbm_to_vmem [thread:$0]  %s0, 128, %s22, [#allocation3], 64, 64, 4
    $region5: #{tpu_custom_call.1} parent=1 // pred_fallthru
      _
    // Predicated region
    $region6: #{tpu_custom_call.1} parent=1 // pred_check
      _
    $region7: #{tpu_custom_call.1} parent=1 // pred_check_branch
      %29 = sbr.rel (0) target = $region9
    $region8: #{tpu_custom_call.1} parent=1 // pred_region
      %s31 = ssub.s32 1024, 1024
      %32 = vsyncadd [#allocation6], %s31
      %s33 = sshll.u32 [#allocation5], 4
      %s34 = int_to_ptr.vmem [resolvable:$true] %s33
      %39 = dma.hbm_to_vmem [thread:$0]  %s1, 1024, %s34, [#allocation6], 64, 64, 4
    $region9: #{tpu_custom_call.1} parent=1 // pred_fallthru
      _
    // Predicated region
    $region10: #{tpu_custom_call.1} parent=1 // pred_check
      _
    $region11: #{tpu_custom_call.1} parent=1 // pred_check_branch
      %41 = sbr.rel (0) target = $region13
    $region12: #{tpu_custom_call.1} parent=1 // pred_region
      _
    $region13: #{tpu_custom_call.1} parent=1 // pred_fallthru
      _
    // Predicated region
    $region14: #{tpu_custom_call.1} parent=1 // pred_check
      _
    $region15: #{tpu_custom_call.1} parent=1 // pred_check_branch
      %43 = sbr.rel (0) target = $region17
    $region16: #{tpu_custom_call.1} parent=1 // pred_region
      %s45 = ssub.s32 13312, 13312
      %46 = vsyncadd [#allocation6], %s45
      %s47 = sshll.u32 [#allocation7], 4
      %s48 = int_to_ptr.vmem [resolvable:$true] %s47
      %53 = dma.hbm_to_vmem [thread:$0]  %s3, 13312, %s48, [#allocation6], 64, 64, 4
    $region17: #{tpu_custom_call.1} parent=1 // pred_fallthru
      _
    // Predicated region
    $region18: #{tpu_custom_call.1} parent=1 // pred_check
      _
    $region19: #{tpu_custom_call.1} parent=1 // pred_check_branch
      %55 = sbr.rel (0) target = $region21
    $region20: #{tpu_custom_call.1} parent=1 // pred_region
      _
    $region21: #{tpu_custom_call.1} parent=1 // pred_fallthru
      _
    // Predicated region
    $region22: #{tpu_custom_call.1} parent=1 // pred_check
      _
    $region23: #{tpu_custom_call.1} parent=1 // pred_check_branch
      %57 = sbr.rel (0) target = $region25
    $region24: #{tpu_custom_call.1} parent=1 // pred_region
      %s59 = ssub.s32 1024, 1024
      %60 = vsyncadd [#allocation9], %s59
      %s61 = sshll.u32 [#allocation8], 4
      %s62 = int_to_ptr.vmem [resolvable:$true] %s61
      %67 = dma.hbm_to_vmem [thread:$0]  %s5, 1024, %s62, [#allocation9], 64, 64, 4
    $region25: #{tpu_custom_call.1} parent=1 // pred_fallthru
      _
    // Predicated region
    $region26: #{tpu_custom_call.1} parent=1 // pred_check
      _
    $region27: #{tpu_custom_call.1} parent=1 // pred_check_branch
      %69 = sbr.rel (0) target = $region29
    $region28: #{tpu_custom_call.1} parent=1 // pred_region
      _
    $region29: #{tpu_custom_call.1} parent=1 // pred_fallthru
      _
    // Predicated region
    $region30: #{tpu_custom_call.1} parent=1 // pred_check
      _
    $region31: #{tpu_custom_call.1} parent=1 // pred_check_branch
      %71 = sbr.rel (0) target = $region33
    $region32: #{tpu_custom_call.1} parent=1 // pred_region
      %72 = dma.done [#allocation3], 128
    $region33: #{tpu_custom_call.1} parent=1 // pred_fallthru
      _
    // Predicated region
    $region34: #{tpu_custom_call.1} parent=1 // pred_check
      _
    $region35: #{tpu_custom_call.1} parent=1 // pred_check_branch
      %74 = sbr.rel (0) target = $region37
    $region36: #{tpu_custom_call.1} parent=1 // pred_region
      %75 = dma.done [#allocation6], 1024
    $region37: #{tpu_custom_call.1} parent=1 // pred_fallthru
      _
    // Predicated region
    $region38: #{tpu_custom_call.1} parent=1 // pred_check
      _
    $region39: #{tpu_custom_call.1} parent=1 // pred_check_branch
      %77 = sbr.rel (0) target = $region41
    $region40: #{tpu_custom_call.1} parent=1 // pred_region
      %78 = dma.done [#allocation6], 13312
    $region41: #{tpu_custom_call.1} parent=1 // pred_fallthru
      _
    // Predicated region
    $region42: #{tpu_custom_call.1} parent=1 // pred_check
      _
    $region43: #{tpu_custom_call.1} parent=1 // pred_check_branch
      %80 = sbr.rel (0) target = $region45
    $region44: #{tpu_custom_call.1} parent=1 // pred_region
      %81 = dma.done [#allocation9], 1024
    $region45: #{tpu_custom_call.1} parent=1 // pred_fallthru
      _
    %v83 = vld [vmem:[#allocation5] sm:$0xf]
    %v84 = vld [vmem:[#allocation5 + $0x4] sm:$0xf]
    %v85 = vld [vmem:[#allocation5 + $0x8] sm:$0xf]
    %v86 = vld [vmem:[#allocation5 + $0xc] sm:$0xf]
    %v87 = vld [vmem:[#allocation5 + $0x10] sm:$0xf]
    %v88 = vld [vmem:[#allocation5 + $0x14] sm:$0xf]
    %v89 = vld [vmem:[#allocation5 + $0x18] sm:$0xf]
    %v90 = vld [vmem:[#allocation5 + $0x1c] sm:$0xf]
    %v91 = vld [vmem:[#allocation5 + $0x20] sm:$0xf]
    %v92 = vld [vmem:[#allocation5 + $0x24] sm:$0xf]
    %v93 = vld [vmem:[#allocation5 + $0x28] sm:$0xf]
    %v94 = vld [vmem:[#allocation5 + $0x2c] sm:$0xf]
    %v95 = vld [vmem:[#allocation5 + $0x30] sm:$0xf]
    %v96 = vld [vmem:[#allocation5 + $0x34] sm:$0xf]
    %v97 = vld [vmem:[#allocation5 + $0x38] sm:$0xf]
    %v98 = vld [vmem:[#allocation5 + $0x3c] sm:$0xf]
    %v99 = vld [vmem:[%s2] sm:$0x1]
    %v100 = vld [vmem:[#allocation2] sm:$0xf]
    %v101 = vld [vmem:[#allocation2 + $0x4] sm:$0xf]
    %v103 = vlaneseq
    %v104 = vshrl.u32 %v103, 7
    %v105 = vsub.s32 0, %v104
    %v106 = vrot.slane %v99, %v105
    %v110 = vunpack.c.l.b16 %v100
    %v111 = vunpack.c.l.b16 %v101
    %v112 = vpack.c.b16 %v111, %v110
    %v130 = vunpack.c.l.b16 %v83
    %v131 = vunpack.c.l.b16 %v84
    %v132 = vunpack.c.l.b16 %v85
    %v133 = vunpack.c.l.b16 %v86
    %v134 = vunpack.c.l.b16 %v87
    %v135 = vunpack.c.l.b16 %v88
    %v136 = vunpack.c.l.b16 %v89
    %v137 = vunpack.c.l.b16 %v90
    %v138 = vunpack.c.l.b16 %v91
    %v139 = vunpack.c.l.b16 %v92
    %v140 = vunpack.c.l.b16 %v93
    %v141 = vunpack.c.l.b16 %v94
    %v142 = vunpack.c.l.b16 %v95
    %v143 = vunpack.c.l.b16 %v96
    %v144 = vunpack.c.l.b16 %v97
    %v145 = vunpack.c.l.b16 %v98
    %v146 = vpack.c.b16 %v131, %v130
    %v147 = vpack.c.b16 %v133, %v132
    %v148 = vpack.c.b16 %v135, %v134
    %v149 = vpack.c.b16 %v137, %v136
    %v150 = vpack.c.b16 %v139, %v138
    %v151 = vpack.c.b16 %v141, %v140
    %v152 = vpack.c.b16 %v143, %v142
    %v153 = vpack.c.b16 %v145, %v144
    %162 = vmatprep.subr.bf16.mxu0 0
    %163 = vmatpush1.bf16.msra.mxu0 %v146
    %164 = vmatprep.subr.bf16.mxu0 0
    %165 = vmatpush1.bf16.msra.mxu0 %v147
    %166 = vmatprep.subr.bf16.mxu0 0
    %167 = vmatpush1.bf16.msra.mxu0 %v148
    %168 = vmatprep.subr.bf16.mxu0 0
    %169 = vmatpush1.bf16.msra.mxu0 %v149
    %170 = vmatprep.subr.bf16.mxu0 0
    %171 = vmatpush1.bf16.msra.mxu0 %v150
    %172 = vmatprep.subr.bf16.mxu0 0
    %173 = vmatpush1.bf16.msra.mxu0 %v151
    %174 = vmatprep.subr.bf16.mxu0 0
    %175 = vmatpush1.bf16.msra.mxu0 %v152
    %176 = vmatprep.subr.bf16.mxu0 0
    %177 = vmatpush1.bf16.msra.mxu0 %v153
    %178 = vmatprep.subr.bf16.mxu0 0
    %179 = vmatpush1.bf16.msra.mxu0 0
    %180 = vmatprep.subr.bf16.mxu0 0
    %181 = vmatpush1.bf16.msra.mxu0 0
    %182 = vmatprep.subr.bf16.mxu0 0
    %183 = vmatpush1.bf16.msra.mxu0 0
    %184 = vmatprep.subr.bf16.mxu0 0
    %185 = vmatpush1.bf16.msra.mxu0 0
    %186 = vmatprep.subr.bf16.mxu0 0
    %187 = vmatpush1.bf16.msra.mxu0 0
    %188 = vmatprep.subr.bf16.mxu0 0
    %189 = vmatpush1.bf16.msra.mxu0 0
    %190 = vmatprep.subr.bf16.mxu0 0
    %191 = vmatpush1.bf16.msra.mxu0 0
    %192 = vmatprep.subr.bf16.mxu0 0
    %193 = vmatpush1.bf16.msra.mxu0 0
    %194 = vmatprep.mubr.bf16.mxu0 0
    %195 = vmatmul.mubr.bf16.gmra.mrb[0].mxu0 %v112
    %v196 = vpop.f32.mrb[0].mxu0
    %v197 = vadd.f32 %v106, %v196
    %v198 = vpop.f32.mrb[0].mxu0
    %v199 = vpop.f32.mrb[0].mxu0
    %v200 = vadd.f32 %v106, %v199
    %v201 = vpop.f32.mrb[0].mxu0
    %202 = vdwg.mxu0
    %v203 = vmax.f32 %v197, 0.0
    %v204 = vmax.f32 %v200, 0.0
    %v205 = vpack.c.bf16 %v204, %v203
    %v206 = vld [vmem:[#allocation7] sm:$0xf]
    %v207 = vld [vmem:[#allocation7 + $0x4] sm:$0xf]
    %v208 = vld [vmem:[#allocation7 + $0x8] sm:$0xf]
    %v209 = vld [vmem:[#allocation7 + $0xc] sm:$0xf]
    %v210 = vld [vmem:[#allocation7 + $0x10] sm:$0xf]
    %v211 = vld [vmem:[#allocation7 + $0x14] sm:$0xf]
    %v212 = vld [vmem:[#allocation7 + $0x18] sm:$0xf]
    %v213 = vld [vmem:[#allocation7 + $0x1c] sm:$0xf]
    %v214 = vld [vmem:[#allocation7 + $0x20] sm:$0xf]
    %v215 = vld [vmem:[#allocation7 + $0x24] sm:$0xf]
    %v216 = vld [vmem:[#allocation7 + $0x28] sm:$0xf]
    %v217 = vld [vmem:[#allocation7 + $0x2c] sm:$0xf]
    %v218 = vld [vmem:[#allocation7 + $0x30] sm:$0xf]
    %v219 = vld [vmem:[#allocation7 + $0x34] sm:$0xf]
    %v220 = vld [vmem:[#allocation7 + $0x38] sm:$0xf]
    %v221 = vld [vmem:[#allocation7 + $0x3c] sm:$0xf]
    %v222 = vld [vmem:[%s4] sm:$0x1]
    %v224 = vlaneseq
    %v225 = vshrl.u32 %v224, 7
    %v226 = vsub.s32 0, %v225
    %v227 = vrot.slane %v222, %v226
    %v245 = vunpack.c.l.b16 %v206
    %v246 = vunpack.c.l.b16 %v207
    %v247 = vunpack.c.l.b16 %v208
    %v248 = vunpack.c.l.b16 %v209
    %v249 = vunpack.c.l.b16 %v210
    %v250 = vunpack.c.l.b16 %v211
    %v251 = vunpack.c.l.b16 %v212
    %v252 = vunpack.c.l.b16 %v213
    %v253 = vunpack.c.l.b16 %v214
    %v254 = vunpack.c.l.b16 %v215
    %v255 = vunpack.c.l.b16 %v216
    %v256 = vunpack.c.l.b16 %v217
    %v257 = vunpack.c.l.b16 %v218
    %v258 = vunpack.c.l.b16 %v219
    %v259 = vunpack.c.l.b16 %v220
    %v260 = vunpack.c.l.b16 %v221
    %v261 = vpack.c.b16 %v246, %v245
    %v262 = vpack.c.b16 %v248, %v247
    %v263 = vpack.c.b16 %v250, %v249
    %v264 = vpack.c.b16 %v252, %v251
    %v265 = vpack.c.b16 %v254, %v253
    %v266 = vpack.c.b16 %v256, %v255
    %v267 = vpack.c.b16 %v258, %v257
    %v268 = vpack.c.b16 %v260, %v259
    %277 = vmatprep.subr.bf16.mxu0 0
    %278 = vmatpush1.bf16.msra.mxu0 %v261
    %279 = vmatprep.subr.bf16.mxu0 0
    %280 = vmatpush1.bf16.msra.mxu0 %v262
    %281 = vmatprep.subr.bf16.mxu0 0
    %282 = vmatpush1.bf16.msra.mxu0 %v263
    %283 = vmatprep.subr.bf16.mxu0 0
    %284 = vmatpush1.bf16.msra.mxu0 %v264
    %285 = vmatprep.subr.bf16.mxu0 0
    %286 = vmatpush1.bf16.msra.mxu0 %v265
    %287 = vmatprep.subr.bf16.mxu0 0
    %288 = vmatpush1.bf16.msra.mxu0 %v266
    %289 = vmatprep.subr.bf16.mxu0 0
    %290 = vmatpush1.bf16.msra.mxu0 %v267
    %291 = vmatprep.subr.bf16.mxu0 0
    %292 = vmatpush1.bf16.msra.mxu0 %v268
    %293 = vmatprep.subr.bf16.mxu0 0
    %294 = vmatpush1.bf16.msra.mxu0 0
    %295 = vmatprep.subr.bf16.mxu0 0
    %296 = vmatpush1.bf16.msra.mxu0 0
    %297 = vmatprep.subr.bf16.mxu0 0
    %298 = vmatpush1.bf16.msra.mxu0 0
    %299 = vmatprep.subr.bf16.mxu0 0
    %300 = vmatpush1.bf16.msra.mxu0 0
    %301 = vmatprep.subr.bf16.mxu0 0
    %302 = vmatpush1.bf16.msra.mxu0 0
    %303 = vmatprep.subr.bf16.mxu0 0
    %304 = vmatpush1.bf16.msra.mxu0 0
    %305 = vmatprep.subr.bf16.mxu0 0
    %306 = vmatpush1.bf16.msra.mxu0 0
    %307 = vmatprep.subr.bf16.mxu0 0
    %308 = vmatpush1.bf16.msra.mxu0 0
    %309 = vmatprep.mubr.bf16.mxu0 0
    %310 = vmatmul.mubr.bf16.gmra.mrb[0].mxu0 %v205
    %v311 = vpop.f32.mrb[0].mxu0
    %v312 = vadd.f32 %v227, %v311
    %v313 = vpop.f32.mrb[0].mxu0
    %v314 = vpop.f32.mrb[0].mxu0
    %v315 = vadd.f32 %v227, %v314
    %v316 = vpop.f32.mrb[0].mxu0
    %317 = vdwg.mxu0
    %v318 = vmax.f32 %v312, 0.0
    %v319 = vmax.f32 %v315, 0.0
    %v320 = vpack.c.bf16 %v319, %v318
    %s321 = scalar_lea.vmem [#allocation7], 64
    %v322 = vld [vmem:[%s321] sm:$0xf]
    %v323 = vld [vmem:[%s321 + $0x4] sm:$0xf]
    %v324 = vld [vmem:[%s321 + $0x8] sm:$0xf]
    %v325 = vld [vmem:[%s321 + $0xc] sm:$0xf]
    %v326 = vld [vmem:[%s321 + $0x10] sm:$0xf]
    %v327 = vld [vmem:[%s321 + $0x14] sm:$0xf]
    %v328 = vld [vmem:[%s321 + $0x18] sm:$0xf]
    %v329 = vld [vmem:[%s321 + $0x1c] sm:$0xf]
    %v330 = vld [vmem:[%s321 + $0x20] sm:$0xf]
    %v331 = vld [vmem:[%s321 + $0x24] sm:$0xf]
    %v332 = vld [vmem:[%s321 + $0x28] sm:$0xf]
    %v333 = vld [vmem:[%s321 + $0x2c] sm:$0xf]
    %v334 = vld [vmem:[%s321 + $0x30] sm:$0xf]
    %v335 = vld [vmem:[%s321 + $0x34] sm:$0xf]
    %v336 = vld [vmem:[%s321 + $0x38] sm:$0xf]
    %v337 = vld [vmem:[%s321 + $0x3c] sm:$0xf]
    %s338 = scalar_lea.vmem %s4, 1
    %v339 = vld [vmem:[%s338] sm:$0x1]
    %v341 = vlaneseq
    %v342 = vshrl.u32 %v341, 7
    %v343 = vsub.s32 0, %v342
    %v344 = vrot.slane %v339, %v343
    %v362 = vunpack.c.l.b16 %v322
    %v363 = vunpack.c.l.b16 %v323
    %v364 = vunpack.c.l.b16 %v324
    %v365 = vunpack.c.l.b16 %v325
    %v366 = vunpack.c.l.b16 %v326
    %v367 = vunpack.c.l.b16 %v327
    %v368 = vunpack.c.l.b16 %v328
    %v369 = vunpack.c.l.b16 %v329
    %v370 = vunpack.c.l.b16 %v330
    %v371 = vunpack.c.l.b16 %v331
    %v372 = vunpack.c.l.b16 %v332
    %v373 = vunpack.c.l.b16 %v333
    %v374 = vunpack.c.l.b16 %v334
    %v375 = vunpack.c.l.b16 %v335
    %v376 = vunpack.c.l.b16 %v336
    %v377 = vunpack.c.l.b16 %v337
    %v378 = vpack.c.b16 %v363, %v362
    %v379 = vpack.c.b16 %v365, %v364
    %v380 = vpack.c.b16 %v367, %v366
    %v381 = vpack.c.b16 %v369, %v368
    %v382 = vpack.c.b16 %v371, %v370
    %v383 = vpack.c.b16 %v373, %v372
    %v384 = vpack.c.b16 %v375, %v374
    %v385 = vpack.c.b16 %v377, %v376
    %394 = vmatprep.subr.bf16.mxu0 0
    %395 = vmatpush1.bf16.msra.mxu0 %v378
    %396 = vmatprep.subr.bf16.mxu0 0
    %397 = vmatpush1.bf16.msra.mxu0 %v379
    %398 = vmatprep.subr.bf16.mxu0 0
    %399 = vmatpush1.bf16.msra.mxu0 %v380
    %400 = vmatprep.subr.bf16.mxu0 0
    %401 = vmatpush1.bf16.msra.mxu0 %v381
    %402 = vmatprep.subr.bf16.mxu0 0
    %403 = vmatpush1.bf16.msra.mxu0 %v382
    %404 = vmatprep.subr.bf16.mxu0 0
    %405 = vmatpush1.bf16.msra.mxu0 %v383
    %406 = vmatprep.subr.bf16.mxu0 0
    %407 = vmatpush1.bf16.msra.mxu0 %v384
    %408 = vmatprep.subr.bf16.mxu0 0
    %409 = vmatpush1.bf16.msra.mxu0 %v385
    %410 = vmatprep.subr.bf16.mxu0 0
    %411 = vmatpush1.bf16.msra.mxu0 0
    %412 = vmatprep.subr.bf16.mxu0 0
    %413 = vmatpush1.bf16.msra.mxu0 0
    %414 = vmatprep.subr.bf16.mxu0 0
    %415 = vmatpush1.bf16.msra.mxu0 0
    %416 = vmatprep.subr.bf16.mxu0 0
    %417 = vmatpush1.bf16.msra.mxu0 0
    %418 = vmatprep.subr.bf16.mxu0 0
    %419 = vmatpush1.bf16.msra.mxu0 0
    %420 = vmatprep.subr.bf16.mxu0 0
    %421 = vmatpush1.bf16.msra.mxu0 0
    %422 = vmatprep.subr.bf16.mxu0 0
    %423 = vmatpush1.bf16.msra.mxu0 0
    %424 = vmatprep.subr.bf16.mxu0 0
    %425 = vmatpush1.bf16.msra.mxu0 0
    %426 = vmatprep.mubr.bf16.mxu0 0
    %427 = vmatmul.mubr.bf16.gmra.mrb[0].mxu0 %v320
    %v428 = vpop.f32.mrb[0].mxu0
    %v429 = vadd.f32 %v344, %v428
    %v430 = vpop.f32.mrb[0].mxu0
    %v431 = vpop.f32.mrb[0].mxu0
    %v432 = vadd.f32 %v344, %v431
    %v433 = vpop.f32.mrb[0].mxu0
    %434 = vdwg.mxu0
    %v435 = vmax.f32 %v429, 0.0
    %v436 = vmax.f32 %v432, 0.0
    %v437 = vpack.c.bf16 %v436, %v435
    %s438 = scalar_lea.vmem [#allocation7], 128
    %v439 = vld [vmem:[%s438] sm:$0xf]
    %v440 = vld [vmem:[%s438 + $0x4] sm:$0xf]
    %v441 = vld [vmem:[%s438 + $0x8] sm:$0xf]
    %v442 = vld [vmem:[%s438 + $0xc] sm:$0xf]
    %v443 = vld [vmem:[%s438 + $0x10] sm:$0xf]
    %v444 = vld [vmem:[%s438 + $0x14] sm:$0xf]
    %v445 = vld [vmem:[%s438 + $0x18] sm:$0xf]
    %v446 = vld [vmem:[%s438 + $0x1c] sm:$0xf]
    %v447 = vld [vmem:[%s438 + $0x20] sm:$0xf]
    %v448 = vld [vmem:[%s438 + $0x24] sm:$0xf]
    %v449 = vld [vmem:[%s438 + $0x28] sm:$0xf]
    %v450 = vld [vmem:[%s438 + $0x2c] sm:$0xf]
    %v451 = vld [vmem:[%s438 + $0x30] sm:$0xf]
    %v452 = vld [vmem:[%s438 + $0x34] sm:$0xf]
    %v453 = vld [vmem:[%s438 + $0x38] sm:$0xf]
    %v454 = vld [vmem:[%s438 + $0x3c] sm:$0xf]
    %s455 = scalar_lea.vmem %s4, 2
    %v456 = vld [vmem:[%s455] sm:$0x1]
    %v458 = vlaneseq
    %v459 = vshrl.u32 %v458, 7
    %v460 = vsub.s32 0, %v459
    %v461 = vrot.slane %v456, %v460
    %v479 = vunpack.c.l.b16 %v439
    %v480 = vunpack.c.l.b16 %v440
    %v481 = vunpack.c.l.b16 %v441
    %v482 = vunpack.c.l.b16 %v442
    %v483 = vunpack.c.l.b16 %v443
    %v484 = vunpack.c.l.b16 %v444
    %v485 = vunpack.c.l.b16 %v445
    %v486 = vunpack.c.l.b16 %v446
    %v487 = vunpack.c.l.b16 %v447
    %v488 = vunpack.c.l.b16 %v448
    %v489 = vunpack.c.l.b16 %v449
    %v490 = vunpack.c.l.b16 %v450
    %v491 = vunpack.c.l.b16 %v451
    %v492 = vunpack.c.l.b16 %v452
    %v493 = vunpack.c.l.b16 %v453
    %v494 = vunpack.c.l.b16 %v454
    %v495 = vpack.c.b16 %v480, %v479
    %v496 = vpack.c.b16 %v482, %v481
    %v497 = vpack.c.b16 %v484, %v483
    %v498 = vpack.c.b16 %v486, %v485
    %v499 = vpack.c.b16 %v488, %v487
    %v500 = vpack.c.b16 %v490, %v489
    %v501 = vpack.c.b16 %v492, %v491
    %v502 = vpack.c.b16 %v494, %v493
    %511 = vmatprep.subr.bf16.mxu0 0
    %512 = vmatpush1.bf16.msra.mxu0 %v495
    %513 = vmatprep.subr.bf16.mxu0 0
    %514 = vmatpush1.bf16.msra.mxu0 %v496
    %515 = vmatprep.subr.bf16.mxu0 0
    %516 = vmatpush1.bf16.msra.mxu0 %v497
    %517 = vmatprep.subr.bf16.mxu0 0
    %518 = vmatpush1.bf16.msra.mxu0 %v498
    %519 = vmatprep.subr.bf16.mxu0 0
    %520 = vmatpush1.bf16.msra.mxu0 %v499
    %521 = vmatprep.subr.bf16.mxu0 0
    %522 = vmatpush1.bf16.msra.mxu0 %v500
    %523 = vmatprep.subr.bf16.mxu0 0
    %524 = vmatpush1.bf16.msra.mxu0 %v501
    %525 = vmatprep.subr.bf16.mxu0 0
    %526 = vmatpush1.bf16.msra.mxu0 %v502
    %527 = vmatprep.subr.bf16.mxu0 0
    %528 = vmatpush1.bf16.msra.mxu0 0
    %529 = vmatprep.subr.bf16.mxu0 0
    %530 = vmatpush1.bf16.msra.mxu0 0
    %531 = vmatprep.subr.bf16.mxu0 0
    %532 = vmatpush1.bf16.msra.mxu0 0
    %533 = vmatprep.subr.bf16.mxu0 0
    %534 = vmatpush1.bf16.msra.mxu0 0
    %535 = vmatprep.subr.bf16.mxu0 0
    %536 = vmatpush1.bf16.msra.mxu0 0
    %537 = vmatprep.subr.bf16.mxu0 0
    %538 = vmatpush1.bf16.msra.mxu0 0
    %539 = vmatprep.subr.bf16.mxu0 0
    %540 = vmatpush1.bf16.msra.mxu0 0
    %541 = vmatprep.subr.bf16.mxu0 0
    %542 = vmatpush1.bf16.msra.mxu0 0
    %543 = vmatprep.mubr.bf16.mxu0 0
    %544 = vmatmul.mubr.bf16.gmra.mrb[0].mxu0 %v437
    %v545 = vpop.f32.mrb[0].mxu0
    %v546 = vadd.f32 %v461, %v545
    %v547 = vpop.f32.mrb[0].mxu0
    %v548 = vpop.f32.mrb[0].mxu0
    %v549 = vadd.f32 %v461, %v548
    %v550 = vpop.f32.mrb[0].mxu0
    %551 = vdwg.mxu0
    %v552 = vmax.f32 %v546, 0.0
    %v553 = vmax.f32 %v549, 0.0
    %v554 = vpack.c.bf16 %v553, %v552
    %s555 = scalar_lea.vmem [#allocation7], 192
    %v556 = vld [vmem:[%s555] sm:$0xf]
    %v557 = vld [vmem:[%s555 + $0x4] sm:$0xf]
    %v558 = vld [vmem:[%s555 + $0x8] sm:$0xf]
    %v559 = vld [vmem:[%s555 + $0xc] sm:$0xf]
    %v560 = vld [vmem:[%s555 + $0x10] sm:$0xf]
    %v561 = vld [vmem:[%s555 + $0x14] sm:$0xf]
    %v562 = vld [vmem:[%s555 + $0x18] sm:$0xf]
    %v563 = vld [vmem:[%s555 + $0x1c] sm:$0xf]
    %v564 = vld [vmem:[%s555 + $0x20] sm:$0xf]
    %v565 = vld [vmem:[%s555 + $0x24] sm:$0xf]
    %v566 = vld [vmem:[%s555 + $0x28] sm:$0xf]
    %v567 = vld [vmem:[%s555 + $0x2c] sm:$0xf]
    %v568 = vld [vmem:[%s555 + $0x30] sm:$0xf]
    %v569 = vld [vmem:[%s555 + $0x34] sm:$0xf]
    %v570 = vld [vmem:[%s555 + $0x38] sm:$0xf]
    %v571 = vld [vmem:[%s555 + $0x3c] sm:$0xf]
    %s572 = scalar_lea.vmem %s4, 3
    %v573 = vld [vmem:[%s572] sm:$0x1]
    %v575 = vlaneseq
    %v576 = vshrl.u32 %v575, 7
    %v577 = vsub.s32 0, %v576
    %v578 = vrot.slane %v573, %v577
    %v596 = vunpack.c.l.b16 %v556
    %v597 = vunpack.c.l.b16 %v557
    %v598 = vunpack.c.l.b16 %v558
    %v599 = vunpack.c.l.b16 %v559
    %v600 = vunpack.c.l.b16 %v560
    %v601 = vunpack.c.l.b16 %v561
    %v602 = vunpack.c.l.b16 %v562
    %v603 = vunpack.c.l.b16 %v563
    %v604 = vunpack.c.l.b16 %v564
    %v605 = vunpack.c.l.b16 %v565
    %v606 = vunpack.c.l.b16 %v566
    %v607 = vunpack.c.l.b16 %v567
    %v608 = vunpack.c.l.b16 %v568
    %v609 = vunpack.c.l.b16 %v569
    %v610 = vunpack.c.l.b16 %v570
    %v611 = vunpack.c.l.b16 %v571
    %v612 = vpack.c.b16 %v597, %v596
    %v613 = vpack.c.b16 %v599, %v598
    %v614 = vpack.c.b16 %v601, %v600
    %v615 = vpack.c.b16 %v603, %v602
    %v616 = vpack.c.b16 %v605, %v604
    %v617 = vpack.c.b16 %v607, %v606
    %v618 = vpack.c.b16 %v609, %v608
    %v619 = vpack.c.b16 %v611, %v610
    %628 = vmatprep.subr.bf16.mxu0 0
    %629 = vmatpush1.bf16.msra.mxu0 %v612
    %630 = vmatprep.subr.bf16.mxu0 0
    %631 = vmatpush1.bf16.msra.mxu0 %v613
    %632 = vmatprep.subr.bf16.mxu0 0
    %633 = vmatpush1.bf16.msra.mxu0 %v614
    %634 = vmatprep.subr.bf16.mxu0 0
    %635 = vmatpush1.bf16.msra.mxu0 %v615
    %636 = vmatprep.subr.bf16.mxu0 0
    %637 = vmatpush1.bf16.msra.mxu0 %v616
    %638 = vmatprep.subr.bf16.mxu0 0
    %639 = vmatpush1.bf16.msra.mxu0 %v617
    %640 = vmatprep.subr.bf16.mxu0 0
    %641 = vmatpush1.bf16.msra.mxu0 %v618
    %642 = vmatprep.subr.bf16.mxu0 0
    %643 = vmatpush1.bf16.msra.mxu0 %v619
    %644 = vmatprep.subr.bf16.mxu0 0
    %645 = vmatpush1.bf16.msra.mxu0 0
    %646 = vmatprep.subr.bf16.mxu0 0
    %647 = vmatpush1.bf16.msra.mxu0 0
    %648 = vmatprep.subr.bf16.mxu0 0
    %649 = vmatpush1.bf16.msra.mxu0 0
    %650 = vmatprep.subr.bf16.mxu0 0
    %651 = vmatpush1.bf16.msra.mxu0 0
    %652 = vmatprep.subr.bf16.mxu0 0
    %653 = vmatpush1.bf16.msra.mxu0 0
    %654 = vmatprep.subr.bf16.mxu0 0
    %655 = vmatpush1.bf16.msra.mxu0 0
    %656 = vmatprep.subr.bf16.mxu0 0
    %657 = vmatpush1.bf16.msra.mxu0 0
    %658 = vmatprep.subr.bf16.mxu0 0
    %659 = vmatpush1.bf16.msra.mxu0 0
    %660 = vmatprep.mubr.bf16.mxu0 0
    %661 = vmatmul.mubr.bf16.gmra.mrb[0].mxu0 %v554
    %v662 = vpop.f32.mrb[0].mxu0
    %v663 = vadd.f32 %v578, %v662
    %v664 = vpop.f32.mrb[0].mxu0
    %v665 = vpop.f32.mrb[0].mxu0
    %v666 = vadd.f32 %v578, %v665
    %v667 = vpop.f32.mrb[0].mxu0
    %668 = vdwg.mxu0
    %v669 = vmax.f32 %v663, 0.0
    %v670 = vmax.f32 %v666, 0.0
    %v671 = vpack.c.bf16 %v670, %v669
    %s672 = scalar_lea.vmem [#allocation7], 256
    %v673 = vld [vmem:[%s672] sm:$0xf]
    %v674 = vld [vmem:[%s672 + $0x4] sm:$0xf]
    %v675 = vld [vmem:[%s672 + $0x8] sm:$0xf]
    %v676 = vld [vmem:[%s672 + $0xc] sm:$0xf]
    %v677 = vld [vmem:[%s672 + $0x10] sm:$0xf]
    %v678 = vld [vmem:[%s672 + $0x14] sm:$0xf]
    %v679 = vld [vmem:[%s672 + $0x18] sm:$0xf]
    %v680 = vld [vmem:[%s672 + $0x1c] sm:$0xf]
    %v681 = vld [vmem:[%s672 + $0x20] sm:$0xf]
    %v682 = vld [vmem:[%s672 + $0x24] sm:$0xf]
    %v683 = vld [vmem:[%s672 + $0x28] sm:$0xf]
    %v684 = vld [vmem:[%s672 + $0x2c] sm:$0xf]
    %v685 = vld [vmem:[%s672 + $0x30] sm:$0xf]
    %v686 = vld [vmem:[%s672 + $0x34] sm:$0xf]
    %v687 = vld [vmem:[%s672 + $0x38] sm:$0xf]
    %v688 = vld [vmem:[%s672 + $0x3c] sm:$0xf]
    %s689 = scalar_lea.vmem %s4, 4
    %v690 = vld [vmem:[%s689] sm:$0x1]
    %v692 = vlaneseq
    %v693 = vshrl.u32 %v692, 7
    %v694 = vsub.s32 0, %v693
    %v695 = vrot.slane %v690, %v694
    %v713 = vunpack.c.l.b16 %v673
    %v714 = vunpack.c.l.b16 %v674
    %v715 = vunpack.c.l.b16 %v675
    %v716 = vunpack.c.l.b16 %v676
    %v717 = vunpack.c.l.b16 %v677
    %v718 = vunpack.c.l.b16 %v678
    %v719 = vunpack.c.l.b16 %v679
    %v720 = vunpack.c.l.b16 %v680
    %v721 = vunpack.c.l.b16 %v681
    %v722 = vunpack.c.l.b16 %v682
    %v723 = vunpack.c.l.b16 %v683
    %v724 = vunpack.c.l.b16 %v684
    %v725 = vunpack.c.l.b16 %v685
    %v726 = vunpack.c.l.b16 %v686
    %v727 = vunpack.c.l.b16 %v687
    %v728 = vunpack.c.l.b16 %v688
    %v729 = vpack.c.b16 %v714, %v713
    %v730 = vpack.c.b16 %v716, %v715
    %v731 = vpack.c.b16 %v718, %v717
    %v732 = vpack.c.b16 %v720, %v719
    %v733 = vpack.c.b16 %v722, %v721
    %v734 = vpack.c.b16 %v724, %v723
    %v735 = vpack.c.b16 %v726, %v725
    %v736 = vpack.c.b16 %v728, %v727
    %745 = vmatprep.subr.bf16.mxu0 0
    %746 = vmatpush1.bf16.msra.mxu0 %v729
    %747 = vmatprep.subr.bf16.mxu0 0
    %748 = vmatpush1.bf16.msra.mxu0 %v730
    %749 = vmatprep.subr.bf16.mxu0 0
    %750 = vmatpush1.bf16.msra.mxu0 %v731
    %751 = vmatprep.subr.bf16.mxu0 0
    %752 = vmatpush1.bf16.msra.mxu0 %v732
    %753 = vmatprep.subr.bf16.mxu0 0
    %754 = vmatpush1.bf16.msra.mxu0 %v733
    %755 = vmatprep.subr.bf16.mxu0 0
    %756 = vmatpush1.bf16.msra.mxu0 %v734
    %757 = vmatprep.subr.bf16.mxu0 0
    %758 = vmatpush1.bf16.msra.mxu0 %v735
    %759 = vmatprep.subr.bf16.mxu0 0
    %760 = vmatpush1.bf16.msra.mxu0 %v736
    %761 = vmatprep.subr.bf16.mxu0 0
    %762 = vmatpush1.bf16.msra.mxu0 0
    %763 = vmatprep.subr.bf16.mxu0 0
    %764 = vmatpush1.bf16.msra.mxu0 0
    %765 = vmatprep.subr.bf16.mxu0 0
    %766 = vmatpush1.bf16.msra.mxu0 0
    %767 = vmatprep.subr.bf16.mxu0 0
    %768 = vmatpush1.bf16.msra.mxu0 0
    %769 = vmatprep.subr.bf16.mxu0 0
    %770 = vmatpush1.bf16.msra.mxu0 0
    %771 = vmatprep.subr.bf16.mxu0 0
    %772 = vmatpush1.bf16.msra.mxu0 0
    %773 = vmatprep.subr.bf16.mxu0 0
    %774 = vmatpush1.bf16.msra.mxu0 0
    %775 = vmatprep.subr.bf16.mxu0 0
    %776 = vmatpush1.bf16.msra.mxu0 0
    %777 = vmatprep.mubr.bf16.mxu0 0
    %778 = vmatmul.mubr.bf16.gmra.mrb[0].mxu0 %v671
    %v779 = vpop.f32.mrb[0].mxu0
    %v780 = vadd.f32 %v695, %v779
    %v781 = vpop.f32.mrb[0].mxu0
    %v782 = vpop.f32.mrb[0].mxu0
    %v783 = vadd.f32 %v695, %v782
    %v784 = vpop.f32.mrb[0].mxu0
    %785 = vdwg.mxu0
    %v786 = vmax.f32 %v780, 0.0
    %v787 = vmax.f32 %v783, 0.0
    %v788 = vpack.c.bf16 %v787, %v786
    %s789 = scalar_lea.vmem [#allocation7], 320
    %v790 = vld [vmem:[%s789] sm:$0xf]
    %v791 = vld [vmem:[%s789 + $0x4] sm:$0xf]
    %v792 = vld [vmem:[%s789 + $0x8] sm:$0xf]
    %v793 = vld [vmem:[%s789 + $0xc] sm:$0xf]
    %v794 = vld [vmem:[%s789 + $0x10] sm:$0xf]
    %v795 = vld [vmem:[%s789 + $0x14] sm:$0xf]
    %v796 = vld [vmem:[%s789 + $0x18] sm:$0xf]
    %v797 = vld [vmem:[%s789 + $0x1c] sm:$0xf]
    %v798 = vld [vmem:[%s789 + $0x20] sm:$0xf]
    %v799 = vld [vmem:[%s789 + $0x24] sm:$0xf]
    %v800 = vld [vmem:[%s789 + $0x28] sm:$0xf]
    %v801 = vld [vmem:[%s789 + $0x2c] sm:$0xf]
    %v802 = vld [vmem:[%s789 + $0x30] sm:$0xf]
    %v803 = vld [vmem:[%s789 + $0x34] sm:$0xf]
    %v804 = vld [vmem:[%s789 + $0x38] sm:$0xf]
    %v805 = vld [vmem:[%s789 + $0x3c] sm:$0xf]
    %s806 = scalar_lea.vmem %s4, 5
    %v807 = vld [vmem:[%s806] sm:$0x1]
    %v809 = vlaneseq
    %v810 = vshrl.u32 %v809, 7
    %v811 = vsub.s32 0, %v810
    %v812 = vrot.slane %v807, %v811
    %v830 = vunpack.c.l.b16 %v790
    %v831 = vunpack.c.l.b16 %v791
    %v832 = vunpack.c.l.b16 %v792
    %v833 = vunpack.c.l.b16 %v793
    %v834 = vunpack.c.l.b16 %v794
    %v835 = vunpack.c.l.b16 %v795
    %v836 = vunpack.c.l.b16 %v796
    %v837 = vunpack.c.l.b16 %v797
    %v838 = vunpack.c.l.b16 %v798
    %v839 = vunpack.c.l.b16 %v799
    %v840 = vunpack.c.l.b16 %v800
    %v841 = vunpack.c.l.b16 %v801
    %v842 = vunpack.c.l.b16 %v802
    %v843 = vunpack.c.l.b16 %v803
    %v844 = vunpack.c.l.b16 %v804
    %v845 = vunpack.c.l.b16 %v805
    %v846 = vpack.c.b16 %v831, %v830
    %v847 = vpack.c.b16 %v833, %v832
    %v848 = vpack.c.b16 %v835, %v834
    %v849 = vpack.c.b16 %v837, %v836
    %v850 = vpack.c.b16 %v839, %v838
    %v851 = vpack.c.b16 %v841, %v840
    %v852 = vpack.c.b16 %v843, %v842
    %v853 = vpack.c.b16 %v845, %v844
    %862 = vmatprep.subr.bf16.mxu0 0
    %863 = vmatpush1.bf16.msra.mxu0 %v846
    %864 = vmatprep.subr.bf16.mxu0 0
    %865 = vmatpush1.bf16.msra.mxu0 %v847
    %866 = vmatprep.subr.bf16.mxu0 0
    %867 = vmatpush1.bf16.msra.mxu0 %v848
    %868 = vmatprep.subr.bf16.mxu0 0
    %869 = vmatpush1.bf16.msra.mxu0 %v849
    %870 = vmatprep.subr.bf16.mxu0 0
    %871 = vmatpush1.bf16.msra.mxu0 %v850
    %872 = vmatprep.subr.bf16.mxu0 0
    %873 = vmatpush1.bf16.msra.mxu0 %v851
    %874 = vmatprep.subr.bf16.mxu0 0
    %875 = vmatpush1.bf16.msra.mxu0 %v852
    %876 = vmatprep.subr.bf16.mxu0 0
    %877 = vmatpush1.bf16.msra.mxu0 %v853
    %878 = vmatprep.subr.bf16.mxu0 0
    %879 = vmatpush1.bf16.msra.mxu0 0
    %880 = vmatprep.subr.bf16.mxu0 0
    %881 = vmatpush1.bf16.msra.mxu0 0
    %882 = vmatprep.subr.bf16.mxu0 0
    %883 = vmatpush1.bf16.msra.mxu0 0
    %884 = vmatprep.subr.bf16.mxu0 0
    %885 = vmatpush1.bf16.msra.mxu0 0
    %886 = vmatprep.subr.bf16.mxu0 0
    %887 = vmatpush1.bf16.msra.mxu0 0
    %888 = vmatprep.subr.bf16.mxu0 0
    %889 = vmatpush1.bf16.msra.mxu0 0
    %890 = vmatprep.subr.bf16.mxu0 0
    %891 = vmatpush1.bf16.msra.mxu0 0
    %892 = vmatprep.subr.bf16.mxu0 0
    %893 = vmatpush1.bf16.msra.mxu0 0
    %894 = vmatprep.mubr.bf16.mxu0 0
    %895 = vmatmul.mubr.bf16.gmra.mrb[0].mxu0 %v788
    %v896 = vpop.f32.mrb[0].mxu0
    %v897 = vadd.f32 %v812, %v896
    %v898 = vpop.f32.mrb[0].mxu0
    %v899 = vpop.f32.mrb[0].mxu0
    %v900 = vadd.f32 %v812, %v899
    %v901 = vpop.f32.mrb[0].mxu0
    %902 = vdwg.mxu0
    %v903 = vmax.f32 %v897, 0.0
    %v904 = vmax.f32 %v900, 0.0
    %v905 = vpack.c.bf16 %v904, %v903
    %s906 = scalar_lea.vmem [#allocation7], 384
    %v907 = vld [vmem:[%s906] sm:$0xf]
    %v908 = vld [vmem:[%s906 + $0x4] sm:$0xf]
    %v909 = vld [vmem:[%s906 + $0x8] sm:$0xf]
    %v910 = vld [vmem:[%s906 + $0xc] sm:$0xf]
    %v911 = vld [vmem:[%s906 + $0x10] sm:$0xf]
    %v912 = vld [vmem:[%s906 + $0x14] sm:$0xf]
    %v913 = vld [vmem:[%s906 + $0x18] sm:$0xf]
    %v914 = vld [vmem:[%s906 + $0x1c] sm:$0xf]
    %v915 = vld [vmem:[%s906 + $0x20] sm:$0xf]
    %v916 = vld [vmem:[%s906 + $0x24] sm:$0xf]
    %v917 = vld [vmem:[%s906 + $0x28] sm:$0xf]
    %v918 = vld [vmem:[%s906 + $0x2c] sm:$0xf]
    %v919 = vld [vmem:[%s906 + $0x30] sm:$0xf]
    %v920 = vld [vmem:[%s906 + $0x34] sm:$0xf]
    %v921 = vld [vmem:[%s906 + $0x38] sm:$0xf]
    %v922 = vld [vmem:[%s906 + $0x3c] sm:$0xf]
    %s923 = scalar_lea.vmem %s4, 6
    %v924 = vld [vmem:[%s923] sm:$0x1]
    %v926 = vlaneseq
    %v927 = vshrl.u32 %v926, 7
    %v928 = vsub.s32 0, %v927
    %v929 = vrot.slane %v924, %v928
    %v947 = vunpack.c.l.b16 %v907
    %v948 = vunpack.c.l.b16 %v908
    %v949 = vunpack.c.l.b16 %v909
    %v950 = vunpack.c.l.b16 %v910
    %v951 = vunpack.c.l.b16 %v911
    %v952 = vunpack.c.l.b16 %v912
    %v953 = vunpack.c.l.b16 %v913
    %v954 = vunpack.c.l.b16 %v914
    %v955 = vunpack.c.l.b16 %v915
    %v956 = vunpack.c.l.b16 %v916
    %v957 = vunpack.c.l.b16 %v917
    %v958 = vunpack.c.l.b16 %v918
    %v959 = vunpack.c.l.b16 %v919
    %v960 = vunpack.c.l.b16 %v920
    %v961 = vunpack.c.l.b16 %v921
    %v962 = vunpack.c.l.b16 %v922
    %v963 = vpack.c.b16 %v948, %v947
    %v964 = vpack.c.b16 %v950, %v949
    %v965 = vpack.c.b16 %v952, %v951
    %v966 = vpack.c.b16 %v954, %v953
    %v967 = vpack.c.b16 %v956, %v955
    %v968 = vpack.c.b16 %v958, %v957
    %v969 = vpack.c.b16 %v960, %v959
    %v970 = vpack.c.b16 %v962, %v961
    %979 = vmatprep.subr.bf16.mxu0 0
    %980 = vmatpush1.bf16.msra.mxu0 %v963
    %981 = vmatprep.subr.bf16.mxu0 0
    %982 = vmatpush1.bf16.msra.mxu0 %v964
    %983 = vmatprep.subr.bf16.mxu0 0
    %984 = vmatpush1.bf16.msra.mxu0 %v965
    %985 = vmatprep.subr.bf16.mxu0 0
    %986 = vmatpush1.bf16.msra.mxu0 %v966
    %987 = vmatprep.subr.bf16.mxu0 0
    %988 = vmatpush1.bf16.msra.mxu0 %v967
    %989 = vmatprep.subr.bf16.mxu0 0
    %990 = vmatpush1.bf16.msra.mxu0 %v968
    %991 = vmatprep.subr.bf16.mxu0 0
    %992 = vmatpush1.bf16.msra.mxu0 %v969
    %993 = vmatprep.subr.bf16.mxu0 0
    %994 = vmatpush1.bf16.msra.mxu0 %v970
    %995 = vmatprep.subr.bf16.mxu0 0
    %996 = vmatpush1.bf16.msra.mxu0 0
    %997 = vmatprep.subr.bf16.mxu0 0
    %998 = vmatpush1.bf16.msra.mxu0 0
    %999 = vmatprep.subr.bf16.mxu0 0
    %1000 = vmatpush1.bf16.msra.mxu0 0
    %1001 = vmatprep.subr.bf16.mxu0 0
    %1002 = vmatpush1.bf16.msra.mxu0 0
    %1003 = vmatprep.subr.bf16.mxu0 0
    %1004 = vmatpush1.bf16.msra.mxu0 0
    %1005 = vmatprep.subr.bf16.mxu0 0
    %1006 = vmatpush1.bf16.msra.mxu0 0
    %1007 = vmatprep.subr.bf16.mxu0 0
    %1008 = vmatpush1.bf16.msra.mxu0 0
    %1009 = vmatprep.subr.bf16.mxu0 0
    %1010 = vmatpush1.bf16.msra.mxu0 0
    %1011 = vmatprep.mubr.bf16.mxu0 0
    %1012 = vmatmul.mubr.bf16.gmra.mrb[0].mxu0 %v905
    %v1013 = vpop.f32.mrb[0].mxu0
    %v1014 = vadd.f32 %v929, %v1013
    %v1015 = vpop.f32.mrb[0].mxu0
    %v1016 = vpop.f32.mrb[0].mxu0
    %v1017 = vadd.f32 %v929, %v1016
    %v1018 = vpop.f32.mrb[0].mxu0
    %1019 = vdwg.mxu0
    %v1020 = vmax.f32 %v1014, 0.0
    %v1021 = vmax.f32 %v1017, 0.0
    %v1022 = vpack.c.bf16 %v1021, %v1020
    %s1023 = scalar_lea.vmem [#allocation7], 448
    %v1024 = vld [vmem:[%s1023] sm:$0xf]
    %v1025 = vld [vmem:[%s1023 + $0x4] sm:$0xf]
    %v1026 = vld [vmem:[%s1023 + $0x8] sm:$0xf]
    %v1027 = vld [vmem:[%s1023 + $0xc] sm:$0xf]
    %v1028 = vld [vmem:[%s1023 + $0x10] sm:$0xf]
    %v1029 = vld [vmem:[%s1023 + $0x14] sm:$0xf]
    %v1030 = vld [vmem:[%s1023 + $0x18] sm:$0xf]
    %v1031 = vld [vmem:[%s1023 + $0x1c] sm:$0xf]
    %v1032 = vld [vmem:[%s1023 + $0x20] sm:$0xf]
    %v1033 = vld [vmem:[%s1023 + $0x24] sm:$0xf]
    %v1034 = vld [vmem:[%s1023 + $0x28] sm:$0xf]
    %v1035 = vld [vmem:[%s1023 + $0x2c] sm:$0xf]
    %v1036 = vld [vmem:[%s1023 + $0x30] sm:$0xf]
    %v1037 = vld [vmem:[%s1023 + $0x34] sm:$0xf]
    %v1038 = vld [vmem:[%s1023 + $0x38] sm:$0xf]
    %v1039 = vld [vmem:[%s1023 + $0x3c] sm:$0xf]
    %s1040 = scalar_lea.vmem %s4, 7
    %v1041 = vld [vmem:[%s1040] sm:$0x1]
    %v1043 = vlaneseq
    %v1044 = vshrl.u32 %v1043, 7
    %v1045 = vsub.s32 0, %v1044
    %v1046 = vrot.slane %v1041, %v1045
    %v1064 = vunpack.c.l.b16 %v1024
    %v1065 = vunpack.c.l.b16 %v1025
    %v1066 = vunpack.c.l.b16 %v1026
    %v1067 = vunpack.c.l.b16 %v1027
    %v1068 = vunpack.c.l.b16 %v1028
    %v1069 = vunpack.c.l.b16 %v1029
    %v1070 = vunpack.c.l.b16 %v1030
    %v1071 = vunpack.c.l.b16 %v1031
    %v1072 = vunpack.c.l.b16 %v1032
    %v1073 = vunpack.c.l.b16 %v1033
    %v1074 = vunpack.c.l.b16 %v1034
    %v1075 = vunpack.c.l.b16 %v1035
    %v1076 = vunpack.c.l.b16 %v1036
    %v1077 = vunpack.c.l.b16 %v1037
    %v1078 = vunpack.c.l.b16 %v1038
    %v1079 = vunpack.c.l.b16 %v1039
    %v1080 = vpack.c.b16 %v1065, %v1064
    %v1081 = vpack.c.b16 %v1067, %v1066
    %v1082 = vpack.c.b16 %v1069, %v1068
    %v1083 = vpack.c.b16 %v1071, %v1070
    %v1084 = vpack.c.b16 %v1073, %v1072
    %v1085 = vpack.c.b16 %v1075, %v1074
    %v1086 = vpack.c.b16 %v1077, %v1076
    %v1087 = vpack.c.b16 %v1079, %v1078
    %1096 = vmatprep.subr.bf16.mxu0 0
    %1097 = vmatpush1.bf16.msra.mxu0 %v1080
    %1098 = vmatprep.subr.bf16.mxu0 0
    %1099 = vmatpush1.bf16.msra.mxu0 %v1081
    %1100 = vmatprep.subr.bf16.mxu0 0
    %1101 = vmatpush1.bf16.msra.mxu0 %v1082
    %1102 = vmatprep.subr.bf16.mxu0 0
    %1103 = vmatpush1.bf16.msra.mxu0 %v1083
    %1104 = vmatprep.subr.bf16.mxu0 0
    %1105 = vmatpush1.bf16.msra.mxu0 %v1084
    %1106 = vmatprep.subr.bf16.mxu0 0
    %1107 = vmatpush1.bf16.msra.mxu0 %v1085
    %1108 = vmatprep.subr.bf16.mxu0 0
    %1109 = vmatpush1.bf16.msra.mxu0 %v1086
    %1110 = vmatprep.subr.bf16.mxu0 0
    %1111 = vmatpush1.bf16.msra.mxu0 %v1087
    %1112 = vmatprep.subr.bf16.mxu0 0
    %1113 = vmatpush1.bf16.msra.mxu0 0
    %1114 = vmatprep.subr.bf16.mxu0 0
    %1115 = vmatpush1.bf16.msra.mxu0 0
    %1116 = vmatprep.subr.bf16.mxu0 0
    %1117 = vmatpush1.bf16.msra.mxu0 0
    %1118 = vmatprep.subr.bf16.mxu0 0
    %1119 = vmatpush1.bf16.msra.mxu0 0
    %1120 = vmatprep.subr.bf16.mxu0 0
    %1121 = vmatpush1.bf16.msra.mxu0 0
    %1122 = vmatprep.subr.bf16.mxu0 0
    %1123 = vmatpush1.bf16.msra.mxu0 0
    %1124 = vmatprep.subr.bf16.mxu0 0
    %1125 = vmatpush1.bf16.msra.mxu0 0
    %1126 = vmatprep.subr.bf16.mxu0 0
    %1127 = vmatpush1.bf16.msra.mxu0 0
    %1128 = vmatprep.mubr.bf16.mxu0 0
    %1129 = vmatmul.mubr.bf16.gmra.mrb[0].mxu0 %v1022
    %v1130 = vpop.f32.mrb[0].mxu0
    %v1131 = vadd.f32 %v1046, %v1130
    %v1132 = vpop.f32.mrb[0].mxu0
    %v1133 = vpop.f32.mrb[0].mxu0
    %v1134 = vadd.f32 %v1046, %v1133
    %v1135 = vpop.f32.mrb[0].mxu0
    %1136 = vdwg.mxu0
    %v1137 = vmax.f32 %v1131, 0.0
    %v1138 = vmax.f32 %v1134, 0.0
    %v1139 = vpack.c.bf16 %v1138, %v1137
    %s1140 = scalar_lea.vmem [#allocation7], 512
    %v1141 = vld [vmem:[%s1140] sm:$0xf]
    %v1142 = vld [vmem:[%s1140 + $0x4] sm:$0xf]
    %v1143 = vld [vmem:[%s1140 + $0x8] sm:$0xf]
    %v1144 = vld [vmem:[%s1140 + $0xc] sm:$0xf]
    %v1145 = vld [vmem:[%s1140 + $0x10] sm:$0xf]
    %v1146 = vld [vmem:[%s1140 + $0x14] sm:$0xf]
    %v1147 = vld [vmem:[%s1140 + $0x18] sm:$0xf]
    %v1148 = vld [vmem:[%s1140 + $0x1c] sm:$0xf]
    %v1149 = vld [vmem:[%s1140 + $0x20] sm:$0xf]
    %v1150 = vld [vmem:[%s1140 + $0x24] sm:$0xf]
    %v1151 = vld [vmem:[%s1140 + $0x28] sm:$0xf]
    %v1152 = vld [vmem:[%s1140 + $0x2c] sm:$0xf]
    %v1153 = vld [vmem:[%s1140 + $0x30] sm:$0xf]
    %v1154 = vld [vmem:[%s1140 + $0x34] sm:$0xf]
    %v1155 = vld [vmem:[%s1140 + $0x38] sm:$0xf]
    %v1156 = vld [vmem:[%s1140 + $0x3c] sm:$0xf]
    %s1157 = scalar_lea.vmem %s4, 8
    %v1158 = vld [vmem:[%s1157] sm:$0x1]
    %v1160 = vlaneseq
    %v1161 = vshrl.u32 %v1160, 7
    %v1162 = vsub.s32 0, %v1161
    %v1163 = vrot.slane %v1158, %v1162
    %v1181 = vunpack.c.l.b16 %v1141
    %v1182 = vunpack.c.l.b16 %v1142
    %v1183 = vunpack.c.l.b16 %v1143
    %v1184 = vunpack.c.l.b16 %v1144
    %v1185 = vunpack.c.l.b16 %v1145
    %v1186 = vunpack.c.l.b16 %v1146
    %v1187 = vunpack.c.l.b16 %v1147
    %v1188 = vunpack.c.l.b16 %v1148
    %v1189 = vunpack.c.l.b16 %v1149
    %v1190 = vunpack.c.l.b16 %v1150
    %v1191 = vunpack.c.l.b16 %v1151
    %v1192 = vunpack.c.l.b16 %v1152
    %v1193 = vunpack.c.l.b16 %v1153
    %v1194 = vunpack.c.l.b16 %v1154
    %v1195 = vunpack.c.l.b16 %v1155
    %v1196 = vunpack.c.l.b16 %v1156
    %v1197 = vpack.c.b16 %v1182, %v1181
    %v1198 = vpack.c.b16 %v1184, %v1183
    %v1199 = vpack.c.b16 %v1186, %v1185
    %v1200 = vpack.c.b16 %v1188, %v1187
    %v1201 = vpack.c.b16 %v1190, %v1189
    %v1202 = vpack.c.b16 %v1192, %v1191
    %v1203 = vpack.c.b16 %v1194, %v1193
    %v1204 = vpack.c.b16 %v1196, %v1195
    %1213 = vmatprep.subr.bf16.mxu0 0
    %1214 = vmatpush1.bf16.msra.mxu0 %v1197
    %1215 = vmatprep.subr.bf16.mxu0 0
    %1216 = vmatpush1.bf16.msra.mxu0 %v1198
    %1217 = vmatprep.subr.bf16.mxu0 0
    %1218 = vmatpush1.bf16.msra.mxu0 %v1199
    %1219 = vmatprep.subr.bf16.mxu0 0
    %1220 = vmatpush1.bf16.msra.mxu0 %v1200
    %1221 = vmatprep.subr.bf16.mxu0 0
    %1222 = vmatpush1.bf16.msra.mxu0 %v1201
    %1223 = vmatprep.subr.bf16.mxu0 0
    %1224 = vmatpush1.bf16.msra.mxu0 %v1202
    %1225 = vmatprep.subr.bf16.mxu0 0
    %1226 = vmatpush1.bf16.msra.mxu0 %v1203
    %1227 = vmatprep.subr.bf16.mxu0 0
    %1228 = vmatpush1.bf16.msra.mxu0 %v1204
    %1229 = vmatprep.subr.bf16.mxu0 0
    %1230 = vmatpush1.bf16.msra.mxu0 0
    %1231 = vmatprep.subr.bf16.mxu0 0
    %1232 = vmatpush1.bf16.msra.mxu0 0
    %1233 = vmatprep.subr.bf16.mxu0 0
    %1234 = vmatpush1.bf16.msra.mxu0 0
    %1235 = vmatprep.subr.bf16.mxu0 0
    %1236 = vmatpush1.bf16.msra.mxu0 0
    %1237 = vmatprep.subr.bf16.mxu0 0
    %1238 = vmatpush1.bf16.msra.mxu0 0
    %1239 = vmatprep.subr.bf16.mxu0 0
    %1240 = vmatpush1.bf16.msra.mxu0 0
    %1241 = vmatprep.subr.bf16.mxu0 0
    %1242 = vmatpush1.bf16.msra.mxu0 0
    %1243 = vmatprep.subr.bf16.mxu0 0
    %1244 = vmatpush1.bf16.msra.mxu0 0
    %1245 = vmatprep.mubr.bf16.mxu0 0
    %1246 = vmatmul.mubr.bf16.gmra.mrb[0].mxu0 %v1139
    %v1247 = vpop.f32.mrb[0].mxu0
    %v1248 = vadd.f32 %v1163, %v1247
    %v1249 = vpop.f32.mrb[0].mxu0
    %v1250 = vpop.f32.mrb[0].mxu0
    %v1251 = vadd.f32 %v1163, %v1250
    %v1252 = vpop.f32.mrb[0].mxu0
    %1253 = vdwg.mxu0
    %v1254 = vmax.f32 %v1248, 0.0
    %v1255 = vmax.f32 %v1251, 0.0
    %v1256 = vpack.c.bf16 %v1255, %v1254
    %s1257 = scalar_lea.vmem [#allocation7], 576
    %v1258 = vld [vmem:[%s1257] sm:$0xf]
    %v1259 = vld [vmem:[%s1257 + $0x4] sm:$0xf]
    %v1260 = vld [vmem:[%s1257 + $0x8] sm:$0xf]
    %v1261 = vld [vmem:[%s1257 + $0xc] sm:$0xf]
    %v1262 = vld [vmem:[%s1257 + $0x10] sm:$0xf]
    %v1263 = vld [vmem:[%s1257 + $0x14] sm:$0xf]
    %v1264 = vld [vmem:[%s1257 + $0x18] sm:$0xf]
    %v1265 = vld [vmem:[%s1257 + $0x1c] sm:$0xf]
    %v1266 = vld [vmem:[%s1257 + $0x20] sm:$0xf]
    %v1267 = vld [vmem:[%s1257 + $0x24] sm:$0xf]
    %v1268 = vld [vmem:[%s1257 + $0x28] sm:$0xf]
    %v1269 = vld [vmem:[%s1257 + $0x2c] sm:$0xf]
    %v1270 = vld [vmem:[%s1257 + $0x30] sm:$0xf]
    %v1271 = vld [vmem:[%s1257 + $0x34] sm:$0xf]
    %v1272 = vld [vmem:[%s1257 + $0x38] sm:$0xf]
    %v1273 = vld [vmem:[%s1257 + $0x3c] sm:$0xf]
    %s1274 = scalar_lea.vmem %s4, 9
    %v1275 = vld [vmem:[%s1274] sm:$0x1]
    %v1277 = vlaneseq
    %v1278 = vshrl.u32 %v1277, 7
    %v1279 = vsub.s32 0, %v1278
    %v1280 = vrot.slane %v1275, %v1279
    %v1298 = vunpack.c.l.b16 %v1258
    %v1299 = vunpack.c.l.b16 %v1259
    %v1300 = vunpack.c.l.b16 %v1260
    %v1301 = vunpack.c.l.b16 %v1261
    %v1302 = vunpack.c.l.b16 %v1262
    %v1303 = vunpack.c.l.b16 %v1263
    %v1304 = vunpack.c.l.b16 %v1264
    %v1305 = vunpack.c.l.b16 %v1265
    %v1306 = vunpack.c.l.b16 %v1266
    %v1307 = vunpack.c.l.b16 %v1267
    %v1308 = vunpack.c.l.b16 %v1268
    %v1309 = vunpack.c.l.b16 %v1269
    %v1310 = vunpack.c.l.b16 %v1270
    %v1311 = vunpack.c.l.b16 %v1271
    %v1312 = vunpack.c.l.b16 %v1272
    %v1313 = vunpack.c.l.b16 %v1273
    %v1314 = vpack.c.b16 %v1299, %v1298
    %v1315 = vpack.c.b16 %v1301, %v1300
    %v1316 = vpack.c.b16 %v1303, %v1302
    %v1317 = vpack.c.b16 %v1305, %v1304
    %v1318 = vpack.c.b16 %v1307, %v1306
    %v1319 = vpack.c.b16 %v1309, %v1308
    %v1320 = vpack.c.b16 %v1311, %v1310
    %v1321 = vpack.c.b16 %v1313, %v1312
    %1330 = vmatprep.subr.bf16.mxu0 0
    %1331 = vmatpush1.bf16.msra.mxu0 %v1314
    %1332 = vmatprep.subr.bf16.mxu0 0
    %1333 = vmatpush1.bf16.msra.mxu0 %v1315
    %1334 = vmatprep.subr.bf16.mxu0 0
    %1335 = vmatpush1.bf16.msra.mxu0 %v1316
    %1336 = vmatprep.subr.bf16.mxu0 0
    %1337 = vmatpush1.bf16.msra.mxu0 %v1317
    %1338 = vmatprep.subr.bf16.mxu0 0
    %1339 = vmatpush1.bf16.msra.mxu0 %v1318
    %1340 = vmatprep.subr.bf16.mxu0 0
    %1341 = vmatpush1.bf16.msra.mxu0 %v1319
    %1342 = vmatprep.subr.bf16.mxu0 0
    %1343 = vmatpush1.bf16.msra.mxu0 %v1320
    %1344 = vmatprep.subr.bf16.mxu0 0
    %1345 = vmatpush1.bf16.msra.mxu0 %v1321
    %1346 = vmatprep.subr.bf16.mxu0 0
    %1347 = vmatpush1.bf16.msra.mxu0 0
    %1348 = vmatprep.subr.bf16.mxu0 0
    %1349 = vmatpush1.bf16.msra.mxu0 0
    %1350 = vmatprep.subr.bf16.mxu0 0
    %1351 = vmatpush1.bf16.msra.mxu0 0
    %1352 = vmatprep.subr.bf16.mxu0 0
    %1353 = vmatpush1.bf16.msra.mxu0 0
    %1354 = vmatprep.subr.bf16.mxu0 0
    %1355 = vmatpush1.bf16.msra.mxu0 0
    %1356 = vmatprep.subr.bf16.mxu0 0
    %1357 = vmatpush1.bf16.msra.mxu0 0
    %1358 = vmatprep.subr.bf16.mxu0 0
    %1359 = vmatpush1.bf16.msra.mxu0 0
    %1360 = vmatprep.subr.bf16.mxu0 0
    %1361 = vmatpush1.bf16.msra.mxu0 0
    %1362 = vmatprep.mubr.bf16.mxu0 0
    %1363 = vmatmul.mubr.bf16.gmra.mrb[0].mxu0 %v1256
    %v1364 = vpop.f32.mrb[0].mxu0
    %v1365 = vadd.f32 %v1280, %v1364
    %v1366 = vpop.f32.mrb[0].mxu0
    %v1367 = vpop.f32.mrb[0].mxu0
    %v1368 = vadd.f32 %v1280, %v1367
    %v1369 = vpop.f32.mrb[0].mxu0
    %1370 = vdwg.mxu0
    %v1371 = vmax.f32 %v1365, 0.0
    %v1372 = vmax.f32 %v1368, 0.0
    %v1373 = vpack.c.bf16 %v1372, %v1371
    %s1374 = scalar_lea.vmem [#allocation7], 640
    %v1375 = vld [vmem:[%s1374] sm:$0xf]
    %v1376 = vld [vmem:[%s1374 + $0x4] sm:$0xf]
    %v1377 = vld [vmem:[%s1374 + $0x8] sm:$0xf]
    %v1378 = vld [vmem:[%s1374 + $0xc] sm:$0xf]
    %v1379 = vld [vmem:[%s1374 + $0x10] sm:$0xf]
    %v1380 = vld [vmem:[%s1374 + $0x14] sm:$0xf]
    %v1381 = vld [vmem:[%s1374 + $0x18] sm:$0xf]
    %v1382 = vld [vmem:[%s1374 + $0x1c] sm:$0xf]
    %v1383 = vld [vmem:[%s1374 + $0x20] sm:$0xf]
    %v1384 = vld [vmem:[%s1374 + $0x24] sm:$0xf]
    %v1385 = vld [vmem:[%s1374 + $0x28] sm:$0xf]
    %v1386 = vld [vmem:[%s1374 + $0x2c] sm:$0xf]
    %v1387 = vld [vmem:[%s1374 + $0x30] sm:$0xf]
    %v1388 = vld [vmem:[%s1374 + $0x34] sm:$0xf]
    %v1389 = vld [vmem:[%s1374 + $0x38] sm:$0xf]
    %v1390 = vld [vmem:[%s1374 + $0x3c] sm:$0xf]
    %s1391 = scalar_lea.vmem %s4, 10
    %v1392 = vld [vmem:[%s1391] sm:$0x1]
    %v1394 = vlaneseq
    %v1395 = vshrl.u32 %v1394, 7
    %v1396 = vsub.s32 0, %v1395
    %v1397 = vrot.slane %v1392, %v1396
    %v1415 = vunpack.c.l.b16 %v1375
    %v1416 = vunpack.c.l.b16 %v1376
    %v1417 = vunpack.c.l.b16 %v1377
    %v1418 = vunpack.c.l.b16 %v1378
    %v1419 = vunpack.c.l.b16 %v1379
    %v1420 = vunpack.c.l.b16 %v1380
    %v1421 = vunpack.c.l.b16 %v1381
    %v1422 = vunpack.c.l.b16 %v1382
    %v1423 = vunpack.c.l.b16 %v1383
    %v1424 = vunpack.c.l.b16 %v1384
    %v1425 = vunpack.c.l.b16 %v1385
    %v1426 = vunpack.c.l.b16 %v1386
    %v1427 = vunpack.c.l.b16 %v1387
    %v1428 = vunpack.c.l.b16 %v1388
    %v1429 = vunpack.c.l.b16 %v1389
    %v1430 = vunpack.c.l.b16 %v1390
    %v1431 = vpack.c.b16 %v1416, %v1415
    %v1432 = vpack.c.b16 %v1418, %v1417
    %v1433 = vpack.c.b16 %v1420, %v1419
    %v1434 = vpack.c.b16 %v1422, %v1421
    %v1435 = vpack.c.b16 %v1424, %v1423
    %v1436 = vpack.c.b16 %v1426, %v1425
    %v1437 = vpack.c.b16 %v1428, %v1427
    %v1438 = vpack.c.b16 %v1430, %v1429
    %1447 = vmatprep.subr.bf16.mxu0 0
    %1448 = vmatpush1.bf16.msra.mxu0 %v1431
    %1449 = vmatprep.subr.bf16.mxu0 0
    %1450 = vmatpush1.bf16.msra.mxu0 %v1432
    %1451 = vmatprep.subr.bf16.mxu0 0
    %1452 = vmatpush1.bf16.msra.mxu0 %v1433
    %1453 = vmatprep.subr.bf16.mxu0 0
    %1454 = vmatpush1.bf16.msra.mxu0 %v1434
    %1455 = vmatprep.subr.bf16.mxu0 0
    %1456 = vmatpush1.bf16.msra.mxu0 %v1435
    %1457 = vmatprep.subr.bf16.mxu0 0
    %1458 = vmatpush1.bf16.msra.mxu0 %v1436
    %1459 = vmatprep.subr.bf16.mxu0 0
    %1460 = vmatpush1.bf16.msra.mxu0 %v1437
    %1461 = vmatprep.subr.bf16.mxu0 0
    %1462 = vmatpush1.bf16.msra.mxu0 %v1438
    %1463 = vmatprep.subr.bf16.mxu0 0
    %1464 = vmatpush1.bf16.msra.mxu0 0
    %1465 = vmatprep.subr.bf16.mxu0 0
    %1466 = vmatpush1.bf16.msra.mxu0 0
    %1467 = vmatprep.subr.bf16.mxu0 0
    %1468 = vmatpush1.bf16.msra.mxu0 0
    %1469 = vmatprep.subr.bf16.mxu0 0
    %1470 = vmatpush1.bf16.msra.mxu0 0
    %1471 = vmatprep.subr.bf16.mxu0 0
    %1472 = vmatpush1.bf16.msra.mxu0 0
    %1473 = vmatprep.subr.bf16.mxu0 0
    %1474 = vmatpush1.bf16.msra.mxu0 0
    %1475 = vmatprep.subr.bf16.mxu0 0
    %1476 = vmatpush1.bf16.msra.mxu0 0
    %1477 = vmatprep.subr.bf16.mxu0 0
    %1478 = vmatpush1.bf16.msra.mxu0 0
    %1479 = vmatprep.mubr.bf16.mxu0 0
    %1480 = vmatmul.mubr.bf16.gmra.mrb[0].mxu0 %v1373
    %v1481 = vpop.f32.mrb[0].mxu0
    %v1482 = vadd.f32 %v1397, %v1481
    %v1483 = vpop.f32.mrb[0].mxu0
    %v1484 = vpop.f32.mrb[0].mxu0
    %v1485 = vadd.f32 %v1397, %v1484
    %v1486 = vpop.f32.mrb[0].mxu0
    %1487 = vdwg.mxu0
    %v1488 = vmax.f32 %v1482, 0.0
    %v1489 = vmax.f32 %v1485, 0.0
    %v1490 = vpack.c.bf16 %v1489, %v1488
    %s1491 = scalar_lea.vmem [#allocation7], 704
    %v1492 = vld [vmem:[%s1491] sm:$0xf]
    %v1493 = vld [vmem:[%s1491 + $0x4] sm:$0xf]
    %v1494 = vld [vmem:[%s1491 + $0x8] sm:$0xf]
    %v1495 = vld [vmem:[%s1491 + $0xc] sm:$0xf]
    %v1496 = vld [vmem:[%s1491 + $0x10] sm:$0xf]
    %v1497 = vld [vmem:[%s1491 + $0x14] sm:$0xf]
    %v1498 = vld [vmem:[%s1491 + $0x18] sm:$0xf]
    %v1499 = vld [vmem:[%s1491 + $0x1c] sm:$0xf]
    %v1500 = vld [vmem:[%s1491 + $0x20] sm:$0xf]
    %v1501 = vld [vmem:[%s1491 + $0x24] sm:$0xf]
    %v1502 = vld [vmem:[%s1491 + $0x28] sm:$0xf]
    %v1503 = vld [vmem:[%s1491 + $0x2c] sm:$0xf]
    %v1504 = vld [vmem:[%s1491 + $0x30] sm:$0xf]
    %v1505 = vld [vmem:[%s1491 + $0x34] sm:$0xf]
    %v1506 = vld [vmem:[%s1491 + $0x38] sm:$0xf]
    %v1507 = vld [vmem:[%s1491 + $0x3c] sm:$0xf]
    %s1508 = scalar_lea.vmem %s4, 11
    %v1509 = vld [vmem:[%s1508] sm:$0x1]
    %v1511 = vlaneseq
    %v1512 = vshrl.u32 %v1511, 7
    %v1513 = vsub.s32 0, %v1512
    %v1514 = vrot.slane %v1509, %v1513
    %v1532 = vunpack.c.l.b16 %v1492
    %v1533 = vunpack.c.l.b16 %v1493
    %v1534 = vunpack.c.l.b16 %v1494
    %v1535 = vunpack.c.l.b16 %v1495
    %v1536 = vunpack.c.l.b16 %v1496
    %v1537 = vunpack.c.l.b16 %v1497
    %v1538 = vunpack.c.l.b16 %v1498
    %v1539 = vunpack.c.l.b16 %v1499
    %v1540 = vunpack.c.l.b16 %v1500
    %v1541 = vunpack.c.l.b16 %v1501
    %v1542 = vunpack.c.l.b16 %v1502
    %v1543 = vunpack.c.l.b16 %v1503
    %v1544 = vunpack.c.l.b16 %v1504
    %v1545 = vunpack.c.l.b16 %v1505
    %v1546 = vunpack.c.l.b16 %v1506
    %v1547 = vunpack.c.l.b16 %v1507
    %v1548 = vpack.c.b16 %v1533, %v1532
    %v1549 = vpack.c.b16 %v1535, %v1534
    %v1550 = vpack.c.b16 %v1537, %v1536
    %v1551 = vpack.c.b16 %v1539, %v1538
    %v1552 = vpack.c.b16 %v1541, %v1540
    %v1553 = vpack.c.b16 %v1543, %v1542
    %v1554 = vpack.c.b16 %v1545, %v1544
    %v1555 = vpack.c.b16 %v1547, %v1546
    %1564 = vmatprep.subr.bf16.mxu0 0
    %1565 = vmatpush1.bf16.msra.mxu0 %v1548
    %1566 = vmatprep.subr.bf16.mxu0 0
    %1567 = vmatpush1.bf16.msra.mxu0 %v1549
    %1568 = vmatprep.subr.bf16.mxu0 0
    %1569 = vmatpush1.bf16.msra.mxu0 %v1550
    %1570 = vmatprep.subr.bf16.mxu0 0
    %1571 = vmatpush1.bf16.msra.mxu0 %v1551
    %1572 = vmatprep.subr.bf16.mxu0 0
    %1573 = vmatpush1.bf16.msra.mxu0 %v1552
    %1574 = vmatprep.subr.bf16.mxu0 0
    %1575 = vmatpush1.bf16.msra.mxu0 %v1553
    %1576 = vmatprep.subr.bf16.mxu0 0
    %1577 = vmatpush1.bf16.msra.mxu0 %v1554
    %1578 = vmatprep.subr.bf16.mxu0 0
    %1579 = vmatpush1.bf16.msra.mxu0 %v1555
    %1580 = vmatprep.subr.bf16.mxu0 0
    %1581 = vmatpush1.bf16.msra.mxu0 0
    %1582 = vmatprep.subr.bf16.mxu0 0
    %1583 = vmatpush1.bf16.msra.mxu0 0
    %1584 = vmatprep.subr.bf16.mxu0 0
    %1585 = vmatpush1.bf16.msra.mxu0 0
    %1586 = vmatprep.subr.bf16.mxu0 0
    %1587 = vmatpush1.bf16.msra.mxu0 0
    %1588 = vmatprep.subr.bf16.mxu0 0
    %1589 = vmatpush1.bf16.msra.mxu0 0
    %1590 = vmatprep.subr.bf16.mxu0 0
    %1591 = vmatpush1.bf16.msra.mxu0 0
    %1592 = vmatprep.subr.bf16.mxu0 0
    %1593 = vmatpush1.bf16.msra.mxu0 0
    %1594 = vmatprep.subr.bf16.mxu0 0
    %1595 = vmatpush1.bf16.msra.mxu0 0
    %1596 = vmatprep.mubr.bf16.mxu0 0
    %1597 = vmatmul.mubr.bf16.gmra.mrb[0].mxu0 %v1490
    %v1598 = vpop.f32.mrb[0].mxu0
    %v1599 = vadd.f32 %v1514, %v1598
    %v1600 = vpop.f32.mrb[0].mxu0
    %v1601 = vpop.f32.mrb[0].mxu0
    %v1602 = vadd.f32 %v1514, %v1601
    %v1603 = vpop.f32.mrb[0].mxu0
    %1604 = vdwg.mxu0
    %v1605 = vmax.f32 %v1599, 0.0
    %v1606 = vmax.f32 %v1602, 0.0
    %v1607 = vpack.c.bf16 %v1606, %v1605
    %s1608 = scalar_lea.vmem [#allocation7], 768
    %v1609 = vld [vmem:[%s1608] sm:$0xf]
    %v1610 = vld [vmem:[%s1608 + $0x4] sm:$0xf]
    %v1611 = vld [vmem:[%s1608 + $0x8] sm:$0xf]
    %v1612 = vld [vmem:[%s1608 + $0xc] sm:$0xf]
    %v1613 = vld [vmem:[%s1608 + $0x10] sm:$0xf]
    %v1614 = vld [vmem:[%s1608 + $0x14] sm:$0xf]
    %v1615 = vld [vmem:[%s1608 + $0x18] sm:$0xf]
    %v1616 = vld [vmem:[%s1608 + $0x1c] sm:$0xf]
    %v1617 = vld [vmem:[%s1608 + $0x20] sm:$0xf]
    %v1618 = vld [vmem:[%s1608 + $0x24] sm:$0xf]
    %v1619 = vld [vmem:[%s1608 + $0x28] sm:$0xf]
    %v1620 = vld [vmem:[%s1608 + $0x2c] sm:$0xf]
    %v1621 = vld [vmem:[%s1608 + $0x30] sm:$0xf]
    %v1622 = vld [vmem:[%s1608 + $0x34] sm:$0xf]
    %v1623 = vld [vmem:[%s1608 + $0x38] sm:$0xf]
    %v1624 = vld [vmem:[%s1608 + $0x3c] sm:$0xf]
    %s1625 = scalar_lea.vmem %s4, 12
    %v1626 = vld [vmem:[%s1625] sm:$0x1]
    %v1628 = vlaneseq
    %v1629 = vshrl.u32 %v1628, 7
    %v1630 = vsub.s32 0, %v1629
    %v1631 = vrot.slane %v1626, %v1630
    %v1649 = vunpack.c.l.b16 %v1609
    %v1650 = vunpack.c.l.b16 %v1610
    %v1651 = vunpack.c.l.b16 %v1611
    %v1652 = vunpack.c.l.b16 %v1612
    %v1653 = vunpack.c.l.b16 %v1613
    %v1654 = vunpack.c.l.b16 %v1614
    %v1655 = vunpack.c.l.b16 %v1615
    %v1656 = vunpack.c.l.b16 %v1616
    %v1657 = vunpack.c.l.b16 %v1617
    %v1658 = vunpack.c.l.b16 %v1618
    %v1659 = vunpack.c.l.b16 %v1619
    %v1660 = vunpack.c.l.b16 %v1620
    %v1661 = vunpack.c.l.b16 %v1621
    %v1662 = vunpack.c.l.b16 %v1622
    %v1663 = vunpack.c.l.b16 %v1623
    %v1664 = vunpack.c.l.b16 %v1624
    %v1665 = vpack.c.b16 %v1650, %v1649
    %v1666 = vpack.c.b16 %v1652, %v1651
    %v1667 = vpack.c.b16 %v1654, %v1653
    %v1668 = vpack.c.b16 %v1656, %v1655
    %v1669 = vpack.c.b16 %v1658, %v1657
    %v1670 = vpack.c.b16 %v1660, %v1659
    %v1671 = vpack.c.b16 %v1662, %v1661
    %v1672 = vpack.c.b16 %v1664, %v1663
    %1681 = vmatprep.subr.bf16.mxu0 0
    %1682 = vmatpush1.bf16.msra.mxu0 %v1665
    %1683 = vmatprep.subr.bf16.mxu0 0
    %1684 = vmatpush1.bf16.msra.mxu0 %v1666
    %1685 = vmatprep.subr.bf16.mxu0 0
    %1686 = vmatpush1.bf16.msra.mxu0 %v1667
    %1687 = vmatprep.subr.bf16.mxu0 0
    %1688 = vmatpush1.bf16.msra.mxu0 %v1668
    %1689 = vmatprep.subr.bf16.mxu0 0
    %1690 = vmatpush1.bf16.msra.mxu0 %v1669
    %1691 = vmatprep.subr.bf16.mxu0 0
    %1692 = vmatpush1.bf16.msra.mxu0 %v1670
    %1693 = vmatprep.subr.bf16.mxu0 0
    %1694 = vmatpush1.bf16.msra.mxu0 %v1671
    %1695 = vmatprep.subr.bf16.mxu0 0
    %1696 = vmatpush1.bf16.msra.mxu0 %v1672
    %1697 = vmatprep.subr.bf16.mxu0 0
    %1698 = vmatpush1.bf16.msra.mxu0 0
    %1699 = vmatprep.subr.bf16.mxu0 0
    %1700 = vmatpush1.bf16.msra.mxu0 0
    %1701 = vmatprep.subr.bf16.mxu0 0
    %1702 = vmatpush1.bf16.msra.mxu0 0
    %1703 = vmatprep.subr.bf16.mxu0 0
    %1704 = vmatpush1.bf16.msra.mxu0 0
    %1705 = vmatprep.subr.bf16.mxu0 0
    %1706 = vmatpush1.bf16.msra.mxu0 0
    %1707 = vmatprep.subr.bf16.mxu0 0
    %1708 = vmatpush1.bf16.msra.mxu0 0
    %1709 = vmatprep.subr.bf16.mxu0 0
    %1710 = vmatpush1.bf16.msra.mxu0 0
    %1711 = vmatprep.subr.bf16.mxu0 0
    %1712 = vmatpush1.bf16.msra.mxu0 0
    %1713 = vmatprep.mubr.bf16.mxu0 0
    %1714 = vmatmul.mubr.bf16.gmra.mrb[0].mxu0 %v1607
    %v1715 = vpop.f32.mrb[0].mxu0
    %v1716 = vadd.f32 %v1631, %v1715
    %v1717 = vpop.f32.mrb[0].mxu0
    %v1718 = vpop.f32.mrb[0].mxu0
    %v1719 = vadd.f32 %v1631, %v1718
    %v1720 = vpop.f32.mrb[0].mxu0
    %1721 = vdwg.mxu0
    %v1722 = vmax.f32 %v1716, 0.0
    %v1723 = vmax.f32 %v1719, 0.0
    %v1724 = vpack.c.bf16 %v1723, %v1722
    %v1725 = vld [vmem:[#allocation8] sm:$0xf]
    %v1726 = vld [vmem:[#allocation8 + $0x4] sm:$0xf]
    %v1727 = vld [vmem:[#allocation8 + $0x8] sm:$0xf]
    %v1728 = vld [vmem:[#allocation8 + $0xc] sm:$0xf]
    %v1729 = vld [vmem:[#allocation8 + $0x10] sm:$0xf]
    %v1730 = vld [vmem:[#allocation8 + $0x14] sm:$0xf]
    %v1731 = vld [vmem:[#allocation8 + $0x18] sm:$0xf]
    %v1732 = vld [vmem:[#allocation8 + $0x1c] sm:$0xf]
    %v1733 = vld [vmem:[#allocation8 + $0x20] sm:$0xf]
    %v1734 = vld [vmem:[#allocation8 + $0x24] sm:$0xf]
    %v1735 = vld [vmem:[#allocation8 + $0x28] sm:$0xf]
    %v1736 = vld [vmem:[#allocation8 + $0x2c] sm:$0xf]
    %v1737 = vld [vmem:[#allocation8 + $0x30] sm:$0xf]
    %v1738 = vld [vmem:[#allocation8 + $0x34] sm:$0xf]
    %v1739 = vld [vmem:[#allocation8 + $0x38] sm:$0xf]
    %v1740 = vld [vmem:[#allocation8 + $0x3c] sm:$0xf]
    %v1741 = vld [vmem:[%s6] sm:$0x1]
    %v1743 = vlaneseq
    %v1744 = vshrl.u32 %v1743, 7
    %v1745 = vsub.s32 0, %v1744
    %v1746 = vrot.slane %v1741, %v1745
    %v1764 = vunpack.c.l.b16 %v1725
    %v1765 = vunpack.c.l.b16 %v1726
    %v1766 = vunpack.c.l.b16 %v1727
    %v1767 = vunpack.c.l.b16 %v1728
    %v1768 = vunpack.c.l.b16 %v1729
    %v1769 = vunpack.c.l.b16 %v1730
    %v1770 = vunpack.c.l.b16 %v1731
    %v1771 = vunpack.c.l.b16 %v1732
    %v1772 = vunpack.c.l.b16 %v1733
    %v1773 = vunpack.c.l.b16 %v1734
    %v1774 = vunpack.c.l.b16 %v1735
    %v1775 = vunpack.c.l.b16 %v1736
    %v1776 = vunpack.c.l.b16 %v1737
    %v1777 = vunpack.c.l.b16 %v1738
    %v1778 = vunpack.c.l.b16 %v1739
    %v1779 = vunpack.c.l.b16 %v1740
    %v1780 = vpack.c.b16 %v1765, %v1764
    %v1781 = vpack.c.b16 %v1767, %v1766
    %v1782 = vpack.c.b16 %v1769, %v1768
    %v1783 = vpack.c.b16 %v1771, %v1770
    %v1784 = vpack.c.b16 %v1773, %v1772
    %v1785 = vpack.c.b16 %v1775, %v1774
    %v1786 = vpack.c.b16 %v1777, %v1776
    %v1787 = vpack.c.b16 %v1779, %v1778
    %1796 = vmatprep.subr.bf16.mxu0 0
    %1797 = vmatpush1.bf16.msra.mxu0 %v1780
    %1798 = vmatprep.subr.bf16.mxu0 0
    %1799 = vmatpush1.bf16.msra.mxu0 %v1781
    %1800 = vmatprep.subr.bf16.mxu0 0
    %1801 = vmatpush1.bf16.msra.mxu0 %v1782
    %1802 = vmatprep.subr.bf16.mxu0 0
    %1803 = vmatpush1.bf16.msra.mxu0 %v1783
    %1804 = vmatprep.subr.bf16.mxu0 0
    %1805 = vmatpush1.bf16.msra.mxu0 %v1784
    %1806 = vmatprep.subr.bf16.mxu0 0
    %1807 = vmatpush1.bf16.msra.mxu0 %v1785
    %1808 = vmatprep.subr.bf16.mxu0 0
    %1809 = vmatpush1.bf16.msra.mxu0 %v1786
    %1810 = vmatprep.subr.bf16.mxu0 0
    %1811 = vmatpush1.bf16.msra.mxu0 %v1787
    %1812 = vmatprep.subr.bf16.mxu0 0
    %1813 = vmatpush1.bf16.msra.mxu0 0
    %1814 = vmatprep.subr.bf16.mxu0 0
    %1815 = vmatpush1.bf16.msra.mxu0 0
    %1816 = vmatprep.subr.bf16.mxu0 0
    %1817 = vmatpush1.bf16.msra.mxu0 0
    %1818 = vmatprep.subr.bf16.mxu0 0
    %1819 = vmatpush1.bf16.msra.mxu0 0
    %1820 = vmatprep.subr.bf16.mxu0 0
    %1821 = vmatpush1.bf16.msra.mxu0 0
    %1822 = vmatprep.subr.bf16.mxu0 0
    %1823 = vmatpush1.bf16.msra.mxu0 0
    %1824 = vmatprep.subr.bf16.mxu0 0
    %1825 = vmatpush1.bf16.msra.mxu0 0
    %1826 = vmatprep.subr.bf16.mxu0 0
    %1827 = vmatpush1.bf16.msra.mxu0 0
    %1828 = vmatprep.mubr.bf16.mxu0 0
    %1829 = vmatmul.mubr.bf16.gmra.mrb[0].mxu0 %v1724
    %v1830 = vpop.f32.mrb[0].mxu0
    %v1831 = vadd.f32 %v1746, %v1830
    %v1832 = vpop.f32.mrb[0].mxu0
    %v1833 = vpop.f32.mrb[0].mxu0
    %v1834 = vadd.f32 %v1746, %v1833
    %v1835 = vpop.f32.mrb[0].mxu0
    %1836 = vdwg.mxu0
    %1837 = vst [vmem:[#allocation10] sm:$0xff] %v1831
    %1838 = vst [vmem:[#allocation10 + $0x8] sm:$0xff] %v1834
    // Predicated region
    $region46: #{tpu_custom_call.1} parent=1 // pred_check
      _
    $region47: #{tpu_custom_call.1} parent=1 // pred_check_branch
      %1840 = sbr.rel (0) target = $region49
    $region48: #{tpu_custom_call.1} parent=1 // pred_region
      %s1842 = ssub.s32 256, 256
      %1843 = vsyncadd [#allocation4], %s1842
      %s1844 = sshll.u32 [#allocation10], 4
      %s1845 = int_to_ptr.vmem [resolvable:$true] %s1844
      %1850 = dma.vmem_to_hbm [thread:$0]  %s1845, 256, %s7, [#allocation4], 128, 128, 8
    $region49: #{tpu_custom_call.1} parent=1 // pred_fallthru
      _
    // Predicated region
    $region50: #{tpu_custom_call.1} parent=1 // pred_check
      _
    $region51: #{tpu_custom_call.1} parent=1 // pred_check_branch
      %1852 = sbr.rel (0) target = $region53
    $region52: #{tpu_custom_call.1} parent=1 // pred_region
      %1853 = dma.done [#allocation4], 256
    $region53: #{tpu_custom_call.1} parent=1 // pred_fallthru
      _
    %1854 = vsyncpa [#allocation3], 1
    %1855 = vsyncpa [#allocation6], 1
    %1856 = vsyncpa [#allocation9], 1
    %1857 = vsyncpa [#allocation4], 1

// kernel: tpu_custom_call.1
$region0: #{tpu_custom_call.1}
  #allocation0 [shape = 'u32[]', space=smem, size = 0x4, offset = 0x4, fixed_abs, tag = 'smem constant byte address 0x4 - core index']
  #allocation1 [shape = 'u32[144,128]{1,0:T(1,128)}', space=vmem, size = 0x12000, scoped, tag = 'internal scratch']
  %s0 = inlined_call_operand.hbm [shape: bf16[16,128], index: 0, kind: input, shape index: {}]
  %s1 = inlined_call_operand.hbm [shape: bf16[128,128], index: 1, kind: input, shape index: {}]
  %s2 = inlined_call_operand.vmem [shape: f32[1,128], index: 2, kind: input, shape index: {}]
  %s3 = inlined_call_operand.hbm [shape: bf16[13,128,128], index: 3, kind: input, shape index: {}]
  %s4 = inlined_call_operand.vmem [shape: f32[13,1,128], index: 4, kind: input, shape index: {}]
  %s5 = inlined_call_operand.hbm [shape: bf16[128,128], index: 5, kind: input, shape index: {}]
  %s6 = inlined_call_operand.vmem [shape: f32[1,128], index: 6, kind: input, shape index: {}]
  %s7 = inlined_call_operand.hbm [shape: f32[16,128], index: 7, kind: output, shape index: {}]
  %s8 = sld [smem:[#allocation0]]
  $region54: #{tpu_custom_call.1} parent=0
    _
  %s10 = ssub.s32 1, %s8
  %s11 = scalar_select 0, %s10, %s8
  $region1: #{tpu_custom_call.1} parent=0
    #allocation2 [shape = 'u8[4096]{0}', space=vmem, size = 0x1000, scoped, tag = 'input window, operand 0, single buffered']
    #allocation3 [shape = 's32[1]{0}', space=sflag, size = 0x4, scoped, tag = 'scoped memory for tpu_custom_call.1']
    #allocation4 [shape = 's32[1]{0}', space=sflag, size = 0x4, scoped, tag = 'scoped memory for tpu_custom_call.1']
    #allocation5 [shape = 'u8[32768]{0}', space=vmem, size = 0x8000, scoped, tag = 'input window, operand 1, single buffered']
    #allocation6 [shape = 's32[1]{0}', space=sflag, size = 0x4, scoped, tag = 'scoped memory for tpu_custom_call.1']
    #allocation7 [shape = 'u8[425984]{0}', space=vmem, size = 0x68000, scoped, tag = 'input window, operand 3, single buffered']
    #allocation8 [shape = 'u8[32768]{0}', space=vmem, size = 0x8000, scoped, tag = 'input window, operand 5, single buffered']
    #allocation9 [shape = 's32[1]{0}', space=sflag, size = 0x4, scoped, tag = 'scoped memory for tpu_custom_call.1']
    #allocation10 [shape = 'u8[8192]{0}', space=vmem, size = 0x2000, scoped, tag = 'output window, operand 0, single buffered']
    %12 = vsyncpa [#allocation3], 0
    %13 = vsyncpa [#allocation6], 0
    %14 = vsyncpa [#allocation9], 0
    %15 = vsyncpa [#allocation4], 0
    // Predicated region
    $region2: #{tpu_custom_call.1} parent=1 // pred_check
      _
    $region3: #{tpu_custom_call.1} parent=1 // pred_check_branch
      %17 = sbr.rel (0) target = $region5
    $region4: #{tpu_custom_call.1} parent=1 // pred_region
      %s19 = ssub.s32 128, 128
      %20 = vsyncadd [#allocation3], %s19
      %s21 = sshll.u32 [#allocation2], 4
      %s22 = int_to_ptr.vmem [resolvable:$true] %s21
      %27 = dma.hbm_to_vmem [thread:$0]  %s0, 128, %s22, [#allocation3], 64, 64, 4
    $region5: #{tpu_custom_call.1} parent=1 // pred_fallthru
      _
    // Predicated region
    $region6: #{tpu_custom_call.1} parent=1 // pred_check
      _
    $region7: #{tpu_custom_call.1} parent=1 // pred_check_branch
      %29 = sbr.rel (0) target = $region9
    $region8: #{tpu_custom_call.1} parent=1 // pred_region
      %s31 = ssub.s32 1024, 1024
      %32 = vsyncadd [#allocation6], %s31
      %s33 = sshll.u32 [#allocation5], 4
      %s34 = int_to_ptr.vmem [resolvable:$true] %s33
      %39 = dma.hbm_to_vmem [thread:$0]  %s1, 1024, %s34, [#allocation6], 64, 64, 4
    $region9: #{tpu_custom_call.1} parent=1 // pred_fallthru
      _
    // Predicated region
    $region10: #{tpu_custom_call.1} parent=1 // pred_check
      _
    $region11: #{tpu_custom_call.1} parent=1 // pred_check_branch
      %41 = sbr.rel (0) target = $region13
    $region12: #{tpu_custom_call.1} parent=1 // pred_region
      _
    $region13: #{tpu_custom_call.1} parent=1 // pred_fallthru
      _
    // Predicated region
    $region14: #{tpu_custom_call.1} parent=1 // pred_check
      _
    $region15: #{tpu_custom_call.1} parent=1 // pred_check_branch
      %43 = sbr.rel (0) target = $region17
    $region16: #{tpu_custom_call.1} parent=1 // pred_region
      %s45 = ssub.s32 13312, 13312
      %46 = vsyncadd [#allocation6], %s45
      %s47 = sshll.u32 [#allocation7], 4
      %s48 = int_to_ptr.vmem [resolvable:$true] %s47
      %53 = dma.hbm_to_vmem [thread:$0]  %s3, 13312, %s48, [#allocation6], 64, 64, 4
    $region17: #{tpu_custom_call.1} parent=1 // pred_fallthru
      _
    // Predicated region
    $region18: #{tpu_custom_call.1} parent=1 // pred_check
      _
    $region19: #{tpu_custom_call.1} parent=1 // pred_check_branch
      %55 = sbr.rel (0) target = $region21
    $region20: #{tpu_custom_call.1} parent=1 // pred_region
      _
    $region21: #{tpu_custom_call.1} parent=1 // pred_fallthru
      _
    // Predicated region
    $region22: #{tpu_custom_call.1} parent=1 // pred_check
      _
    $region23: #{tpu_custom_call.1} parent=1 // pred_check_branch
      %57 = sbr.rel (0) target = $region25
    $region24: #{tpu_custom_call.1} parent=1 // pred_region
      %s59 = ssub.s32 1024, 1024
      %60 = vsyncadd [#allocation9], %s59
      %s61 = sshll.u32 [#allocation8], 4
      %s62 = int_to_ptr.vmem [resolvable:$true] %s61
      %67 = dma.hbm_to_vmem [thread:$0]  %s5, 1024, %s62, [#allocation9], 64, 64, 4
    $region25: #{tpu_custom_call.1} parent=1 // pred_fallthru
      _
    // Predicated region
    $region26: #{tpu_custom_call.1} parent=1 // pred_check
      _
    $region27: #{tpu_custom_call.1} parent=1 // pred_check_branch
      %69 = sbr.rel (0) target = $region29
    $region28: #{tpu_custom_call.1} parent=1 // pred_region
      _
    $region29: #{tpu_custom_call.1} parent=1 // pred_fallthru
      _
    // Predicated region
    $region30: #{tpu_custom_call.1} parent=1 // pred_check
      _
    $region31: #{tpu_custom_call.1} parent=1 // pred_check_branch
      %71 = sbr.rel (0) target = $region33
    $region32: #{tpu_custom_call.1} parent=1 // pred_region
      %72 = dma.done [#allocation3], 128
    $region33: #{tpu_custom_call.1} parent=1 // pred_fallthru
      _
    // Predicated region
    $region34: #{tpu_custom_call.1} parent=1 // pred_check
      _
    $region35: #{tpu_custom_call.1} parent=1 // pred_check_branch
      %74 = sbr.rel (0) target = $region37
    $region36: #{tpu_custom_call.1} parent=1 // pred_region
      %75 = dma.done [#allocation6], 1024
    $region37: #{tpu_custom_call.1} parent=1 // pred_fallthru
      _
    // Predicated region
    $region38: #{tpu_custom_call.1} parent=1 // pred_check
      _
    $region39: #{tpu_custom_call.1} parent=1 // pred_check_branch
      %77 = sbr.rel (0) target = $region41
    $region40: #{tpu_custom_call.1} parent=1 // pred_region
      %78 = dma.done [#allocation6], 13312
    $region41: #{tpu_custom_call.1} parent=1 // pred_fallthru
      _
    // Predicated region
    $region42: #{tpu_custom_call.1} parent=1 // pred_check
      _
    $region43: #{tpu_custom_call.1} parent=1 // pred_check_branch
      %80 = sbr.rel (0) target = $region45
    $region44: #{tpu_custom_call.1} parent=1 // pred_region
      %81 = dma.done [#allocation9], 1024
    $region45: #{tpu_custom_call.1} parent=1 // pred_fallthru
      _
    %v83 = vld [vmem:[#allocation5] sm:$0xf]
    %v84 = vld [vmem:[#allocation5 + $0x4] sm:$0xf]
    %v85 = vld [vmem:[#allocation5 + $0x8] sm:$0xf]
    %v86 = vld [vmem:[#allocation5 + $0xc] sm:$0xf]
    %v87 = vld [vmem:[#allocation5 + $0x10] sm:$0xf]
    %v88 = vld [vmem:[#allocation5 + $0x14] sm:$0xf]
    %v89 = vld [vmem:[#allocation5 + $0x18] sm:$0xf]
    %v90 = vld [vmem:[#allocation5 + $0x1c] sm:$0xf]
    %v91 = vld [vmem:[#allocation5 + $0x20] sm:$0xf]
    %v92 = vld [vmem:[#allocation5 + $0x24] sm:$0xf]
    %v93 = vld [vmem:[#allocation5 + $0x28] sm:$0xf]
    %v94 = vld [vmem:[#allocation5 + $0x2c] sm:$0xf]
    %v95 = vld [vmem:[#allocation5 + $0x30] sm:$0xf]
    %v96 = vld [vmem:[#allocation5 + $0x34] sm:$0xf]
    %v97 = vld [vmem:[#allocation5 + $0x38] sm:$0xf]
    %v98 = vld [vmem:[#allocation5 + $0x3c] sm:$0xf]
    %v99 = vld [vmem:[%s2] sm:$0x1]
    %v100 = vld [vmem:[#allocation2] sm:$0xf]
    %v101 = vld [vmem:[#allocation2 + $0x4] sm:$0xf]
    %v103 = vlaneseq
    %v104 = vshrl.u32 %v103, 7
    %v105 = vsub.s32 0, %v104
    %v106 = vrot.slane %v99, %v105
    %v110 = vunpack.c.l.b16 %v100
    %v111 = vunpack.c.l.b16 %v101
    %v112 = vpack.c.b16 %v111, %v110
    %v130 = vunpack.c.l.b16 %v83
    %v131 = vunpack.c.l.b16 %v84
    %v132 = vunpack.c.l.b16 %v85
    %v133 = vunpack.c.l.b16 %v86
    %v134 = vunpack.c.l.b16 %v87
    %v135 = vunpack.c.l.b16 %v88
    %v136 = vunpack.c.l.b16 %v89
    %v137 = vunpack.c.l.b16 %v90
    %v138 = vunpack.c.l.b16 %v91
    %v139 = vunpack.c.l.b16 %v92
    %v140 = vunpack.c.l.b16 %v93
    %v141 = vunpack.c.l.b16 %v94
    %v142 = vunpack.c.l.b16 %v95
    %v143 = vunpack.c.l.b16 %v96
    %v144 = vunpack.c.l.b16 %v97
    %v145 = vunpack.c.l.b16 %v98
    %v146 = vpack.c.b16 %v131, %v130
    %v147 = vpack.c.b16 %v133, %v132
    %v148 = vpack.c.b16 %v135, %v134
    %v149 = vpack.c.b16 %v137, %v136
    %v150 = vpack.c.b16 %v139, %v138
    %v151 = vpack.c.b16 %v141, %v140
    %v152 = vpack.c.b16 %v143, %v142
    %v153 = vpack.c.b16 %v145, %v144
    %162 = vmatprep.subr.bf16.mxu0 0
    %163 = vmatpush1.bf16.msra.mxu0 %v146
    %164 = vmatprep.subr.bf16.mxu0 0
    %165 = vmatpush1.bf16.msra.mxu0 %v147
    %166 = vmatprep.subr.bf16.mxu0 0
    %167 = vmatpush1.bf16.msra.mxu0 %v148
    %168 = vmatprep.subr.bf16.mxu0 0
    %169 = vmatpush1.bf16.msra.mxu0 %v149
    %170 = vmatprep.subr.bf16.mxu0 0
    %171 = vmatpush1.bf16.msra.mxu0 %v150
    %172 = vmatprep.subr.bf16.mxu0 0
    %173 = vmatpush1.bf16.msra.mxu0 %v151
    %174 = vmatprep.subr.bf16.mxu0 0
    %175 = vmatpush1.bf16.msra.mxu0 %v152
    %176 = vmatprep.subr.bf16.mxu0 0
    %177 = vmatpush1.bf16.msra.mxu0 %v153
    %178 = vmatprep.subr.bf16.mxu0 0
    %179 = vmatpush1.bf16.msra.mxu0 0
    %180 = vmatprep.subr.bf16.mxu0 0
    %181 = vmatpush1.bf16.msra.mxu0 0
    %182 = vmatprep.subr.bf16.mxu0 0
    %183 = vmatpush1.bf16.msra.mxu0 0
    %184 = vmatprep.subr.bf16.mxu0 0
    %185 = vmatpush1.bf16.msra.mxu0 0
    %186 = vmatprep.subr.bf16.mxu0 0
    %187 = vmatpush1.bf16.msra.mxu0 0
    %188 = vmatprep.subr.bf16.mxu0 0
    %189 = vmatpush1.bf16.msra.mxu0 0
    %190 = vmatprep.subr.bf16.mxu0 0
    %191 = vmatpush1.bf16.msra.mxu0 0
    %192 = vmatprep.subr.bf16.mxu0 0
    %193 = vmatpush1.bf16.msra.mxu0 0
    %194 = vmatprep.mubr.bf16.mxu0 0
    %195 = vmatmul.mubr.bf16.gmra.mrb[0].mxu0 %v112
    %v196 = vpop.f32.mrb[0].mxu0
    %v197 = vadd.f32 %v106, %v196
    %v198 = vpop.f32.mrb[0].mxu0
    %v199 = vpop.f32.mrb[0].mxu0
    %v200 = vadd.f32 %v106, %v199
    %v201 = vpop.f32.mrb[0].mxu0
    %202 = vdwg.mxu0
    %v203 = vmax.f32 %v197, 0.0
    %v204 = vmax.f32 %v200, 0.0
    %v205 = vpack.c.bf16 %v204, %v203
    %v206 = vld [vmem:[#allocation7] sm:$0xf]
    %v207 = vld [vmem:[#allocation7 + $0x4] sm:$0xf]
    %v208 = vld [vmem:[#allocation7 + $0x8] sm:$0xf]
    %v209 = vld [vmem:[#allocation7 + $0xc] sm:$0xf]
    %v210 = vld [vmem:[#allocation7 + $0x10] sm:$0xf]
    %v211 = vld [vmem:[#allocation7 + $0x14] sm:$0xf]
    %v212 = vld [vmem:[#allocation7 + $0x18] sm:$0xf]
    %v213 = vld [vmem:[#allocation7 + $0x1c] sm:$0xf]
    %v214 = vld [vmem:[#allocation7 + $0x20] sm:$0xf]
    %v215 = vld [vmem:[#allocation7 + $0x24] sm:$0xf]
    %v216 = vld [vmem:[#allocation7 + $0x28] sm:$0xf]
    %v217 = vld [vmem:[#allocation7 + $0x2c] sm:$0xf]
    %v218 = vld [vmem:[#allocation7 + $0x30] sm:$0xf]
    %v219 = vld [vmem:[#allocation7 + $0x34] sm:$0xf]
    %v220 = vld [vmem:[#allocation7 + $0x38] sm:$0xf]
    %v221 = vld [vmem:[#allocation7 + $0x3c] sm:$0xf]
    %v222 = vld [vmem:[%s4] sm:$0x1]
    %v224 = vlaneseq
    %v225 = vshrl.u32 %v224, 7
    %v226 = vsub.s32 0, %v225
    %v227 = vrot.slane %v222, %v226
    %v245 = vunpack.c.l.b16 %v206
    %v246 = vunpack.c.l.b16 %v207
    %v247 = vunpack.c.l.b16 %v208
    %v248 = vunpack.c.l.b16 %v209
    %v249 = vunpack.c.l.b16 %v210
    %v250 = vunpack.c.l.b16 %v211
    %v251 = vunpack.c.l.b16 %v212
    %v252 = vunpack.c.l.b16 %v213
    %v253 = vunpack.c.l.b16 %v214
    %v254 = vunpack.c.l.b16 %v215
    %v255 = vunpack.c.l.b16 %v216
    %v256 = vunpack.c.l.b16 %v217
    %v257 = vunpack.c.l.b16 %v218
    %v258 = vunpack.c.l.b16 %v219
    %v259 = vunpack.c.l.b16 %v220
    %v260 = vunpack.c.l.b16 %v221
    %v261 = vpack.c.b16 %v246, %v245
    %v262 = vpack.c.b16 %v248, %v247
    %v263 = vpack.c.b16 %v250, %v249
    %v264 = vpack.c.b16 %v252, %v251
    %v265 = vpack.c.b16 %v254, %v253
    %v266 = vpack.c.b16 %v256, %v255
    %v267 = vpack.c.b16 %v258, %v257
    %v268 = vpack.c.b16 %v260, %v259
    %277 = vmatprep.subr.bf16.mxu0 0
    %278 = vmatpush1.bf16.msra.mxu0 %v261
    %279 = vmatprep.subr.bf16.mxu0 0
    %280 = vmatpush1.bf16.msra.mxu0 %v262
    %281 = vmatprep.subr.bf16.mxu0 0
    %282 = vmatpush1.bf16.msra.mxu0 %v263
    %283 = vmatprep.subr.bf16.mxu0 0
    %284 = vmatpush1.bf16.msra.mxu0 %v264
    %285 = vmatprep.subr.bf16.mxu0 0
    %286 = vmatpush1.bf16.msra.mxu0 %v265
    %287 = vmatprep.subr.bf16.mxu0 0
    %288 = vmatpush1.bf16.msra.mxu0 %v266
    %289 = vmatprep.subr.bf16.mxu0 0
    %290 = vmatpush1.bf16.msra.mxu0 %v267
    %291 = vmatprep.subr.bf16.mxu0 0
    %292 = vmatpush1.bf16.msra.mxu0 %v268
    %293 = vmatprep.subr.bf16.mxu0 0
    %294 = vmatpush1.bf16.msra.mxu0 0
    %295 = vmatprep.subr.bf16.mxu0 0
    %296 = vmatpush1.bf16.msra.mxu0 0
    %297 = vmatprep.subr.bf16.mxu0 0
    %298 = vmatpush1.bf16.msra.mxu0 0
    %299 = vmatprep.subr.bf16.mxu0 0
    %300 = vmatpush1.bf16.msra.mxu0 0
    %301 = vmatprep.subr.bf16.mxu0 0
    %302 = vmatpush1.bf16.msra.mxu0 0
    %303 = vmatprep.subr.bf16.mxu0 0
    %304 = vmatpush1.bf16.msra.mxu0 0
    %305 = vmatprep.subr.bf16.mxu0 0
    %306 = vmatpush1.bf16.msra.mxu0 0
    %307 = vmatprep.subr.bf16.mxu0 0
    %308 = vmatpush1.bf16.msra.mxu0 0
    %309 = vmatprep.mubr.bf16.mxu0 0
    %310 = vmatmul.mubr.bf16.gmra.mrb[0].mxu0 %v205
    %v311 = vpop.f32.mrb[0].mxu0
    %v312 = vadd.f32 %v227, %v311
    %v313 = vpop.f32.mrb[0].mxu0
    %v314 = vpop.f32.mrb[0].mxu0
    %v315 = vadd.f32 %v227, %v314
    %v316 = vpop.f32.mrb[0].mxu0
    %317 = vdwg.mxu0
    %v318 = vmax.f32 %v312, 0.0
    %v319 = vmax.f32 %v315, 0.0
    %v320 = vpack.c.bf16 %v319, %v318
    %s321 = scalar_lea.vmem [#allocation7], 64
    %v322 = vld [vmem:[%s321] sm:$0xf]
    %v323 = vld [vmem:[%s321 + $0x4] sm:$0xf]
    %v324 = vld [vmem:[%s321 + $0x8] sm:$0xf]
    %v325 = vld [vmem:[%s321 + $0xc] sm:$0xf]
    %v326 = vld [vmem:[%s321 + $0x10] sm:$0xf]
    %v327 = vld [vmem:[%s321 + $0x14] sm:$0xf]
    %v328 = vld [vmem:[%s321 + $0x18] sm:$0xf]
    %v329 = vld [vmem:[%s321 + $0x1c] sm:$0xf]
    %v330 = vld [vmem:[%s321 + $0x20] sm:$0xf]
    %v331 = vld [vmem:[%s321 + $0x24] sm:$0xf]
    %v332 = vld [vmem:[%s321 + $0x28] sm:$0xf]
    %v333 = vld [vmem:[%s321 + $0x2c] sm:$0xf]
    %v334 = vld [vmem:[%s321 + $0x30] sm:$0xf]
    %v335 = vld [vmem:[%s321 + $0x34] sm:$0xf]
    %v336 = vld [vmem:[%s321 + $0x38] sm:$0xf]
    %v337 = vld [vmem:[%s321 + $0x3c] sm:$0xf]
    %s338 = scalar_lea.vmem %s4, 1
    %v339 = vld [vmem:[%s338] sm:$0x1]
    %v341 = vlaneseq
    %v342 = vshrl.u32 %v341, 7
    %v343 = vsub.s32 0, %v342
    %v344 = vrot.slane %v339, %v343
    %v362 = vunpack.c.l.b16 %v322
    %v363 = vunpack.c.l.b16 %v323
    %v364 = vunpack.c.l.b16 %v324
    %v365 = vunpack.c.l.b16 %v325
    %v366 = vunpack.c.l.b16 %v326
    %v367 = vunpack.c.l.b16 %v327
    %v368 = vunpack.c.l.b16 %v328
    %v369 = vunpack.c.l.b16 %v329
    %v370 = vunpack.c.l.b16 %v330
    %v371 = vunpack.c.l.b16 %v331
    %v372 = vunpack.c.l.b16 %v332
    %v373 = vunpack.c.l.b16 %v333
    %v374 = vunpack.c.l.b16 %v334
    %v375 = vunpack.c.l.b16 %v335
    %v376 = vunpack.c.l.b16 %v336
    %v377 = vunpack.c.l.b16 %v337
    %v378 = vpack.c.b16 %v363, %v362
    %v379 = vpack.c.b16 %v365, %v364
    %v380 = vpack.c.b16 %v367, %v366
    %v381 = vpack.c.b16 %v369, %v368
    %v382 = vpack.c.b16 %v371, %v370
    %v383 = vpack.c.b16 %v373, %v372
    %v384 = vpack.c.b16 %v375, %v374
    %v385 = vpack.c.b16 %v377, %v376
    %394 = vmatprep.subr.bf16.mxu0 0
    %395 = vmatpush1.bf16.msra.mxu0 %v378
    %396 = vmatprep.subr.bf16.mxu0 0
    %397 = vmatpush1.bf16.msra.mxu0 %v379
    %398 = vmatprep.subr.bf16.mxu0 0
    %399 = vmatpush1.bf16.msra.mxu0 %v380
    %400 = vmatprep.subr.bf16.mxu0 0
    %401 = vmatpush1.bf16.msra.mxu0 %v381
    %402 = vmatprep.subr.bf16.mxu0 0
    %403 = vmatpush1.bf16.msra.mxu0 %v382
    %404 = vmatprep.subr.bf16.mxu0 0
    %405 = vmatpush1.bf16.msra.mxu0 %v383
    %406 = vmatprep.subr.bf16.mxu0 0
    %407 = vmatpush1.bf16.msra.mxu0 %v384
    %408 = vmatprep.subr.bf16.mxu0 0
    %409 = vmatpush1.bf16.msra.mxu0 %v385
    %410 = vmatprep.subr.bf16.mxu0 0
    %411 = vmatpush1.bf16.msra.mxu0 0
    %412 = vmatprep.subr.bf16.mxu0 0
    %413 = vmatpush1.bf16.msra.mxu0 0
    %414 = vmatprep.subr.bf16.mxu0 0
    %415 = vmatpush1.bf16.msra.mxu0 0
    %416 = vmatprep.subr.bf16.mxu0 0
    %417 = vmatpush1.bf16.msra.mxu0 0
    %418 = vmatprep.subr.bf16.mxu0 0
    %419 = vmatpush1.bf16.msra.mxu0 0
    %420 = vmatprep.subr.bf16.mxu0 0
    %421 = vmatpush1.bf16.msra.mxu0 0
    %422 = vmatprep.subr.bf16.mxu0 0
    %423 = vmatpush1.bf16.msra.mxu0 0
    %424 = vmatprep.subr.bf16.mxu0 0
    %425 = vmatpush1.bf16.msra.mxu0 0
    %426 = vmatprep.mubr.bf16.mxu0 0
    %427 = vmatmul.mubr.bf16.gmra.mrb[0].mxu0 %v320
    %v428 = vpop.f32.mrb[0].mxu0
    %v429 = vadd.f32 %v344, %v428
    %v430 = vpop.f32.mrb[0].mxu0
    %v431 = vpop.f32.mrb[0].mxu0
    %v432 = vadd.f32 %v344, %v431
    %v433 = vpop.f32.mrb[0].mxu0
    %434 = vdwg.mxu0
    %v435 = vmax.f32 %v429, 0.0
    %v436 = vmax.f32 %v432, 0.0
    %v437 = vpack.c.bf16 %v436, %v435
    %s438 = scalar_lea.vmem [#allocation7], 128
    %v439 = vld [vmem:[%s438] sm:$0xf]
    %v440 = vld [vmem:[%s438 + $0x4] sm:$0xf]
    %v441 = vld [vmem:[%s438 + $0x8] sm:$0xf]
    %v442 = vld [vmem:[%s438 + $0xc] sm:$0xf]
    %v443 = vld [vmem:[%s438 + $0x10] sm:$0xf]
    %v444 = vld [vmem:[%s438 + $0x14] sm:$0xf]
    %v445 = vld [vmem:[%s438 + $0x18] sm:$0xf]
    %v446 = vld [vmem:[%s438 + $0x1c] sm:$0xf]
    %v447 = vld [vmem:[%s438 + $0x20] sm:$0xf]
    %v448 = vld [vmem:[%s438 + $0x24] sm:$0xf]
    %v449 = vld [vmem:[%s438 + $0x28] sm:$0xf]
    %v450 = vld [vmem:[%s438 + $0x2c] sm:$0xf]
    %v451 = vld [vmem:[%s438 + $0x30] sm:$0xf]
    %v452 = vld [vmem:[%s438 + $0x34] sm:$0xf]
    %v453 = vld [vmem:[%s438 + $0x38] sm:$0xf]
    %v454 = vld [vmem:[%s438 + $0x3c] sm:$0xf]
    %s455 = scalar_lea.vmem %s4, 2
    %v456 = vld [vmem:[%s455] sm:$0x1]
    %v458 = vlaneseq
    %v459 = vshrl.u32 %v458, 7
    %v460 = vsub.s32 0, %v459
    %v461 = vrot.slane %v456, %v460
    %v479 = vunpack.c.l.b16 %v439
    %v480 = vunpack.c.l.b16 %v440
    %v481 = vunpack.c.l.b16 %v441
    %v482 = vunpack.c.l.b16 %v442
    %v483 = vunpack.c.l.b16 %v443
    %v484 = vunpack.c.l.b16 %v444
    %v485 = vunpack.c.l.b16 %v445
    %v486 = vunpack.c.l.b16 %v446
    %v487 = vunpack.c.l.b16 %v447
    %v488 = vunpack.c.l.b16 %v448
    %v489 = vunpack.c.l.b16 %v449
    %v490 = vunpack.c.l.b16 %v450
    %v491 = vunpack.c.l.b16 %v451
    %v492 = vunpack.c.l.b16 %v452
    %v493 = vunpack.c.l.b16 %v453
    %v494 = vunpack.c.l.b16 %v454
    %v495 = vpack.c.b16 %v480, %v479
    %v496 = vpack.c.b16 %v482, %v481
    %v497 = vpack.c.b16 %v484, %v483
    %v498 = vpack.c.b16 %v486, %v485
    %v499 = vpack.c.b16 %v488, %v487
    %v500 = vpack.c.b16 %v490, %v489
    %v501 = vpack.c.b16 %v492, %v491
    %v502 = vpack.c.b16 %v494, %v493
    %511 = vmatprep.subr.bf16.mxu0 0
    %512 = vmatpush1.bf16.msra.mxu0 %v495
    %513 = vmatprep.subr.bf16.mxu0 0
    %514 = vmatpush1.bf16.msra.mxu0 %v496
    %515 = vmatprep.subr.bf16.mxu0 0
    %516 = vmatpush1.bf16.msra.mxu0 %v497
    %517 = vmatprep.subr.bf16.mxu0 0
    %518 = vmatpush1.bf16.msra.mxu0 %v498
    %519 = vmatprep.subr.bf16.mxu0 0
    %520 = vmatpush1.bf16.msra.mxu0 %v499
    %521 = vmatprep.subr.bf16.mxu0 0
    %522 = vmatpush1.bf16.msra.mxu0 %v500
    %523 = vmatprep.subr.bf16.mxu0 0
    %524 = vmatpush1.bf16.msra.mxu0 %v501
    %525 = vmatprep.subr.bf16.mxu0 0
    %526 = vmatpush1.bf16.msra.mxu0 %v502
    %527 = vmatprep.subr.bf16.mxu0 0
    %528 = vmatpush1.bf16.msra.mxu0 0
    %529 = vmatprep.subr.bf16.mxu0 0
    %530 = vmatpush1.bf16.msra.mxu0 0
    %531 = vmatprep.subr.bf16.mxu0 0
    %532 = vmatpush1.bf16.msra.mxu0 0
    %533 = vmatprep.subr.bf16.mxu0 0
    %534 = vmatpush1.bf16.msra.mxu0 0
    %535 = vmatprep.subr.bf16.mxu0 0
    %536 = vmatpush1.bf16.msra.mxu0 0
    %537 = vmatprep.subr.bf16.mxu0 0
    %538 = vmatpush1.bf16.msra.mxu0 0
    %539 = vmatprep.subr.bf16.mxu0 0
    %540 = vmatpush1.bf16.msra.mxu0 0
    %541 = vmatprep.subr.bf16.mxu0 0
    %542 = vmatpush1.bf16.msra.mxu0 0
    %543 = vmatprep.mubr.bf16.mxu0 0
    %544 = vmatmul.mubr.bf16.gmra.mrb[0].mxu0 %v437
    %v545 = vpop.f32.mrb[0].mxu0
    %v546 = vadd.f32 %v461, %v545
    %v547 = vpop.f32.mrb[0].mxu0
    %v548 = vpop.f32.mrb[0].mxu0
    %v549 = vadd.f32 %v461, %v548
    %v550 = vpop.f32.mrb[0].mxu0
    %551 = vdwg.mxu0
    %v552 = vmax.f32 %v546, 0.0
    %v553 = vmax.f32 %v549, 0.0
    %v554 = vpack.c.bf16 %v553, %v552
    %s555 = scalar_lea.vmem [#allocation7], 192
    %v556 = vld [vmem:[%s555] sm:$0xf]
    %v557 = vld [vmem:[%s555 + $0x4] sm:$0xf]
    %v558 = vld [vmem:[%s555 + $0x8] sm:$0xf]
    %v559 = vld [vmem:[%s555 + $0xc] sm:$0xf]
    %v560 = vld [vmem:[%s555 + $0x10] sm:$0xf]
    %v561 = vld [vmem:[%s555 + $0x14] sm:$0xf]
    %v562 = vld [vmem:[%s555 + $0x18] sm:$0xf]
    %v563 = vld [vmem:[%s555 + $0x1c] sm:$0xf]
    %v564 = vld [vmem:[%s555 + $0x20] sm:$0xf]
    %v565 = vld [vmem:[%s555 + $0x24] sm:$0xf]
    %v566 = vld [vmem:[%s555 + $0x28] sm:$0xf]
    %v567 = vld [vmem:[%s555 + $0x2c] sm:$0xf]
    %v568 = vld [vmem:[%s555 + $0x30] sm:$0xf]
    %v569 = vld [vmem:[%s555 + $0x34] sm:$0xf]
    %v570 = vld [vmem:[%s555 + $0x38] sm:$0xf]
    %v571 = vld [vmem:[%s555 + $0x3c] sm:$0xf]
    %s572 = scalar_lea.vmem %s4, 3
    %v573 = vld [vmem:[%s572] sm:$0x1]
    %v575 = vlaneseq
    %v576 = vshrl.u32 %v575, 7
    %v577 = vsub.s32 0, %v576
    %v578 = vrot.slane %v573, %v577
    %v596 = vunpack.c.l.b16 %v556
    %v597 = vunpack.c.l.b16 %v557
    %v598 = vunpack.c.l.b16 %v558
    %v599 = vunpack.c.l.b16 %v559
    %v600 = vunpack.c.l.b16 %v560
    %v601 = vunpack.c.l.b16 %v561
    %v602 = vunpack.c.l.b16 %v562
    %v603 = vunpack.c.l.b16 %v563
    %v604 = vunpack.c.l.b16 %v564
    %v605 = vunpack.c.l.b16 %v565
    %v606 = vunpack.c.l.b16 %v566
    %v607 = vunpack.c.l.b16 %v567
    %v608 = vunpack.c.l.b16 %v568
    %v609 = vunpack.c.l.b16 %v569
    %v610 = vunpack.c.l.b16 %v570
    %v611 = vunpack.c.l.b16 %v571
    %v612 = vpack.c.b16 %v597, %v596
    %v613 = vpack.c.b16 %v599, %v598
    %v614 = vpack.c.b16 %v601, %v600
    %v615 = vpack.c.b16 %v603, %v602
    %v616 = vpack.c.b16 %v605, %v604
    %v617 = vpack.c.b16 %v607, %v606
    %v618 = vpack.c.b16 %v609, %v608
    %v619 = vpack.c.b16 %v611, %v610
    %628 = vmatprep.subr.bf16.mxu0 0
    %629 = vmatpush1.bf16.msra.mxu0 %v612
    %630 = vmatprep.subr.bf16.mxu0 0
    %631 = vmatpush1.bf16.msra.mxu0 %v613
    %632 = vmatprep.subr.bf16.mxu0 0
    %633 = vmatpush1.bf16.msra.mxu0 %v614
    %634 = vmatprep.subr.bf16.mxu0 0
    %635 = vmatpush1.bf16.msra.mxu0 %v615
    %636 = vmatprep.subr.bf16.mxu0 0
    %637 = vmatpush1.bf16.msra.mxu0 %v616
    %638 = vmatprep.subr.bf16.mxu0 0
    %639 = vmatpush1.bf16.msra.mxu0 %v617
    %640 = vmatprep.subr.bf16.mxu0 0
    %641 = vmatpush1.bf16.msra.mxu0 %v618
    %642 = vmatprep.subr.bf16.mxu0 0
    %643 = vmatpush1.bf16.msra.mxu0 %v619
    %644 = vmatprep.subr.bf16.mxu0 0
    %645 = vmatpush1.bf16.msra.mxu0 0
    %646 = vmatprep.subr.bf16.mxu0 0
    %647 = vmatpush1.bf16.msra.mxu0 0
    %648 = vmatprep.subr.bf16.mxu0 0
    %649 = vmatpush1.bf16.msra.mxu0 0
    %650 = vmatprep.subr.bf16.mxu0 0
    %651 = vmatpush1.bf16.msra.mxu0 0
    %652 = vmatprep.subr.bf16.mxu0 0
    %653 = vmatpush1.bf16.msra.mxu0 0
    %654 = vmatprep.subr.bf16.mxu0 0
    %655 = vmatpush1.bf16.msra.mxu0 0
    %656 = vmatprep.subr.bf16.mxu0 0
    %657 = vmatpush1.bf16.msra.mxu0 0
    %658 = vmatprep.subr.bf16.mxu0 0
    %659 = vmatpush1.bf16.msra.mxu0 0
    %660 = vmatprep.mubr.bf16.mxu0 0
    %661 = vmatmul.mubr.bf16.gmra.mrb[0].mxu0 %v554
    %v662 = vpop.f32.mrb[0].mxu0
    %v663 = vadd.f32 %v578, %v662
    %v664 = vpop.f32.mrb[0].mxu0
    %v665 = vpop.f32.mrb[0].mxu0
    %v666 = vadd.f32 %v578, %v665
    %v667 = vpop.f32.mrb[0].mxu0
    %668 = vdwg.mxu0
    %v669 = vmax.f32 %v663, 0.0
    %v670 = vmax.f32 %v666, 0.0
    %v671 = vpack.c.bf16 %v670, %v669
    %s672 = scalar_lea.vmem [#allocation7], 256
    %v673 = vld [vmem:[%s672] sm:$0xf]
    %v674 = vld [vmem:[%s672 + $0x4] sm:$0xf]
    %v675 = vld [vmem:[%s672 + $0x8] sm:$0xf]
    %v676 = vld [vmem:[%s672 + $0xc] sm:$0xf]
    %v677 = vld [vmem:[%s672 + $0x10] sm:$0xf]
    %v678 = vld [vmem:[%s672 + $0x14] sm:$0xf]
    %v679 = vld [vmem:[%s672 + $0x18] sm:$0xf]
    %v680 = vld [vmem:[%s672 + $0x1c] sm:$0xf]
    %v681 = vld [vmem:[%s672 + $0x20] sm:$0xf]
    %v682 = vld [vmem:[%s672 + $0x24] sm:$0xf]
    %v683 = vld [vmem:[%s672 + $0x28] sm:$0xf]
    %v684 = vld [vmem:[%s672 + $0x2c] sm:$0xf]
    %v685 = vld [vmem:[%s672 + $0x30] sm:$0xf]
    %v686 = vld [vmem:[%s672 + $0x34] sm:$0xf]
    %v687 = vld [vmem:[%s672 + $0x38] sm:$0xf]
    %v688 = vld [vmem:[%s672 + $0x3c] sm:$0xf]
    %s689 = scalar_lea.vmem %s4, 4
    %v690 = vld [vmem:[%s689] sm:$0x1]
    %v692 = vlaneseq
    %v693 = vshrl.u32 %v692, 7
    %v694 = vsub.s32 0, %v693
    %v695 = vrot.slane %v690, %v694
    %v713 = vunpack.c.l.b16 %v673
    %v714 = vunpack.c.l.b16 %v674
    %v715 = vunpack.c.l.b16 %v675
    %v716 = vunpack.c.l.b16 %v676
    %v717 = vunpack.c.l.b16 %v677
    %v718 = vunpack.c.l.b16 %v678
    %v719 = vunpack.c.l.b16 %v679
    %v720 = vunpack.c.l.b16 %v680
    %v721 = vunpack.c.l.b16 %v681
    %v722 = vunpack.c.l.b16 %v682
    %v723 = vunpack.c.l.b16 %v683
    %v724 = vunpack.c.l.b16 %v684
    %v725 = vunpack.c.l.b16 %v685
    %v726 = vunpack.c.l.b16 %v686
    %v727 = vunpack.c.l.b16 %v687
    %v728 = vunpack.c.l.b16 %v688
    %v729 = vpack.c.b16 %v714, %v713
    %v730 = vpack.c.b16 %v716, %v715
    %v731 = vpack.c.b16 %v718, %v717
    %v732 = vpack.c.b16 %v720, %v719
    %v733 = vpack.c.b16 %v722, %v721
    %v734 = vpack.c.b16 %v724, %v723
    %v735 = vpack.c.b16 %v726, %v725
    %v736 = vpack.c.b16 %v728, %v727
    %745 = vmatprep.subr.bf16.mxu0 0
    %746 = vmatpush1.bf16.msra.mxu0 %v729
    %747 = vmatprep.subr.bf16.mxu0 0
    %748 = vmatpush1.bf16.msra.mxu0 %v730
    %749 = vmatprep.subr.bf16.mxu0 0
    %750 = vmatpush1.bf16.msra.mxu0 %v731
    %751 = vmatprep.subr.bf16.mxu0 0
    %752 = vmatpush1.bf16.msra.mxu0 %v732
    %753 = vmatprep.subr.bf16.mxu0 0
    %754 = vmatpush1.bf16.msra.mxu0 %v733
    %755 = vmatprep.subr.bf16.mxu0 0
    %756 = vmatpush1.bf16.msra.mxu0 %v734
    %757 = vmatprep.subr.bf16.mxu0 0
    %758 = vmatpush1.bf16.msra.mxu0 %v735
    %759 = vmatprep.subr.bf16.mxu0 0
    %760 = vmatpush1.bf16.msra.mxu0 %v736
    %761 = vmatprep.subr.bf16.mxu0 0
    %762 = vmatpush1.bf16.msra.mxu0 0
    %763 = vmatprep.subr.bf16.mxu0 0
    %764 = vmatpush1.bf16.msra.mxu0 0
    %765 = vmatprep.subr.bf16.mxu0 0
    %766 = vmatpush1.bf16.msra.mxu0 0
    %767 = vmatprep.subr.bf16.mxu0 0
    %768 = vmatpush1.bf16.msra.mxu0 0
    %769 = vmatprep.subr.bf16.mxu0 0
    %770 = vmatpush1.bf16.msra.mxu0 0
    %771 = vmatprep.subr.bf16.mxu0 0
    %772 = vmatpush1.bf16.msra.mxu0 0
    %773 = vmatprep.subr.bf16.mxu0 0
    %774 = vmatpush1.bf16.msra.mxu0 0
    %775 = vmatprep.subr.bf16.mxu0 0
    %776 = vmatpush1.bf16.msra.mxu0 0
    %777 = vmatprep.mubr.bf16.mxu0 0
    %778 = vmatmul.mubr.bf16.gmra.mrb[0].mxu0 %v671
    %v779 = vpop.f32.mrb[0].mxu0
    %v780 = vadd.f32 %v695, %v779
    %v781 = vpop.f32.mrb[0].mxu0
    %v782 = vpop.f32.mrb[0].mxu0
    %v783 = vadd.f32 %v695, %v782
    %v784 = vpop.f32.mrb[0].mxu0
    %785 = vdwg.mxu0
    %v786 = vmax.f32 %v780, 0.0
    %v787 = vmax.f32 %v783, 0.0
    %v788 = vpack.c.bf16 %v787, %v786
    %s789 = scalar_lea.vmem [#allocation7], 320
    %v790 = vld [vmem:[%s789] sm:$0xf]
    %v791 = vld [vmem:[%s789 + $0x4] sm:$0xf]
    %v792 = vld [vmem:[%s789 + $0x8] sm:$0xf]
    %v793 = vld [vmem:[%s789 + $0xc] sm:$0xf]
    %v794 = vld [vmem:[%s789 + $0x10] sm:$0xf]
    %v795 = vld [vmem:[%s789 + $0x14] sm:$0xf]
    %v796 = vld [vmem:[%s789 + $0x18] sm:$0xf]
    %v797 = vld [vmem:[%s789 + $0x1c] sm:$0xf]
    %v798 = vld [vmem:[%s789 + $0x20] sm:$0xf]
    %v799 = vld [vmem:[%s789 + $0x24] sm:$0xf]
    %v800 = vld [vmem:[%s789 + $0x28] sm:$0xf]
    %v801 = vld [vmem:[%s789 + $0x2c] sm:$0xf]
    %v802 = vld [vmem:[%s789 + $0x30] sm:$0xf]
    %v803 = vld [vmem:[%s789 + $0x34] sm:$0xf]
    %v804 = vld [vmem:[%s789 + $0x38] sm:$0xf]
    %v805 = vld [vmem:[%s789 + $0x3c] sm:$0xf]
    %s806 = scalar_lea.vmem %s4, 5
    %v807 = vld [vmem:[%s806] sm:$0x1]
    %v809 = vlaneseq
    %v810 = vshrl.u32 %v809, 7
    %v811 = vsub.s32 0, %v810
    %v812 = vrot.slane %v807, %v811
    %v830 = vunpack.c.l.b16 %v790
    %v831 = vunpack.c.l.b16 %v791
    %v832 = vunpack.c.l.b16 %v792
    %v833 = vunpack.c.l.b16 %v793
    %v834 = vunpack.c.l.b16 %v794
    %v835 = vunpack.c.l.b16 %v795
    %v836 = vunpack.c.l.b16 %v796
    %v837 = vunpack.c.l.b16 %v797
    %v838 = vunpack.c.l.b16 %v798
    %v839 = vunpack.c.l.b16 %v799
    %v840 = vunpack.c.l.b16 %v800
    %v841 = vunpack.c.l.b16 %v801
    %v842 = vunpack.c.l.b16 %v802
    %v843 = vunpack.c.l.b16 %v803
    %v844 = vunpack.c.l.b16 %v804
    %v845 = vunpack.c.l.b16 %v805
    %v846 = vpack.c.b16 %v831, %v830
    %v847 = vpack.c.b16 %v833, %v832
    %v848 = vpack.c.b16 %v835, %v834
    %v849 = vpack.c.b16 %v837, %v836
    %v850 = vpack.c.b16 %v839, %v838
    %v851 = vpack.c.b16 %v841, %v840
    %v852 = vpack.c.b16 %v843, %v842
    %v853 = vpack.c.b16 %v845, %v844
    %862 = vmatprep.subr.bf16.mxu0 0
    %863 = vmatpush1.bf16.msra.mxu0 %v846
    %864 = vmatprep.subr.bf16.mxu0 0
    %865 = vmatpush1.bf16.msra.mxu0 %v847
    %866 = vmatprep.subr.bf16.mxu0 0
    %867 = vmatpush1.bf16.msra.mxu0 %v848
    %868 = vmatprep.subr.bf16.mxu0 0
    %869 = vmatpush1.bf16.msra.mxu0 %v849
    %870 = vmatprep.subr.bf16.mxu0 0
    %871 = vmatpush1.bf16.msra.mxu0 %v850
    %872 = vmatprep.subr.bf16.mxu0 0
    %873 = vmatpush1.bf16.msra.mxu0 %v851
    %874 = vmatprep.subr.bf16.mxu0 0
    %875 = vmatpush1.bf16.msra.mxu0 %v852
    %876 = vmatprep.subr.bf16.mxu0 0
    %877 = vmatpush1.bf16.msra.mxu0 %v853
    %878 = vmatprep.subr.bf16.mxu0 0
    %879 = vmatpush1.bf16.msra.mxu0 0
    %880 = vmatprep.subr.bf16.mxu0 0
    %881 = vmatpush1.bf16.msra.mxu0 0
    %882 = vmatprep.subr.bf16.mxu0 0
    %883 = vmatpush1.bf16.msra.mxu0 0
    %884 = vmatprep.subr.bf16.mxu0 0
    %885 = vmatpush1.bf16.msra.mxu0 0
    %886 = vmatprep.subr.bf16.mxu0 0
    %887 = vmatpush1.bf16.msra.mxu0 0
    %888 = vmatprep.subr.bf16.mxu0 0
    %889 = vmatpush1.bf16.msra.mxu0 0
    %890 = vmatprep.subr.bf16.mxu0 0
    %891 = vmatpush1.bf16.msra.mxu0 0
    %892 = vmatprep.subr.bf16.mxu0 0
    %893 = vmatpush1.bf16.msra.mxu0 0
    %894 = vmatprep.mubr.bf16.mxu0 0
    %895 = vmatmul.mubr.bf16.gmra.mrb[0].mxu0 %v788
    %v896 = vpop.f32.mrb[0].mxu0
    %v897 = vadd.f32 %v812, %v896
    %v898 = vpop.f32.mrb[0].mxu0
    %v899 = vpop.f32.mrb[0].mxu0
    %v900 = vadd.f32 %v812, %v899
    %v901 = vpop.f32.mrb[0].mxu0
    %902 = vdwg.mxu0
    %v903 = vmax.f32 %v897, 0.0
    %v904 = vmax.f32 %v900, 0.0
    %v905 = vpack.c.bf16 %v904, %v903
    %s906 = scalar_lea.vmem [#allocation7], 384
    %v907 = vld [vmem:[%s906] sm:$0xf]
    %v908 = vld [vmem:[%s906 + $0x4] sm:$0xf]
    %v909 = vld [vmem:[%s906 + $0x8] sm:$0xf]
    %v910 = vld [vmem:[%s906 + $0xc] sm:$0xf]
    %v911 = vld [vmem:[%s906 + $0x10] sm:$0xf]
    %v912 = vld [vmem:[%s906 + $0x14] sm:$0xf]
    %v913 = vld [vmem:[%s906 + $0x18] sm:$0xf]
    %v914 = vld [vmem:[%s906 + $0x1c] sm:$0xf]
    %v915 = vld [vmem:[%s906 + $0x20] sm:$0xf]
    %v916 = vld [vmem:[%s906 + $0x24] sm:$0xf]
    %v917 = vld [vmem:[%s906 + $0x28] sm:$0xf]
    %v918 = vld [vmem:[%s906 + $0x2c] sm:$0xf]
    %v919 = vld [vmem:[%s906 + $0x30] sm:$0xf]
    %v920 = vld [vmem:[%s906 + $0x34] sm:$0xf]
    %v921 = vld [vmem:[%s906 + $0x38] sm:$0xf]
    %v922 = vld [vmem:[%s906 + $0x3c] sm:$0xf]
    %s923 = scalar_lea.vmem %s4, 6
    %v924 = vld [vmem:[%s923] sm:$0x1]
    %v926 = vlaneseq
    %v927 = vshrl.u32 %v926, 7
    %v928 = vsub.s32 0, %v927
    %v929 = vrot.slane %v924, %v928
    %v947 = vunpack.c.l.b16 %v907
    %v948 = vunpack.c.l.b16 %v908
    %v949 = vunpack.c.l.b16 %v909
    %v950 = vunpack.c.l.b16 %v910
    %v951 = vunpack.c.l.b16 %v911
    %v952 = vunpack.c.l.b16 %v912
    %v953 = vunpack.c.l.b16 %v913
    %v954 = vunpack.c.l.b16 %v914
    %v955 = vunpack.c.l.b16 %v915
    %v956 = vunpack.c.l.b16 %v916
    %v957 = vunpack.c.l.b16 %v917
    %v958 = vunpack.c.l.b16 %v918
    %v959 = vunpack.c.l.b16 %v919
    %v960 = vunpack.c.l.b16 %v920
    %v961 = vunpack.c.l.b16 %v921
    %v962 = vunpack.c.l.b16 %v922
    %v963 = vpack.c.b16 %v948, %v947
    %v964 = vpack.c.b16 %v950, %v949
    %v965 = vpack.c.b16 %v952, %v951
    %v966 = vpack.c.b16 %v954, %v953
    %v967 = vpack.c.b16 %v956, %v955
    %v968 = vpack.c.b16 %v958, %v957
    %v969 = vpack.c.b16 %v960, %v959
    %v970 = vpack.c.b16 %v962, %v961
    %979 = vmatprep.subr.bf16.mxu0 0
    %980 = vmatpush1.bf16.msra.mxu0 %v963
    %981 = vmatprep.subr.bf16.mxu0 0
    %982 = vmatpush1.bf16.msra.mxu0 %v964
    %983 = vmatprep.subr.bf16.mxu0 0
    %984 = vmatpush1.bf16.msra.mxu0 %v965
    %985 = vmatprep.subr.bf16.mxu0 0
    %986 = vmatpush1.bf16.msra.mxu0 %v966
    %987 = vmatprep.subr.bf16.mxu0 0
    %988 = vmatpush1.bf16.msra.mxu0 %v967
    %989 = vmatprep.subr.bf16.mxu0 0
    %990 = vmatpush1.bf16.msra.mxu0 %v968
    %991 = vmatprep.subr.bf16.mxu0 0
    %992 = vmatpush1.bf16.msra.mxu0 %v969
    %993 = vmatprep.subr.bf16.mxu0 0
    %994 = vmatpush1.bf16.msra.mxu0 %v970
    %995 = vmatprep.subr.bf16.mxu0 0
    %996 = vmatpush1.bf16.msra.mxu0 0
    %997 = vmatprep.subr.bf16.mxu0 0
    %998 = vmatpush1.bf16.msra.mxu0 0
    %999 = vmatprep.subr.bf16.mxu0 0
    %1000 = vmatpush1.bf16.msra.mxu0 0
    %1001 = vmatprep.subr.bf16.mxu0 0
    %1002 = vmatpush1.bf16.msra.mxu0 0
    %1003 = vmatprep.subr.bf16.mxu0 0
    %1004 = vmatpush1.bf16.msra.mxu0 0
    %1005 = vmatprep.subr.bf16.mxu0 0
    %1006 = vmatpush1.bf16.msra.mxu0 0
    %1007 = vmatprep.subr.bf16.mxu0 0
    %1008 = vmatpush1.bf16.msra.mxu0 0
    %1009 = vmatprep.subr.bf16.mxu0 0
    %1010 = vmatpush1.bf16.msra.mxu0 0
    %1011 = vmatprep.mubr.bf16.mxu0 0
    %1012 = vmatmul.mubr.bf16.gmra.mrb[0].mxu0 %v905
    %v1013 = vpop.f32.mrb[0].mxu0
    %v1014 = vadd.f32 %v929, %v1013
    %v1015 = vpop.f32.mrb[0].mxu0
    %v1016 = vpop.f32.mrb[0].mxu0
    %v1017 = vadd.f32 %v929, %v1016
    %v1018 = vpop.f32.mrb[0].mxu0
    %1019 = vdwg.mxu0
    %v1020 = vmax.f32 %v1014, 0.0
    %v1021 = vmax.f32 %v1017, 0.0
    %v1022 = vpack.c.bf16 %v1021, %v1020
    %s1023 = scalar_lea.vmem [#allocation7], 448
    %v1024 = vld [vmem:[%s1023] sm:$0xf]
    %v1025 = vld [vmem:[%s1023 + $0x4] sm:$0xf]
    %v1026 = vld [vmem:[%s1023 + $0x8] sm:$0xf]
    %v1027 = vld [vmem:[%s1023 + $0xc] sm:$0xf]
    %v1028 = vld [vmem:[%s1023 + $0x10] sm:$0xf]
    %v1029 = vld [vmem:[%s1023 + $0x14] sm:$0xf]
    %v1030 = vld [vmem:[%s1023 + $0x18] sm:$0xf]
    %v1031 = vld [vmem:[%s1023 + $0x1c] sm:$0xf]
    %v1032 = vld [vmem:[%s1023 + $0x20] sm:$0xf]
    %v1033 = vld [vmem:[%s1023 + $0x24] sm:$0xf]
    %v1034 = vld [vmem:[%s1023 + $0x28] sm:$0xf]
    %v1035 = vld [vmem:[%s1023 + $0x2c] sm:$0xf]
    %v1036 = vld [vmem:[%s1023 + $0x30] sm:$0xf]
    %v1037 = vld [vmem:[%s1023 + $0x34] sm:$0xf]
    %v1038 = vld [vmem:[%s1023 + $0x38] sm:$0xf]
    %v1039 = vld [vmem:[%s1023 + $0x3c] sm:$0xf]
    %s1040 = scalar_lea.vmem %s4, 7
    %v1041 = vld [vmem:[%s1040] sm:$0x1]
    %v1043 = vlaneseq
    %v1044 = vshrl.u32 %v1043, 7
    %v1045 = vsub.s32 0, %v1044
    %v1046 = vrot.slane %v1041, %v1045
    %v1064 = vunpack.c.l.b16 %v1024
    %v1065 = vunpack.c.l.b16 %v1025
    %v1066 = vunpack.c.l.b16 %v1026
    %v1067 = vunpack.c.l.b16 %v1027
    %v1068 = vunpack.c.l.b16 %v1028
    %v1069 = vunpack.c.l.b16 %v1029
    %v1070 = vunpack.c.l.b16 %v1030
    %v1071 = vunpack.c.l.b16 %v1031
    %v1072 = vunpack.c.l.b16 %v1032
    %v1073 = vunpack.c.l.b16 %v1033
    %v1074 = vunpack.c.l.b16 %v1034
    %v1075 = vunpack.c.l.b16 %v1035
    %v1076 = vunpack.c.l.b16 %v1036
    %v1077 = vunpack.c.l.b16 %v1037
    %v1078 = vunpack.c.l.b16 %v1038
    %v1079 = vunpack.c.l.b16 %v1039
    %v1080 = vpack.c.b16 %v1065, %v1064
    %v1081 = vpack.c.b16 %v1067, %v1066
    %v1082 = vpack.c.b16 %v1069, %v1068
    %v1083 = vpack.c.b16 %v1071, %v1070
    %v1084 = vpack.c.b16 %v1073, %v1072
    %v1085 = vpack.c.b16 %v1075, %v1074
    %v1086 = vpack.c.b16 %v1077, %v1076
    %v1087 = vpack.c.b16 %v1079, %v1078
    %1096 = vmatprep.subr.bf16.mxu0 0
    %1097 = vmatpush1.bf16.msra.mxu0 %v1080
    %1098 = vmatprep.subr.bf16.mxu0 0
    %1099 = vmatpush1.bf16.msra.mxu0 %v1081
    %1100 = vmatprep.subr.bf16.mxu0 0
    %1101 = vmatpush1.bf16.msra.mxu0 %v1082
    %1102 = vmatprep.subr.bf16.mxu0 0
    %1103 = vmatpush1.bf16.msra.mxu0 %v1083
    %1104 = vmatprep.subr.bf16.mxu0 0
    %1105 = vmatpush1.bf16.msra.mxu0 %v1084
    %1106 = vmatprep.subr.bf16.mxu0 0
    %1107 = vmatpush1.bf16.msra.mxu0 %v1085
    %1108 = vmatprep.subr.bf16.mxu0 0
    %1109 = vmatpush1.bf16.msra.mxu0 %v1086
    %1110 = vmatprep.subr.bf16.mxu0 0
    %1111 = vmatpush1.bf16.msra.mxu0 %v1087
    %1112 = vmatprep.subr.bf16.mxu0 0
    %1113 = vmatpush1.bf16.msra.mxu0 0
    %1114 = vmatprep.subr.bf16.mxu0 0
    %1115 = vmatpush1.bf16.msra.mxu0 0
    %1116 = vmatprep.subr.bf16.mxu0 0
    %1117 = vmatpush1.bf16.msra.mxu0 0
    %1118 = vmatprep.subr.bf16.mxu0 0
    %1119 = vmatpush1.bf16.msra.mxu0 0
    %1120 = vmatprep.subr.bf16.mxu0 0
    %1121 = vmatpush1.bf16.msra.mxu0 0
    %1122 = vmatprep.subr.bf16.mxu0 0
    %1123 = vmatpush1.bf16.msra.mxu0 0
    %1124 = vmatprep.subr.bf16.mxu0 0
    %1125 = vmatpush1.bf16.msra.mxu0 0
    %1126 = vmatprep.subr.bf16.mxu0 0
    %1127 = vmatpush1.bf16.msra.mxu0 0
    %1128 = vmatprep.mubr.bf16.mxu0 0
    %1129 = vmatmul.mubr.bf16.gmra.mrb[0].mxu0 %v1022
    %v1130 = vpop.f32.mrb[0].mxu0
    %v1131 = vadd.f32 %v1046, %v1130
    %v1132 = vpop.f32.mrb[0].mxu0
    %v1133 = vpop.f32.mrb[0].mxu0
    %v1134 = vadd.f32 %v1046, %v1133
    %v1135 = vpop.f32.mrb[0].mxu0
    %1136 = vdwg.mxu0
    %v1137 = vmax.f32 %v1131, 0.0
    %v1138 = vmax.f32 %v1134, 0.0
    %v1139 = vpack.c.bf16 %v1138, %v1137
    %s1140 = scalar_lea.vmem [#allocation7], 512
    %v1141 = vld [vmem:[%s1140] sm:$0xf]
    %v1142 = vld [vmem:[%s1140 + $0x4] sm:$0xf]
    %v1143 = vld [vmem:[%s1140 + $0x8] sm:$0xf]
    %v1144 = vld [vmem:[%s1140 + $0xc] sm:$0xf]
    %v1145 = vld [vmem:[%s1140 + $0x10] sm:$0xf]
    %v1146 = vld [vmem:[%s1140 + $0x14] sm:$0xf]
    %v1147 = vld [vmem:[%s1140 + $0x18] sm:$0xf]
    %v1148 = vld [vmem:[%s1140 + $0x1c] sm:$0xf]
    %v1149 = vld [vmem:[%s1140 + $0x20] sm:$0xf]
    %v1150 = vld [vmem:[%s1140 + $0x24] sm:$0xf]
    %v1151 = vld [vmem:[%s1140 + $0x28] sm:$0xf]
    %v1152 = vld [vmem:[%s1140 + $0x2c] sm:$0xf]
    %v1153 = vld [vmem:[%s1140 + $0x30] sm:$0xf]
    %v1154 = vld [vmem:[%s1140 + $0x34] sm:$0xf]
    %v1155 = vld [vmem:[%s1140 + $0x38] sm:$0xf]
    %v1156 = vld [vmem:[%s1140 + $0x3c] sm:$0xf]
    %s1157 = scalar_lea.vmem %s4, 8
    %v1158 = vld [vmem:[%s1157] sm:$0x1]
    %v1160 = vlaneseq
    %v1161 = vshrl.u32 %v1160, 7
    %v1162 = vsub.s32 0, %v1161
    %v1163 = vrot.slane %v1158, %v1162
    %v1181 = vunpack.c.l.b16 %v1141
    %v1182 = vunpack.c.l.b16 %v1142
    %v1183 = vunpack.c.l.b16 %v1143
    %v1184 = vunpack.c.l.b16 %v1144
    %v1185 = vunpack.c.l.b16 %v1145
    %v1186 = vunpack.c.l.b16 %v1146
    %v1187 = vunpack.c.l.b16 %v1147
    %v1188 = vunpack.c.l.b16 %v1148
    %v1189 = vunpack.c.l.b16 %v1149
    %v1190 = vunpack.c.l.b16 %v1150
    %v1191 = vunpack.c.l.b16 %v1151
    %v1192 = vunpack.c.l.b16 %v1152
    %v1193 = vunpack.c.l.b16 %v1153
    %v1194 = vunpack.c.l.b16 %v1154
    %v1195 = vunpack.c.l.b16 %v1155
    %v1196 = vunpack.c.l.b16 %v1156
    %v1197 = vpack.c.b16 %v1182, %v1181
    %v1198 = vpack.c.b16 %v1184, %v1183
    %v1199 = vpack.c.b16 %v1186, %v1185
    %v1200 = vpack.c.b16 %v1188, %v1187
    %v1201 = vpack.c.b16 %v1190, %v1189
    %v1202 = vpack.c.b16 %v1192, %v1191
    %v1203 = vpack.c.b16 %v1194, %v1193
    %v1204 = vpack.c.b16 %v1196, %v1195
    %1213 = vmatprep.subr.bf16.mxu0 0
    %1214 = vmatpush1.bf16.msra.mxu0 %v1197
    %1215 = vmatprep.subr.bf16.mxu0 0
    %1216 = vmatpush1.bf16.msra.mxu0 %v1198
    %1217 = vmatprep.subr.bf16.mxu0 0
    %1218 = vmatpush1.bf16.msra.mxu0 %v1199
    %1219 = vmatprep.subr.bf16.mxu0 0
    %1220 = vmatpush1.bf16.msra.mxu0 %v1200
    %1221 = vmatprep.subr.bf16.mxu0 0
    %1222 = vmatpush1.bf16.msra.mxu0 %v1201
    %1223 = vmatprep.subr.bf16.mxu0 0
    %1224 = vmatpush1.bf16.msra.mxu0 %v1202
    %1225 = vmatprep.subr.bf16.mxu0 0
    %1226 = vmatpush1.bf16.msra.mxu0 %v1203
    %1227 = vmatprep.subr.bf16.mxu0 0
    %1228 = vmatpush1.bf16.msra.mxu0 %v1204
    %1229 = vmatprep.subr.bf16.mxu0 0
    %1230 = vmatpush1.bf16.msra.mxu0 0
    %1231 = vmatprep.subr.bf16.mxu0 0
    %1232 = vmatpush1.bf16.msra.mxu0 0
    %1233 = vmatprep.subr.bf16.mxu0 0
    %1234 = vmatpush1.bf16.msra.mxu0 0
    %1235 = vmatprep.subr.bf16.mxu0 0
    %1236 = vmatpush1.bf16.msra.mxu0 0
    %1237 = vmatprep.subr.bf16.mxu0 0
    %1238 = vmatpush1.bf16.msra.mxu0 0
    %1239 = vmatprep.subr.bf16.mxu0 0
    %1240 = vmatpush1.bf16.msra.mxu0 0
    %1241 = vmatprep.subr.bf16.mxu0 0
    %1242 = vmatpush1.bf16.msra.mxu0 0
    %1243 = vmatprep.subr.bf16.mxu0 0
    %1244 = vmatpush1.bf16.msra.mxu0 0
    %1245 = vmatprep.mubr.bf16.mxu0 0
    %1246 = vmatmul.mubr.bf16.gmra.mrb[0].mxu0 %v1139
    %v1247 = vpop.f32.mrb[0].mxu0
    %v1248 = vadd.f32 %v1163, %v1247
    %v1249 = vpop.f32.mrb[0].mxu0
    %v1250 = vpop.f32.mrb[0].mxu0
    %v1251 = vadd.f32 %v1163, %v1250
    %v1252 = vpop.f32.mrb[0].mxu0
    %1253 = vdwg.mxu0
    %v1254 = vmax.f32 %v1248, 0.0
    %v1255 = vmax.f32 %v1251, 0.0
    %v1256 = vpack.c.bf16 %v1255, %v1254
    %s1257 = scalar_lea.vmem [#allocation7], 576
    %v1258 = vld [vmem:[%s1257] sm:$0xf]
    %v1259 = vld [vmem:[%s1257 + $0x4] sm:$0xf]
    %v1260 = vld [vmem:[%s1257 + $0x8] sm:$0xf]
    %v1261 = vld [vmem:[%s1257 + $0xc] sm:$0xf]
    %v1262 = vld [vmem:[%s1257 + $0x10] sm:$0xf]
    %v1263 = vld [vmem:[%s1257 + $0x14] sm:$0xf]
    %v1264 = vld [vmem:[%s1257 + $0x18] sm:$0xf]
    %v1265 = vld [vmem:[%s1257 + $0x1c] sm:$0xf]
    %v1266 = vld [vmem:[%s1257 + $0x20] sm:$0xf]
    %v1267 = vld [vmem:[%s1257 + $0x24] sm:$0xf]
    %v1268 = vld [vmem:[%s1257 + $0x28] sm:$0xf]
    %v1269 = vld [vmem:[%s1257 + $0x2c] sm:$0xf]
    %v1270 = vld [vmem:[%s1257 + $0x30] sm:$0xf]
    %v1271 = vld [vmem:[%s1257 + $0x34] sm:$0xf]
    %v1272 = vld [vmem:[%s1257 + $0x38] sm:$0xf]
    %v1273 = vld [vmem:[%s1257 + $0x3c] sm:$0xf]
    %s1274 = scalar_lea.vmem %s4, 9
    %v1275 = vld [vmem:[%s1274] sm:$0x1]
    %v1277 = vlaneseq
    %v1278 = vshrl.u32 %v1277, 7
    %v1279 = vsub.s32 0, %v1278
    %v1280 = vrot.slane %v1275, %v1279
    %v1298 = vunpack.c.l.b16 %v1258
    %v1299 = vunpack.c.l.b16 %v1259
    %v1300 = vunpack.c.l.b16 %v1260
    %v1301 = vunpack.c.l.b16 %v1261
    %v1302 = vunpack.c.l.b16 %v1262
    %v1303 = vunpack.c.l.b16 %v1263
    %v1304 = vunpack.c.l.b16 %v1264
    %v1305 = vunpack.c.l.b16 %v1265
    %v1306 = vunpack.c.l.b16 %v1266
    %v1307 = vunpack.c.l.b16 %v1267
    %v1308 = vunpack.c.l.b16 %v1268
    %v1309 = vunpack.c.l.b16 %v1269
    %v1310 = vunpack.c.l.b16 %v1270
    %v1311 = vunpack.c.l.b16 %v1271
    %v1312 = vunpack.c.l.b16 %v1272
    %v1313 = vunpack.c.l.b16 %v1273
    %v1314 = vpack.c.b16 %v1299, %v1298
    %v1315 = vpack.c.b16 %v1301, %v1300
    %v1316 = vpack.c.b16 %v1303, %v1302
    %v1317 = vpack.c.b16 %v1305, %v1304
    %v1318 = vpack.c.b16 %v1307, %v1306
    %v1319 = vpack.c.b16 %v1309, %v1308
    %v1320 = vpack.c.b16 %v1311, %v1310
    %v1321 = vpack.c.b16 %v1313, %v1312
    %1330 = vmatprep.subr.bf16.mxu0 0
    %1331 = vmatpush1.bf16.msra.mxu0 %v1314
    %1332 = vmatprep.subr.bf16.mxu0 0
    %1333 = vmatpush1.bf16.msra.mxu0 %v1315
    %1334 = vmatprep.subr.bf16.mxu0 0
    %1335 = vmatpush1.bf16.msra.mxu0 %v1316
    %1336 = vmatprep.subr.bf16.mxu0 0
    %1337 = vmatpush1.bf16.msra.mxu0 %v1317
    %1338 = vmatprep.subr.bf16.mxu0 0
    %1339 = vmatpush1.bf16.msra.mxu0 %v1318
    %1340 = vmatprep.subr.bf16.mxu0 0
    %1341 = vmatpush1.bf16.msra.mxu0 %v1319
    %1342 = vmatprep.subr.bf16.mxu0 0
    %1343 = vmatpush1.bf16.msra.mxu0 %v1320
    %1344 = vmatprep.subr.bf16.mxu0 0
    %1345 = vmatpush1.bf16.msra.mxu0 %v1321
    %1346 = vmatprep.subr.bf16.mxu0 0
    %1347 = vmatpush1.bf16.msra.mxu0 0
    %1348 = vmatprep.subr.bf16.mxu0 0
    %1349 = vmatpush1.bf16.msra.mxu0 0
    %1350 = vmatprep.subr.bf16.mxu0 0
    %1351 = vmatpush1.bf16.msra.mxu0 0
    %1352 = vmatprep.subr.bf16.mxu0 0
    %1353 = vmatpush1.bf16.msra.mxu0 0
    %1354 = vmatprep.subr.bf16.mxu0 0
    %1355 = vmatpush1.bf16.msra.mxu0 0
    %1356 = vmatprep.subr.bf16.mxu0 0
    %1357 = vmatpush1.bf16.msra.mxu0 0
    %1358 = vmatprep.subr.bf16.mxu0 0
    %1359 = vmatpush1.bf16.msra.mxu0 0
    %1360 = vmatprep.subr.bf16.mxu0 0
    %1361 = vmatpush1.bf16.msra.mxu0 0
    %1362 = vmatprep.mubr.bf16.mxu0 0
    %1363 = vmatmul.mubr.bf16.gmra.mrb[0].mxu0 %v1256
    %v1364 = vpop.f32.mrb[0].mxu0
    %v1365 = vadd.f32 %v1280, %v1364
    %v1366 = vpop.f32.mrb[0].mxu0
    %v1367 = vpop.f32.mrb[0].mxu0
    %v1368 = vadd.f32 %v1280, %v1367
    %v1369 = vpop.f32.mrb[0].mxu0
    %1370 = vdwg.mxu0
    %v1371 = vmax.f32 %v1365, 0.0
    %v1372 = vmax.f32 %v1368, 0.0
    %v1373 = vpack.c.bf16 %v1372, %v1371
    %s1374 = scalar_lea.vmem [#allocation7], 640
    %v1375 = vld [vmem:[%s1374] sm:$0xf]
    %v1376 = vld [vmem:[%s1374 + $0x4] sm:$0xf]
    %v1377 = vld [vmem:[%s1374 + $0x8] sm:$0xf]
    %v1378 = vld [vmem:[%s1374 + $0xc] sm:$0xf]
    %v1379 = vld [vmem:[%s1374 + $0x10] sm:$0xf]
    %v1380 = vld [vmem:[%s1374 + $0x14] sm:$0xf]
    %v1381 = vld [vmem:[%s1374 + $0x18] sm:$0xf]
    %v1382 = vld [vmem:[%s1374 + $0x1c] sm:$0xf]
    %v1383 = vld [vmem:[%s1374 + $0x20] sm:$0xf]
    %v1384 = vld [vmem:[%s1374 + $0x24] sm:$0xf]
    %v1385 = vld [vmem:[%s1374 + $0x28] sm:$0xf]
    %v1386 = vld [vmem:[%s1374 + $0x2c] sm:$0xf]
    %v1387 = vld [vmem:[%s1374 + $0x30] sm:$0xf]
    %v1388 = vld [vmem:[%s1374 + $0x34] sm:$0xf]
    %v1389 = vld [vmem:[%s1374 + $0x38] sm:$0xf]
    %v1390 = vld [vmem:[%s1374 + $0x3c] sm:$0xf]
    %s1391 = scalar_lea.vmem %s4, 10
    %v1392 = vld [vmem:[%s1391] sm:$0x1]
    %v1394 = vlaneseq
    %v1395 = vshrl.u32 %v1394, 7
    %v1396 = vsub.s32 0, %v1395
    %v1397 = vrot.slane %v1392, %v1396
    %v1415 = vunpack.c.l.b16 %v1375
    %v1416 = vunpack.c.l.b16 %v1376
    %v1417 = vunpack.c.l.b16 %v1377
    %v1418 = vunpack.c.l.b16 %v1378
    %v1419 = vunpack.c.l.b16 %v1379
    %v1420 = vunpack.c.l.b16 %v1380
    %v1421 = vunpack.c.l.b16 %v1381
    %v1422 = vunpack.c.l.b16 %v1382
    %v1423 = vunpack.c.l.b16 %v1383
    %v1424 = vunpack.c.l.b16 %v1384
    %v1425 = vunpack.c.l.b16 %v1385
    %v1426 = vunpack.c.l.b16 %v1386
    %v1427 = vunpack.c.l.b16 %v1387
    %v1428 = vunpack.c.l.b16 %v1388
    %v1429 = vunpack.c.l.b16 %v1389
    %v1430 = vunpack.c.l.b16 %v1390
    %v1431 = vpack.c.b16 %v1416, %v1415
    %v1432 = vpack.c.b16 %v1418, %v1417
    %v1433 = vpack.c.b16 %v1420, %v1419
    %v1434 = vpack.c.b16 %v1422, %v1421
    %v1435 = vpack.c.b16 %v1424, %v1423
    %v1436 = vpack.c.b16 %v1426, %v1425
    %v1437 = vpack.c.b16 %v1428, %v1427
    %v1438 = vpack.c.b16 %v1430, %v1429
    %1447 = vmatprep.subr.bf16.mxu0 0
    %1448 = vmatpush1.bf16.msra.mxu0 %v1431
    %1449 = vmatprep.subr.bf16.mxu0 0
    %1450 = vmatpush1.bf16.msra.mxu0 %v1432
    %1451 = vmatprep.subr.bf16.mxu0 0
    %1452 = vmatpush1.bf16.msra.mxu0 %v1433
    %1453 = vmatprep.subr.bf16.mxu0 0
    %1454 = vmatpush1.bf16.msra.mxu0 %v1434
    %1455 = vmatprep.subr.bf16.mxu0 0
    %1456 = vmatpush1.bf16.msra.mxu0 %v1435
    %1457 = vmatprep.subr.bf16.mxu0 0
    %1458 = vmatpush1.bf16.msra.mxu0 %v1436
    %1459 = vmatprep.subr.bf16.mxu0 0
    %1460 = vmatpush1.bf16.msra.mxu0 %v1437
    %1461 = vmatprep.subr.bf16.mxu0 0
    %1462 = vmatpush1.bf16.msra.mxu0 %v1438
    %1463 = vmatprep.subr.bf16.mxu0 0
    %1464 = vmatpush1.bf16.msra.mxu0 0
    %1465 = vmatprep.subr.bf16.mxu0 0
    %1466 = vmatpush1.bf16.msra.mxu0 0
    %1467 = vmatprep.subr.bf16.mxu0 0
    %1468 = vmatpush1.bf16.msra.mxu0 0
    %1469 = vmatprep.subr.bf16.mxu0 0
    %1470 = vmatpush1.bf16.msra.mxu0 0
    %1471 = vmatprep.subr.bf16.mxu0 0
    %1472 = vmatpush1.bf16.msra.mxu0 0
    %1473 = vmatprep.subr.bf16.mxu0 0
    %1474 = vmatpush1.bf16.msra.mxu0 0
    %1475 = vmatprep.subr.bf16.mxu0 0
    %1476 = vmatpush1.bf16.msra.mxu0 0
    %1477 = vmatprep.subr.bf16.mxu0 0
    %1478 = vmatpush1.bf16.msra.mxu0 0
    %1479 = vmatprep.mubr.bf16.mxu0 0
    %1480 = vmatmul.mubr.bf16.gmra.mrb[0].mxu0 %v1373
    %v1481 = vpop.f32.mrb[0].mxu0
    %v1482 = vadd.f32 %v1397, %v1481
    %v1483 = vpop.f32.mrb[0].mxu0
    %v1484 = vpop.f32.mrb[0].mxu0
    %v1485 = vadd.f32 %v1397, %v1484
    %v1486 = vpop.f32.mrb[0].mxu0
    %1487 = vdwg.mxu0
    %v1488 = vmax.f32 %v1482, 0.0
    %v1489 = vmax.f32 %v1485, 0.0
    %v1490 = vpack.c.bf16 %v1489, %v1488
    %s1491 = scalar_lea.vmem [#allocation7], 704
    %v1492 = vld [vmem:[%s1491] sm:$0xf]
    %v1493 = vld [vmem:[%s1491 + $0x4] sm:$0xf]
    %v1494 = vld [vmem:[%s1491 + $0x8] sm:$0xf]
    %v1495 = vld [vmem:[%s1491 + $0xc] sm:$0xf]
    %v1496 = vld [vmem:[%s1491 + $0x10] sm:$0xf]
    %v1497 = vld [vmem:[%s1491 + $0x14] sm:$0xf]
    %v1498 = vld [vmem:[%s1491 + $0x18] sm:$0xf]
    %v1499 = vld [vmem:[%s1491 + $0x1c] sm:$0xf]
    %v1500 = vld [vmem:[%s1491 + $0x20] sm:$0xf]
    %v1501 = vld [vmem:[%s1491 + $0x24] sm:$0xf]
    %v1502 = vld [vmem:[%s1491 + $0x28] sm:$0xf]
    %v1503 = vld [vmem:[%s1491 + $0x2c] sm:$0xf]
    %v1504 = vld [vmem:[%s1491 + $0x30] sm:$0xf]
    %v1505 = vld [vmem:[%s1491 + $0x34] sm:$0xf]
    %v1506 = vld [vmem:[%s1491 + $0x38] sm:$0xf]
    %v1507 = vld [vmem:[%s1491 + $0x3c] sm:$0xf]
    %s1508 = scalar_lea.vmem %s4, 11
    %v1509 = vld [vmem:[%s1508] sm:$0x1]
    %v1511 = vlaneseq
    %v1512 = vshrl.u32 %v1511, 7
    %v1513 = vsub.s32 0, %v1512
    %v1514 = vrot.slane %v1509, %v1513
    %v1532 = vunpack.c.l.b16 %v1492
    %v1533 = vunpack.c.l.b16 %v1493
    %v1534 = vunpack.c.l.b16 %v1494
    %v1535 = vunpack.c.l.b16 %v1495
    %v1536 = vunpack.c.l.b16 %v1496
    %v1537 = vunpack.c.l.b16 %v1497
    %v1538 = vunpack.c.l.b16 %v1498
    %v1539 = vunpack.c.l.b16 %v1499
    %v1540 = vunpack.c.l.b16 %v1500
    %v1541 = vunpack.c.l.b16 %v1501
    %v1542 = vunpack.c.l.b16 %v1502
    %v1543 = vunpack.c.l.b16 %v1503
    %v1544 = vunpack.c.l.b16 %v1504
    %v1545 = vunpack.c.l.b16 %v1505
    %v1546 = vunpack.c.l.b16 %v1506
    %v1547 = vunpack.c.l.b16 %v1507
    %v1548 = vpack.c.b16 %v1533, %v1532
    %v1549 = vpack.c.b16 %v1535, %v1534
    %v1550 = vpack.c.b16 %v1537, %v1536
    %v1551 = vpack.c.b16 %v1539, %v1538
    %v1552 = vpack.c.b16 %v1541, %v1540
    %v1553 = vpack.c.b16 %v1543, %v1542
    %v1554 = vpack.c.b16 %v1545, %v1544
    %v1555 = vpack.c.b16 %v1547, %v1546
    %1564 = vmatprep.subr.bf16.mxu0 0
    %1565 = vmatpush1.bf16.msra.mxu0 %v1548
    %1566 = vmatprep.subr.bf16.mxu0 0
    %1567 = vmatpush1.bf16.msra.mxu0 %v1549
    %1568 = vmatprep.subr.bf16.mxu0 0
    %1569 = vmatpush1.bf16.msra.mxu0 %v1550
    %1570 = vmatprep.subr.bf16.mxu0 0
    %1571 = vmatpush1.bf16.msra.mxu0 %v1551
    %1572 = vmatprep.subr.bf16.mxu0 0
    %1573 = vmatpush1.bf16.msra.mxu0 %v1552
    %1574 = vmatprep.subr.bf16.mxu0 0
    %1575 = vmatpush1.bf16.msra.mxu0 %v1553
    %1576 = vmatprep.subr.bf16.mxu0 0
    %1577 = vmatpush1.bf16.msra.mxu0 %v1554
    %1578 = vmatprep.subr.bf16.mxu0 0
    %1579 = vmatpush1.bf16.msra.mxu0 %v1555
    %1580 = vmatprep.subr.bf16.mxu0 0
    %1581 = vmatpush1.bf16.msra.mxu0 0
    %1582 = vmatprep.subr.bf16.mxu0 0
    %1583 = vmatpush1.bf16.msra.mxu0 0
    %1584 = vmatprep.subr.bf16.mxu0 0
    %1585 = vmatpush1.bf16.msra.mxu0 0
    %1586 = vmatprep.subr.bf16.mxu0 0
    %1587 = vmatpush1.bf16.msra.mxu0 0
    %1588 = vmatprep.subr.bf16.mxu0 0
    %1589 = vmatpush1.bf16.msra.mxu0 0
    %1590 = vmatprep.subr.bf16.mxu0 0
    %1591 = vmatpush1.bf16.msra.mxu0 0
    %1592 = vmatprep.subr.bf16.mxu0 0
    %1593 = vmatpush1.bf16.msra.mxu0 0
    %1594 = vmatprep.subr.bf16.mxu0 0
    %1595 = vmatpush1.bf16.msra.mxu0 0
    %1596 = vmatprep.mubr.bf16.mxu0 0
    %1597 = vmatmul.mubr.bf16.gmra.mrb[0].mxu0 %v1490
    %v1598 = vpop.f32.mrb[0].mxu0
    %v1599 = vadd.f32 %v1514, %v1598
    %v1600 = vpop.f32.mrb[0].mxu0
    %v1601 = vpop.f32.mrb[0].mxu0
    %v1602 = vadd.f32 %v1514, %v1601
    %v1603 = vpop.f32.mrb[0].mxu0
    %1604 = vdwg.mxu0
    %v1605 = vmax.f32 %v1599, 0.0
    %v1606 = vmax.f32 %v1602, 0.0
    %v1607 = vpack.c.bf16 %v1606, %v1605
    %s1608 = scalar_lea.vmem [#allocation7], 768
    %v1609 = vld [vmem:[%s1608] sm:$0xf]
    %v1610 = vld [vmem:[%s1608 + $0x4] sm:$0xf]
    %v1611 = vld [vmem:[%s1608 + $0x8] sm:$0xf]
    %v1612 = vld [vmem:[%s1608 + $0xc] sm:$0xf]
    %v1613 = vld [vmem:[%s1608 + $0x10] sm:$0xf]
    %v1614 = vld [vmem:[%s1608 + $0x14] sm:$0xf]
    %v1615 = vld [vmem:[%s1608 + $0x18] sm:$0xf]
    %v1616 = vld [vmem:[%s1608 + $0x1c] sm:$0xf]
    %v1617 = vld [vmem:[%s1608 + $0x20] sm:$0xf]
    %v1618 = vld [vmem:[%s1608 + $0x24] sm:$0xf]
    %v1619 = vld [vmem:[%s1608 + $0x28] sm:$0xf]
    %v1620 = vld [vmem:[%s1608 + $0x2c] sm:$0xf]
    %v1621 = vld [vmem:[%s1608 + $0x30] sm:$0xf]
    %v1622 = vld [vmem:[%s1608 + $0x34] sm:$0xf]
    %v1623 = vld [vmem:[%s1608 + $0x38] sm:$0xf]
    %v1624 = vld [vmem:[%s1608 + $0x3c] sm:$0xf]
    %s1625 = scalar_lea.vmem %s4, 12
    %v1626 = vld [vmem:[%s1625] sm:$0x1]
    %v1628 = vlaneseq
    %v1629 = vshrl.u32 %v1628, 7
    %v1630 = vsub.s32 0, %v1629
    %v1631 = vrot.slane %v1626, %v1630
    %v1649 = vunpack.c.l.b16 %v1609
    %v1650 = vunpack.c.l.b16 %v1610
    %v1651 = vunpack.c.l.b16 %v1611
    %v1652 = vunpack.c.l.b16 %v1612
    %v1653 = vunpack.c.l.b16 %v1613
    %v1654 = vunpack.c.l.b16 %v1614
    %v1655 = vunpack.c.l.b16 %v1615
    %v1656 = vunpack.c.l.b16 %v1616
    %v1657 = vunpack.c.l.b16 %v1617
    %v1658 = vunpack.c.l.b16 %v1618
    %v1659 = vunpack.c.l.b16 %v1619
    %v1660 = vunpack.c.l.b16 %v1620
    %v1661 = vunpack.c.l.b16 %v1621
    %v1662 = vunpack.c.l.b16 %v1622
    %v1663 = vunpack.c.l.b16 %v1623
    %v1664 = vunpack.c.l.b16 %v1624
    %v1665 = vpack.c.b16 %v1650, %v1649
    %v1666 = vpack.c.b16 %v1652, %v1651
    %v1667 = vpack.c.b16 %v1654, %v1653
    %v1668 = vpack.c.b16 %v1656, %v1655
    %v1669 = vpack.c.b16 %v1658, %v1657
    %v1670 = vpack.c.b16 %v1660, %v1659
    %v1671 = vpack.c.b16 %v1662, %v1661
    %v1672 = vpack.c.b16 %v1664, %v1663
    %1681 = vmatprep.subr.bf16.mxu0 0
    %1682 = vmatpush1.bf16.msra.mxu0 %v1665
    %1683 = vmatprep.subr.bf16.mxu0 0
    %1684 = vmatpush1.bf16.msra.mxu0 %v1666
    %1685 = vmatprep.subr.bf16.mxu0 0
    %1686 = vmatpush1.bf16.msra.mxu0 %v1667
    %1687 = vmatprep.subr.bf16.mxu0 0
    %1688 = vmatpush1.bf16.msra.mxu0 %v1668
    %1689 = vmatprep.subr.bf16.mxu0 0
    %1690 = vmatpush1.bf16.msra.mxu0 %v1669
    %1691 = vmatprep.subr.bf16.mxu0 0
    %1692 = vmatpush1.bf16.msra.mxu0 %v1670
    %1693 = vmatprep.subr.bf16.mxu0 0
    %1694 = vmatpush1.bf16.msra.mxu0 %v1671
    %1695 = vmatprep.subr.bf16.mxu0 0
    %1696 = vmatpush1.bf16.msra.mxu0 %v1672
    %1697 = vmatprep.subr.bf16.mxu0 0
    %1698 = vmatpush1.bf16.msra.mxu0 0
    %1699 = vmatprep.subr.bf16.mxu0 0
    %1700 = vmatpush1.bf16.msra.mxu0 0
    %1701 = vmatprep.subr.bf16.mxu0 0
    %1702 = vmatpush1.bf16.msra.mxu0 0
    %1703 = vmatprep.subr.bf16.mxu0 0
    %1704 = vmatpush1.bf16.msra.mxu0 0
    %1705 = vmatprep.subr.bf16.mxu0 0
    %1706 = vmatpush1.bf16.msra.mxu0 0
    %1707 = vmatprep.subr.bf16.mxu0 0
    %1708 = vmatpush1.bf16.msra.mxu0 0
    %1709 = vmatprep.subr.bf16.mxu0 0
    %1710 = vmatpush1.bf16.msra.mxu0 0
    %1711 = vmatprep.subr.bf16.mxu0 0
    %1712 = vmatpush1.bf16.msra.mxu0 0
    %1713 = vmatprep.mubr.bf16.mxu0 0
    %1714 = vmatmul.mubr.bf16.gmra.mrb[0].mxu0 %v1607
    %v1715 = vpop.f32.mrb[0].mxu0
    %v1716 = vadd.f32 %v1631, %v1715
    %v1717 = vpop.f32.mrb[0].mxu0
    %v1718 = vpop.f32.mrb[0].mxu0
    %v1719 = vadd.f32 %v1631, %v1718
    %v1720 = vpop.f32.mrb[0].mxu0
    %1721 = vdwg.mxu0
    %v1722 = vmax.f32 %v1716, 0.0
    %v1723 = vmax.f32 %v1719, 0.0
    %v1724 = vpack.c.bf16 %v1723, %v1722
    %v1725 = vld [vmem:[#allocation8] sm:$0xf]
    %v1726 = vld [vmem:[#allocation8 + $0x4] sm:$0xf]
    %v1727 = vld [vmem:[#allocation8 + $0x8] sm:$0xf]
    %v1728 = vld [vmem:[#allocation8 + $0xc] sm:$0xf]
    %v1729 = vld [vmem:[#allocation8 + $0x10] sm:$0xf]
    %v1730 = vld [vmem:[#allocation8 + $0x14] sm:$0xf]
    %v1731 = vld [vmem:[#allocation8 + $0x18] sm:$0xf]
    %v1732 = vld [vmem:[#allocation8 + $0x1c] sm:$0xf]
    %v1733 = vld [vmem:[#allocation8 + $0x20] sm:$0xf]
    %v1734 = vld [vmem:[#allocation8 + $0x24] sm:$0xf]
    %v1735 = vld [vmem:[#allocation8 + $0x28] sm:$0xf]
    %v1736 = vld [vmem:[#allocation8 + $0x2c] sm:$0xf]
    %v1737 = vld [vmem:[#allocation8 + $0x30] sm:$0xf]
    %v1738 = vld [vmem:[#allocation8 + $0x34] sm:$0xf]
    %v1739 = vld [vmem:[#allocation8 + $0x38] sm:$0xf]
    %v1740 = vld [vmem:[#allocation8 + $0x3c] sm:$0xf]
    %v1741 = vld [vmem:[%s6] sm:$0x1]
    %v1743 = vlaneseq
    %v1744 = vshrl.u32 %v1743, 7
    %v1745 = vsub.s32 0, %v1744
    %v1746 = vrot.slane %v1741, %v1745
    %v1764 = vunpack.c.l.b16 %v1725
    %v1765 = vunpack.c.l.b16 %v1726
    %v1766 = vunpack.c.l.b16 %v1727
    %v1767 = vunpack.c.l.b16 %v1728
    %v1768 = vunpack.c.l.b16 %v1729
    %v1769 = vunpack.c.l.b16 %v1730
    %v1770 = vunpack.c.l.b16 %v1731
    %v1771 = vunpack.c.l.b16 %v1732
    %v1772 = vunpack.c.l.b16 %v1733
    %v1773 = vunpack.c.l.b16 %v1734
    %v1774 = vunpack.c.l.b16 %v1735
    %v1775 = vunpack.c.l.b16 %v1736
    %v1776 = vunpack.c.l.b16 %v1737
    %v1777 = vunpack.c.l.b16 %v1738
    %v1778 = vunpack.c.l.b16 %v1739
    %v1779 = vunpack.c.l.b16 %v1740
    %v1780 = vpack.c.b16 %v1765, %v1764
    %v1781 = vpack.c.b16 %v1767, %v1766
    %v1782 = vpack.c.b16 %v1769, %v1768
    %v1783 = vpack.c.b16 %v1771, %v1770
    %v1784 = vpack.c.b16 %v1773, %v1772
    %v1785 = vpack.c.b16 %v1775, %v1774
    %v1786 = vpack.c.b16 %v1777, %v1776
    %v1787 = vpack.c.b16 %v1779, %v1778
    %1796 = vmatprep.subr.bf16.mxu0 0
    %1797 = vmatpush1.bf16.msra.mxu0 %v1780
    %1798 = vmatprep.subr.bf16.mxu0 0
    %1799 = vmatpush1.bf16.msra.mxu0 %v1781
    %1800 = vmatprep.subr.bf16.mxu0 0
    %1801 = vmatpush1.bf16.msra.mxu0 %v1782
    %1802 = vmatprep.subr.bf16.mxu0 0
    %1803 = vmatpush1.bf16.msra.mxu0 %v1783
    %1804 = vmatprep.subr.bf16.mxu0 0
    %1805 = vmatpush1.bf16.msra.mxu0 %v1784
    %1806 = vmatprep.subr.bf16.mxu0 0
    %1807 = vmatpush1.bf16.msra.mxu0 %v1785
    %1808 = vmatprep.subr.bf16.mxu0 0
    %1809 = vmatpush1.bf16.msra.mxu0 %v1786
    %1810 = vmatprep.subr.bf16.mxu0 0
    %1811 = vmatpush1.bf16.msra.mxu0 %v1787
    %1812 = vmatprep.subr.bf16.mxu0 0
    %1813 = vmatpush1.bf16.msra.mxu0 0
    %1814 = vmatprep.subr.bf16.mxu0 0
    %1815 = vmatpush1.bf16.msra.mxu0 0
    %1816 = vmatprep.subr.bf16.mxu0 0
    %1817 = vmatpush1.bf16.msra.mxu0 0
    %1818 = vmatprep.subr.bf16.mxu0 0
    %1819 = vmatpush1.bf16.msra.mxu0 0
    %1820 = vmatprep.subr.bf16.mxu0 0
    %1821 = vmatpush1.bf16.msra.mxu0 0
    %1822 = vmatprep.subr.bf16.mxu0 0
    %1823 = vmatpush1.bf16.msra.mxu0 0
    %1824 = vmatprep.subr.bf16.mxu0 0
    %1825 = vmatpush1.bf16.msra.mxu0 0
    %1826 = vmatprep.subr.bf16.mxu0 0
    %1827 = vmatpush1.bf16.msra.mxu0 0
    %1828 = vmatprep.mubr.bf16.mxu0 0
    %1829 = vmatmul.mubr.bf16.gmra.mrb[0].mxu0 %v1724
    %v1830 = vpop.f32.mrb[0].mxu0
    %v1831 = vadd.f32 %v1746, %v1830
    %v1832 = vpop.f32.mrb[0].mxu0
    %v1833 = vpop.f32.mrb[0].mxu0
    %v1834 = vadd.f32 %v1746, %v1833
    %v1835 = vpop.f32.mrb[0].mxu0
    %1836 = vdwg.mxu0
    %1837 = vst [vmem:[#allocation10] sm:$0xff] %v1831
    %1838 = vst [vmem:[#allocation10 + $0x8] sm:$0xff] %v1834
    // Predicated region
    $region46: #{tpu_custom_call.1} parent=1 // pred_check
      _
    $region47: #{tpu_custom_call.1} parent=1 // pred_check_branch
      %1840 = sbr.rel (0) target = $region49
    $region48: #{tpu_custom_call.1} parent=1 // pred_region
      %s1842 = ssub.s32 256, 256
      %1843 = vsyncadd [#allocation4], %s1842
      %s1844 = sshll.u32 [#allocation10], 4
      %s1845 = int_to_ptr.vmem [resolvable:$true] %s1844
      %1850 = dma.vmem_to_hbm [thread:$0]  %s1845, 256, %s7, [#allocation4], 128, 128, 8
    $region49: #{tpu_custom_call.1} parent=1 // pred_fallthru
      _
    // Predicated region
    $region50: #{tpu_custom_call.1} parent=1 // pred_check
      _
    $region51: #{tpu_custom_call.1} parent=1 // pred_check_branch
      %1852 = sbr.rel (0) target = $region53
    $region52: #{tpu_custom_call.1} parent=1 // pred_region
      %1853 = dma.done [#allocation4], 256
    $region53: #{tpu_custom_call.1} parent=1 // pred_fallthru
      _
    %1854 = vsyncpa [#allocation3], 1
    %1855 = vsyncpa [#allocation6], 1
    %1856 = vsyncpa [#allocation9], 1
    %1857 = vsyncpa [#allocation4], 1

</llo_original>
